<compile_context>
chip_gen: v6e
topology: v6e:2x2x1
jax: 0.10.0
libtpu: 0.0.40
codegen_flags: <defaults>
</compile_context>

<pallas_src>
import functools

import jax
import jax.numpy as jnp
from jax import lax
from jax.experimental import pallas as pl
from jax.experimental.pallas import tpu as pltpu

EPS = 1e-5            # nn.BatchNorm2d default
LANES = 128           # TPU lane width; channel / contraction dims padded to this
VMEM_LIMIT = 48 * 1024 * 1024   # below v7x's 64 MiB physical VMEM


def _round_up(v, m):
    return (v + m - 1) // m * m


def _resident(shape):
    """Constant-index BlockSpec: array stays VMEM-resident across the grid."""
    zeros = (0,) * len(shape)
    return pl.BlockSpec(shape, lambda n: zeros)


# ---------------------------------------------------------------------------
# Kernel 1: conv1 (+ folded 1x1 projection shortcut) + BN1/BNs statistics
# ---------------------------------------------------------------------------
def _conv1_kernel(p_ref, wc_ref, yc_ref, stats_ref):
    n = pl.program_id(0)
    # (M_img, KP) x (KP, CW) -> (M_img, CW) f32 on the MXU.  For projection
    # blocks CW = 2*CP and the second half is the 1x1 shortcut output.
    yc = jnp.dot(p_ref[0], wc_ref[...], preferred_element_type=jnp.float32)

    @pl.when(n == 0)
    def _():
        stats_ref[...] = jnp.zeros_like(stats_ref)

    # One reduction pass over the joint result covers BN1 and (if present)
    # the shortcut BN statistics.
    s = jnp.sum(yc, axis=0, keepdims=True)
    ss = jnp.sum(yc * yc, axis=0, keepdims=True)
    pad = jnp.zeros((6, yc.shape[1]), jnp.float32)
    stats_ref[...] += jnp.concatenate([s, ss, pad], axis=0)

    yc_ref[0] = yc.astype(yc_ref.dtype)        # bf16 intermediate to HBM


# ---------------------------------------------------------------------------
# Kernel 2: BN1 + ReLU, conv2 (3x3, stride 1) as one long-K matmul, BN2 stats
# ---------------------------------------------------------------------------
def _conv2_kernel(stats1_ref, bn1_ref, mask_ref, y1_ref, w2_ref,
                  y2_ref, stats2_ref, *, inv_m, wo, cp):
    n = pl.program_id(0)

    # BN1 scale/bias from the global (two-phase) statistics.
    mean = stats1_ref[0:1, :] * inv_m
    var = jnp.maximum(stats1_ref[1:2, :] * inv_m - mean * mean, 0.0)
    scale = bn1_ref[0:1, :] * lax.rsqrt(var + EPS)
    bias = bn1_ref[1:2, :] - mean * scale

    out1 = jnp.maximum(y1_ref[0].astype(jnp.float32) * scale + bias, 0.0)
    out1 = out1.astype(jnp.bfloat16)           # cast ONCE; conv2 runs in bf16

    # conv2 taps on the flat (M_img, CP) intermediate: static sublane shift
    # (zero-filled at vertical borders) * precomputed horizontal edge mask.
    cols = []
    for kh in range(3):
        for kw in range(3):
            off = (kh - 1) * wo + (kw - 1)
            if off > 0:
                sh = jnp.concatenate(
                    [out1[off:, :], jnp.zeros((off, cp), jnp.bfloat16)], axis=0)
            elif off < 0:
                sh = jnp.concatenate(
                    [jnp.zeros((-off, cp), jnp.bfloat16), out1[:off, :]], axis=0)
            else:
                sh = out1
            if kw == 0:                        # dest column w == 0 invalid
                sh = sh * mask_ref[:, 0:cp]
            elif kw == 2:                      # dest column w == Wo-1 invalid
                sh = sh * mask_ref[:, cp:2 * cp]
            cols.append(sh)
    lhs = jnp.concatenate(cols, axis=1)        # (M_img, 9*CP) bf16
    y2 = jnp.dot(lhs, w2_ref[...], preferred_element_type=jnp.float32)

    @pl.when(n == 0)
    def _():
        stats2_ref[...] = jnp.zeros_like(stats2_ref)
    s = jnp.sum(y2, axis=0, keepdims=True)
    ss = jnp.sum(y2 * y2, axis=0, keepdims=True)
    pad = jnp.zeros((6, cp), jnp.float32)
    stats2_ref[...] += jnp.concatenate([s, ss, pad], axis=0)

    y2_ref[0] = y2.astype(y2_ref.dtype)        # bf16 intermediate to HBM


# ---------------------------------------------------------------------------
# Kernel 3: BN2 + shortcut (+BNs) + final ReLU  (fully parallel over images)
# ---------------------------------------------------------------------------
def _finalize_kernel(stats_s_ref, stats2_ref, bn_ref, y2_ref, res_ref, o_ref, *,
                     inv_m, has_shortcut):
    mean2 = stats2_ref[0:1, :] * inv_m
    var2 = jnp.maximum(stats2_ref[1:2, :] * inv_m - mean2 * mean2, 0.0)
    scale2 = bn_ref[0:1, :] * lax.rsqrt(var2 + EPS)
    bias2 = bn_ref[1:2, :] - mean2 * scale2
    out = y2_ref[0].astype(jnp.float32) * scale2 + bias2

    res = res_ref[0].astype(jnp.float32)
    if has_shortcut:                           # projection: BN on the 1x1 result
        mean_s = stats_s_ref[0:1, :] * inv_m
        var_s = jnp.maximum(stats_s_ref[1:2, :] * inv_m - mean_s * mean_s, 0.0)
        scale_s = bn_ref[2:3, :] * lax.rsqrt(var_s + EPS)
        bias_s = bn_ref[3:4, :] - mean_s * scale_s
        res = res * scale_s + bias_s

    o_ref[0] = jnp.maximum(out + res, 0.0).astype(o_ref.dtype)


# ---------------------------------------------------------------------------
# Host glue (layout / packing only; all compute is in the kernels)
# ---------------------------------------------------------------------------
def _im2col(x_nhwc, k, stride, pad):
    N, H, W, C = x_nhwc.shape
    Ho = (H + 2 * pad - k) // stride + 1
    Wo = (W + 2 * pad - k) // stride + 1
    xp = jnp.pad(x_nhwc, ((0, 0), (pad, pad), (pad, pad), (0, 0)))
    cols = [xp[:, kh:kh + stride * Ho:stride, kw:kw + stride * Wo:stride, :]
            for kh in range(k) for kw in range(k)]
    patches = jnp.concatenate(cols, axis=-1)                 # (N,Ho,Wo,9C)
    return patches.reshape(N, Ho * Wo, k * k * C), Ho, Wo


def _conv_weight_to_mat(w_oihw):
    c_out, c_in, kh, kw = w_oihw.shape
    return jnp.transpose(w_oihw, (2, 3, 1, 0)).reshape(kh * kw * c_in, c_out)


@functools.partial(jax.jit, static_argnames=("stride",))
def basic_block_forward(x_nchw, params, *, stride):
    x = jnp.transpose(x_nchw, (0, 2, 3, 1)).astype(jnp.float32)   # NCHW -> NHWC
    N, H, W, C_in = x.shape
    C_out = params["w1"].shape[0]
    has_shortcut = (stride != 1) or (C_in != C_out)

    K1 = 9 * C_in
    KP = _round_up(K1, LANES)
    CP = _round_up(C_out, LANES)
    CW = 2 * CP if has_shortcut else CP      # identity: no extra MXU columns

    patches_raw, Ho, Wo = _im2col(x, 3, stride, 1)               # (N, M_img, K1)
    M_img = Ho * Wo
    M = N * M_img
    inv_m = 1.0 / float(M)

    patches = jnp.zeros((N, M_img, KP), jnp.bfloat16)
    patches = patches.at[:, :, :K1].set(patches_raw.astype(jnp.bfloat16))

    # conv1 weights (+ folded 1x1 projection) -> (KP, CW) bf16
    w1_mat = _conv_weight_to_mat(params["w1"])                   # (K1, C_out)
    wc = jnp.zeros((KP, CW), jnp.float32).at[:K1, :C_out].set(w1_mat)
    if has_shortcut:
        ws_mat = params["ws"].reshape(C_out, C_in).T             # (C_in, C_out)
        ctr = 4 * C_in                                           # centre tap (1,1)
        wc = wc.at[ctr:ctr + C_in, CP:CP + C_out].set(ws_mat)
    wc = wc.astype(jnp.bfloat16)

    # conv2 weights as one long-K matrix (9*CP, CP) bf16
    w2 = params["w2"]
    w2_mat = jnp.zeros((9 * CP, CP), jnp.float32)
    for t, (kh, kw) in enumerate((a, b) for a in range(3) for b in range(3)):
        w2_mat = w2_mat.at[t * CP:t * CP + C_out, :C_out].set(w2[:, :, kh, kw].T)
    w2_mat = w2_mat.astype(jnp.bfloat16)

    # Horizontal (W) border masks, pre-broadcast over CP lanes.
    w_idx = jnp.arange(M_img, dtype=jnp.int32) % Wo
    mask_l = (w_idx > 0).astype(jnp.bfloat16)[:, None]           # dw = -1 valid
    mask_r = (w_idx < Wo - 1).astype(jnp.bfloat16)[:, None]      # dw = +1 valid
    masks = jnp.concatenate([jnp.tile(mask_l, (1, CP)),
                             jnp.tile(mask_r, (1, CP))], axis=1)  # (M_img, 2*CP)

    # BN affine params, lane-aligned (padded channels: gamma = beta = 0).
    def row(v):
        return jnp.zeros((CP,), jnp.float32).at[:C_out].set(v.astype(jnp.float32))

    zrow = jnp.zeros((CP,), jnp.float32)
    bn1 = jnp.stack([row(params["g1"]), row(params["b1"])] + [zrow] * 6, axis=0)
    gs = params["gs"] if has_shortcut else jnp.ones((C_out,), jnp.float32)
    bs = params["bs"] if has_shortcut else jnp.zeros((C_out,), jnp.float32)
    bn23 = jnp.stack([row(params["g2"]), row(params["b2"]), row(gs), row(bs)]
                     + [zrow] * 4, axis=0)

    cparams_acc = pltpu.CompilerParams(
        dimension_semantics=("arbitrary",), vmem_limit_bytes=VMEM_LIMIT)
    cparams_par = pltpu.CompilerParams(
        dimension_semantics=("parallel",), vmem_limit_bytes=VMEM_LIMIT)

    # --- K1: conv1 (+ projection) + BN1/BNs statistics ---------------------
    yc, stats1 = pl.pallas_call(
        _conv1_kernel,
        grid=(N,),
        in_specs=[pl.BlockSpec((1, M_img, KP), lambda n: (n, 0, 0)),
                  _resident((KP, CW))],
        out_specs=(pl.BlockSpec((1, M_img, CW), lambda n: (n, 0, 0)),
                   _resident((8, CW))),
        out_shape=(jax.ShapeDtypeStruct((N, M_img, CW), jnp.bfloat16),
                   jax.ShapeDtypeStruct((8, CW), jnp.float32)),
        compiler_params=cparams_acc,
        cost_estimate=pl.CostEstimate(
            flops=2 * M * KP * CW, transcendentals=0,
            bytes_accessed=(patches.size * 2 + wc.size * 2
                            + N * M_img * CW * 2 + 8 * CW * 4)),
    )(patches, wc)

    # --- K2: BN1 + ReLU, conv2 (one long-K matmul), BN2 statistics ---------
    conv2_kernel = functools.partial(_conv2_kernel, inv_m=inv_m, wo=Wo, cp=CP)
    y2, stats2 = pl.pallas_call(
        conv2_kernel,
        grid=(N,),
        in_specs=[pl.BlockSpec((8, CP), lambda n: (0, 0)),            # stats1 (y1 part)
                  _resident((8, CP)),                                 # bn1 (g1,b1)
                  _resident((M_img, 2 * CP)),                         # edge masks
                  pl.BlockSpec((1, M_img, CP), lambda n: (n, 0, 0)),  # y1 channels of yc
                  _resident((9 * CP, CP))],                           # w2 long-K
        out_specs=(pl.BlockSpec((1, M_img, CP), lambda n: (n, 0, 0)),
                   _resident((8, CP))),
        out_shape=(jax.ShapeDtypeStruct((N, M_img, CP), jnp.bfloat16),
                   jax.ShapeDtypeStruct((8, CP), jnp.float32)),
        compiler_params=cparams_acc,
        cost_estimate=pl.CostEstimate(
            flops=2 * M * 9 * CP * CP, transcendentals=CP,
            bytes_accessed=(N * M_img * CP * 2 * 2 + 9 * CP * CP * 2
                            + masks.size * 2 + 2 * 8 * CP * 4)),
    )(stats1, bn1, masks, yc, w2_mat)

    # --- K3: BN2 + shortcut (+BNs) + final ReLU -----------------------------
    if has_shortcut:
        res_arr = yc                                                   # 1x1 result
        res_spec = pl.BlockSpec((1, M_img, CP), lambda n: (n, 0, 1))   # cols CP:2CP
        stats_s_spec = pl.BlockSpec((8, CP), lambda n: (0, 1))
    else:
        res_arr = jnp.zeros((N, M_img, CP), jnp.float32).at[:, :, :C_in].set(
            x.reshape(N, M_img, C_in))                                 # raw f32 input
        res_spec = pl.BlockSpec((1, M_img, CP), lambda n: (n, 0, 0))
        stats_s_spec = pl.BlockSpec((8, CP), lambda n: (0, 0))         # unused

    fin_kernel = functools.partial(_finalize_kernel, inv_m=inv_m,
                                   has_shortcut=has_shortcut)
    out = pl.pallas_call(
        fin_kernel,
        grid=(N,),
        in_specs=[stats_s_spec,                                        # shortcut stats
                  _resident((8, CP)),                                  # stats2
                  _resident((8, CP)),                                  # bn23
                  pl.BlockSpec((1, M_img, CP), lambda n: (n, 0, 0)),   # y2
                  res_spec],                                           # residual
        out_specs=pl.BlockSpec((1, M_img, CP), lambda n: (n, 0, 0)),
        out_shape=jax.ShapeDtypeStruct((N, M_img, CP), jnp.bfloat16),
        compiler_params=cparams_par,
        cost_estimate=pl.CostEstimate(
            flops=8 * M * CP, transcendentals=2 * CP,
            bytes_accessed=N * M_img * CP * (2 + 4 + 2) + 3 * 8 * CP * 4),
    )(stats1, stats2, bn23, y2, res_arr)

    out = out.reshape(N, Ho, Wo, CP)[..., :C_out].astype(jnp.float32)
    return jnp.transpose(out, (0, 3, 1, 2))                            # NHWC -> NCHW


# ---------------------------------------------------------------------------
# Pure-JAX reference (independent path: lax.conv_general_dilated in f32)
# ---------------------------------------------------------------------------
def _bn_ref(y, gamma, beta):
    mean = jnp.mean(y, axis=(0, 2, 3), keepdims=True)
    var = jnp.mean(jnp.square(y - mean), axis=(0, 2, 3), keepdims=True)
    return ((y - mean) * lax.rsqrt(var + EPS) * gamma.reshape(1, -1, 1, 1)
            + beta.reshape(1, -1, 1, 1))


def basic_block_reference(x, params, stride):
    dn = ("NCHW", "OIHW", "NCHW")
    y = lax.conv_general_dilated(x, params["w1"], (stride, stride),
                                 ((1, 1), (1, 1)), dimension_numbers=dn)
    y = jnp.maximum(_bn_ref(y, params["g1"], params["b1"]), 0.0)
    out = lax.conv_general_dilated(y, params["w2"], (1, 1),
                                   ((1, 1), (1, 1)), dimension_numbers=dn)
    out = _bn_ref(out, params["g2"], params["b2"])
    if "ws" in params:
        s = lax.conv_general_dilated(x, params["ws"], (stride, stride),
                                     ((0, 0), (0, 0)), dimension_numbers=dn)
        s = _bn_ref(s, params["gs"], params["bs"])
    else:
        s = x
    return jnp.maximum(out + s, 0.0)


# ---------------------------------------------------------------------------
# Deterministic init + demo
# ---------------------------------------------------------------------------
def init_params(key, in_channels, out_channels, stride):
    ks = jax.random.split(key, 8)
    params = {
        "w1": jax.random.normal(ks[0], (out_channels, in_channels, 3, 3), jnp.float32) * 0.1,
        "g1": jax.random.normal(ks[1], (out_channels,), jnp.float32) * 0.1 + 1.0,
        "b1": jax.random.normal(ks[2], (out_channels,), jnp.float32) * 0.1,
        "w2": jax.random.normal(ks[3], (out_channels, out_channels, 3, 3), jnp.float32) * 0.1,
        "g2": jax.random.normal(ks[4], (out_channels,), jnp.float32) * 0.1 + 1.0,
        "b2": jax.random.normal(ks[5], (out_channels,), jnp.float32) * 0.1,
    }
    if stride != 1 or in_channels != out_channels:
        params["ws"] = jax.random.normal(ks[6], (out_channels, in_channels, 1, 1), jnp.float32) * 0.1
        params["gs"] = jnp.ones((out_channels,), jnp.float32)
        params["bs"] = jnp.zeros((out_channels,), jnp.float32)
    return params


if __name__ == "__main__":
    key = jax.random.PRNGKey(0)

    # (in_channels, out_channels, stride, spatial): projection and identity blocks.
    configs = [(4, 8, 2, 16), (8, 8, 1, 16)]
    for i, (cin, cout, stride, hw) in enumerate(configs):
        k_x, k_p = jax.random.split(jax.random.fold_in(key, i))
        x = jax.random.normal(k_x, (2, cin, hw, hw), jnp.float32)   # NCHW
        params = init_params(k_p, cin, cout, stride)

        out = jax.block_until_ready(basic_block_forward(x, params, stride=stride))
        ho = hw // stride
        assert out.shape == (2, cout, ho, ho), out.shape
        assert bool(jnp.all(jnp.isfinite(out)))
        assert bool(jnp.all(out >= 0.0))                            # final ReLU

        ref = basic_block_reference(x, params, stride)
        err = float(jnp.max(jnp.abs(out - ref)))
        assert err < 0.1, f"config {i}: mismatch vs reference, max|diff|={err}"

    print("KERNEL_OK")
</pallas_src>

<mosaic_0001>
module attributes {stable_mosaic.version = 11 : i64} {
  func.func @_conv1_kernel(%arg0: i32, %arg1: memref<1x64x128xbf16, #tpu.memory_space<vmem>>, %arg2: memref<128x256xbf16, #tpu.memory_space<vmem>>, %arg3: memref<1x64x256xbf16, #tpu.memory_space<vmem>>, %arg4: memref<8x256xf32, #tpu.memory_space<vmem>>) attributes {dimension_semantics = [#tpu.dimension_semantics<arbitrary>], iteration_bounds = array<i64: 2>, scalar_prefetch = 0 : i64, scratch_operands = 0 : i64, tpu.core_type = #tpu.core_type<tc>, window_params = [{transform_indices = @transform_0, window_bounds = array<i64: 1, 64, 128>}, {pipeline_mode = #tpu.pipeline_mode<synchronous>, transform_indices = @transform_1, window_bounds = array<i64: 128, 256>}, {transform_indices = @transform_2, window_bounds = array<i64: 1, 64, 256>}, {pipeline_mode = #tpu.pipeline_mode<synchronous>, transform_indices = @transform_3, window_bounds = array<i64: 8, 256>}]} {
    %c0 = arith.constant 0 : index
    %c0_0 = arith.constant 0 : index
    %c0_1 = arith.constant 0 : index
    %0 = vector.load %arg1[%c0, %c0_0, %c0_1] : memref<1x64x128xbf16, #tpu.memory_space<vmem>>, vector<1x64x128xbf16>
    %1 = vector.shape_cast %0 : vector<1x64x128xbf16> to vector<64x128xbf16>
    %c0_2 = arith.constant 0 : index
    %c0_3 = arith.constant 0 : index
    %2 = vector.load %arg2[%c0_2, %c0_3] : memref<128x256xbf16, #tpu.memory_space<vmem>>, vector<128x256xbf16>
    %cst = arith.constant dense<0.000000e+00> : vector<64x256xf32>
    %3 = tpu.matmul %1, %2, %cst {dimension_numbers = #tpu.dot_dimension_numbers<[1], [0], [0], [1], [0, 0, 1, 1], [], []>} : vector<64x128xbf16>, vector<128x256xbf16>, vector<64x256xf32> -> vector<64x256xf32>
    %c0_i32 = arith.constant 0 : i32
    %4 = arith.cmpi eq, %arg0, %c0_i32 : i32
    %5 = arith.extui %4 : i1 to i32
    %c0_i32_4 = arith.constant 0 : i32
    %6 = arith.cmpi ne, %5, %c0_i32_4 : i32
    scf.if %6 {
      %cst_15 = arith.constant 0.000000e+00 : f32
      %21 = vector.broadcast %cst_15 : f32 to vector<8x256xf32>
      %c0_16 = arith.constant 0 : index
      %c0_17 = arith.constant 0 : index
      %22 = vector.load %arg4[%c0_16, %c0_17] : memref<8x256xf32, #tpu.memory_space<vmem>>, vector<8x256xf32>
      tpu.vector_store %arg4[%c0_16, %c0_17], %21 {strides = array<i32>} : memref<8x256xf32, #tpu.memory_space<vmem>>, vector<8x256xf32>,
    } else {
    }
    %cst_5 = arith.constant dense<0.000000e+00> : vector<256xf32>
    %7 = vector.multi_reduction <add>, %3, %cst_5 [0] : vector<64x256xf32> to vector<256xf32>
    %8 = vector.shape_cast %7 : vector<256xf32> to vector<1x256xf32>
    %9 = arith.mulf %3, %3 : vector<64x256xf32>
    %cst_6 = arith.constant dense<0.000000e+00> : vector<256xf32>
    %10 = vector.multi_reduction <add>, %9, %cst_6 [0] : vector<64x256xf32> to vector<256xf32>
    %11 = vector.shape_cast %10 : vector<256xf32> to vector<1x256xf32>
    %cst_7 = arith.constant 0.000000e+00 : f32
    %12 = vector.broadcast %cst_7 : f32 to vector<6x256xf32>
    %c0_8 = arith.constant 0 : index
    %c0_9 = arith.constant 0 : index
    %13 = vector.load %arg4[%c0_8, %c0_9] : memref<8x256xf32, #tpu.memory_space<vmem>>, vector<8x256xf32>
    %14 = tpu.concatenate %8, %11, %12 in 0 : vector<1x256xf32>, vector<1x256xf32>, vector<6x256xf32> -> vector<8x256xf32>
    %15 = arith.addf %13, %14 : vector<8x256xf32>
    %c0_10 = arith.constant 0 : index
    %c0_11 = arith.constant 0 : index
    %16 = vector.load %arg4[%c0_10, %c0_11] : memref<8x256xf32, #tpu.memory_space<vmem>>, vector<8x256xf32>
    tpu.vector_store %arg4[%c0_10, %c0_11], %15 {strides = array<i32>} : memref<8x256xf32, #tpu.memory_space<vmem>>, vector<8x256xf32>,
    %17 = arith.truncf %3 : vector<64x256xf32> to vector<64x256xbf16>
    %c0_12 = arith.constant 0 : index
    %c0_13 = arith.constant 0 : index
    %c0_14 = arith.constant 0 : index
    %18 = vector.load %arg3[%c0_12, %c0_13, %c0_14] : memref<1x64x256xbf16, #tpu.memory_space<vmem>>, vector<1x64x256xbf16>
    %19 = vector.shape_cast %18 : vector<1x64x256xbf16> to vector<64x256xbf16>
    %20 = vector.shape_cast %17 : vector<64x256xbf16> to vector<1x64x256xbf16>
    tpu.vector_store %arg3[%c0_12, %c0_13, %c0_14], %20 {strides = array<i32>} : memref<1x64x256xbf16, #tpu.memory_space<vmem>>, vector<1x64x256xbf16>,
    return
  }
  func.func @transform_0(%arg0: i32) -> (i32, i32, i32) {
    %c0_i32 = arith.constant 0 : i32
    %c0_i32_0 = arith.constant 0 : i32
    %c0_i32_1 = arith.constant 0 : i32
    return %arg0, %c0_i32, %c0_i32_0 : i32, i32, i32
  }
  func.func @transform_1(%arg0: i32) -> (i32, i32) {
    %c0_i32 = arith.constant 0 : i32
    %c0_i32_0 = arith.constant 0 : i32
    %c0_i32_1 = arith.constant 0 : i32
    return %c0_i32, %c0_i32_0 : i32, i32
  }
  func.func @transform_2(%arg0: i32) -> (i32, i32, i32) {
    %c0_i32 = arith.constant 0 : i32
    %c0_i32_0 = arith.constant 0 : i32
    %c0_i32_1 = arith.constant 0 : i32
    return %arg0, %c0_i32, %c0_i32_0 : i32, i32, i32
  }
  func.func @transform_3(%arg0: i32) -> (i32, i32) {
    %c0_i32 = arith.constant 0 : i32
    %c0_i32_0 = arith.constant 0 : i32
    %c0_i32_1 = arith.constant 0 : i32
    return %c0_i32, %c0_i32_0 : i32, i32
  }
}

module attributes {stable_mosaic.version = 11 : i64} {
  func.func @_conv2_kernel(%arg0: i32, %arg1: memref<8x128xf32, #tpu.memory_space<vmem>>, %arg2: memref<8x128xf32, #tpu.memory_space<vmem>>, %arg3: memref<64x256xbf16, #tpu.memory_space<vmem>>, %arg4: memref<1x64x128xbf16, #tpu.memory_space<vmem>>, %arg5: memref<1152x128xbf16, #tpu.memory_space<vmem>>, %arg6: memref<1x64x128xbf16, #tpu.memory_space<vmem>>, %arg7: memref<8x128xf32, #tpu.memory_space<vmem>>) attributes {dimension_semantics = [#tpu.dimension_semantics<arbitrary>], iteration_bounds = array<i64: 2>, scalar_prefetch = 0 : i64, scratch_operands = 0 : i64, tpu.core_type = #tpu.core_type<tc>, window_params = [{transform_indices = @transform_0, window_bounds = array<i64: 8, 128>}, {pipeline_mode = #tpu.pipeline_mode<synchronous>, transform_indices = @transform_1, window_bounds = array<i64: 8, 128>}, {pipeline_mode = #tpu.pipeline_mode<synchronous>, transform_indices = @transform_2, window_bounds = array<i64: 64, 256>}, {transform_indices = @transform_3, window_bounds = array<i64: 1, 64, 128>}, {pipeline_mode = #tpu.pipeline_mode<synchronous>, transform_indices = @transform_4, window_bounds = array<i64: 1152, 128>}, {transform_indices = @transform_5, window_bounds = array<i64: 1, 64, 128>}, {pipeline_mode = #tpu.pipeline_mode<synchronous>, transform_indices = @transform_6, window_bounds = array<i64: 8, 128>}]} {
    %c0 = arith.constant 0 : index
    %c0_0 = arith.constant 0 : index
    %0 = vector.load %arg1[%c0, %c0_0] : memref<8x128xf32, #tpu.memory_space<vmem>>, vector<1x128xf32>
    %cst = arith.constant 7.812500e-03 : f32
    %1 = vector.broadcast %cst : f32 to vector<1x128xf32>
    %2 = arith.mulf %0, %1 : vector<1x128xf32>
    %c1 = arith.constant 1 : index
    %c0_1 = arith.constant 0 : index
    %3 = vector.load %arg1[%c1, %c0_1] : memref<8x128xf32, #tpu.memory_space<vmem>>, vector<1x128xf32>
    %cst_2 = arith.constant 7.812500e-03 : f32
    %4 = vector.broadcast %cst_2 : f32 to vector<1x128xf32>
    %5 = arith.mulf %3, %4 : vector<1x128xf32>
    %6 = arith.mulf %2, %2 : vector<1x128xf32>
    %7 = arith.subf %5, %6 : vector<1x128xf32>
    %cst_3 = arith.constant 0.000000e+00 : f32
    %8 = vector.broadcast %cst_3 : f32 to vector<1x128xf32>
    %9 = arith.maximumf %7, %8 : vector<1x128xf32>
    %c0_4 = arith.constant 0 : index
    %c0_5 = arith.constant 0 : index
    %10 = vector.load %arg2[%c0_4, %c0_5] : memref<8x128xf32, #tpu.memory_space<vmem>>, vector<1x128xf32>
    %cst_6 = arith.constant 9.99999974E-6 : f32
    %11 = vector.broadcast %cst_6 : f32 to vector<1x128xf32>
    %12 = arith.addf %9, %11 : vector<1x128xf32>
    %13 = math.rsqrt %12 : vector<1x128xf32>
    %14 = arith.mulf %10, %13 : vector<1x128xf32>
    %c1_7 = arith.constant 1 : index
    %c0_8 = arith.constant 0 : index
    %15 = vector.load %arg2[%c1_7, %c0_8] : memref<8x128xf32, #tpu.memory_space<vmem>>, vector<1x128xf32>
    %16 = arith.mulf %2, %14 : vector<1x128xf32>
    %17 = arith.subf %15, %16 : vector<1x128xf32>
    %c0_9 = arith.constant 0 : index
    %c0_10 = arith.constant 0 : index
    %c0_11 = arith.constant 0 : index
    %18 = vector.load %arg4[%c0_9, %c0_10, %c0_11] : memref<1x64x128xbf16, #tpu.memory_space<vmem>>, vector<1x64x128xbf16>
    %19 = vector.shape_cast %18 : vector<1x64x128xbf16> to vector<64x128xbf16>
    %20 = arith.extf %19 : vector<64x128xbf16> to vector<64x128xf32>
    %21 = vector.broadcast %14 : vector<1x128xf32> to vector<64x128xf32>
    %22 = arith.mulf %20, %21 : vector<64x128xf32>
    %23 = vector.broadcast %17 : vector<1x128xf32> to vector<64x128xf32>
    %24 = arith.addf %22, %23 : vector<64x128xf32>
    %cst_12 = arith.constant 0.000000e+00 : f32
    %25 = vector.broadcast %cst_12 : f32 to vector<64x128xf32>
    %26 = arith.maximumf %24, %25 : vector<64x128xf32>
    %27 = arith.truncf %26 : vector<64x128xf32> to vector<64x128xbf16>
    %cst_13 = arith.constant 0.000000e+00 : bf16
    %28 = vector.broadcast %cst_13 : bf16 to vector<9x128xbf16>
    %29 = vector.extract_strided_slice %27 {offsets = [0, 0], sizes = [55, 128], strides = [1, 1]} : vector<64x128xbf16> to vector<55x128xbf16>
    %30 = tpu.concatenate %28, %29 in 0 : vector<9x128xbf16>, vector<55x128xbf16> -> vector<64x128xbf16>
    %c0_14 = arith.constant 0 : index
    %c0_15 = arith.constant 0 : index
    %31 = vector.load %arg3[%c0_14, %c0_15] : memref<64x256xbf16, #tpu.memory_space<vmem>>, vector<64x128xbf16>
    %32 = arith.mulf %30, %31 : vector<64x128xbf16>
    %cst_16 = arith.constant 0.000000e+00 : bf16
    %33 = vector.broadcast %cst_16 : bf16 to vector<8x128xbf16>
    %34 = vector.extract_strided_slice %27 {offsets = [0, 0], sizes = [56, 128], strides = [1, 1]} : vector<64x128xbf16> to vector<56x128xbf16>
    %35 = tpu.concatenate %33, %34 in 0 : vector<8x128xbf16>, vector<56x128xbf16> -> vector<64x128xbf16>
    %cst_17 = arith.constant 0.000000e+00 : bf16
    %36 = vector.broadcast %cst_17 : bf16 to vector<7x128xbf16>
    %37 = vector.extract_strided_slice %27 {offsets = [0, 0], sizes = [57, 128], strides = [1, 1]} : vector<64x128xbf16> to vector<57x128xbf16>
    %38 = tpu.concatenate %36, %37 in 0 : vector<7x128xbf16>, vector<57x128xbf16> -> vector<64x128xbf16>
    %c0_18 = arith.constant 0 : index
    %c128 = arith.constant 128 : index
    %39 = vector.load %arg3[%c0_18, %c128] : memref<64x256xbf16, #tpu.memory_space<vmem>>, vector<64x128xbf16>
    %40 = arith.mulf %38, %39 : vector<64x128xbf16>
    %cst_19 = arith.constant 0.000000e+00 : bf16
    %41 = vector.broadcast %cst_19 : bf16 to vector<1x128xbf16>
    %42 = vector.extract_strided_slice %27 {offsets = [0, 0], sizes = [63, 128], strides = [1, 1]} : vector<64x128xbf16> to vector<63x128xbf16>
    %43 = tpu.concatenate %41, %42 in 0 : vector<1x128xbf16>, vector<63x128xbf16> -> vector<64x128xbf16>
    %c0_20 = arith.constant 0 : index
    %c0_21 = arith.constant 0 : index
    %44 = vector.load %arg3[%c0_20, %c0_21] : memref<64x256xbf16, #tpu.memory_space<vmem>>, vector<64x128xbf16>
    %45 = arith.mulf %43, %44 : vector<64x128xbf16>
    %46 = vector.extract_strided_slice %27 {offsets = [1, 0], sizes = [63, 128], strides = [1, 1]} : vector<64x128xbf16> to vector<63x128xbf16>
    %cst_22 = arith.constant 0.000000e+00 : bf16
    %47 = vector.broadcast %cst_22 : bf16 to vector<1x128xbf16>
    %48 = tpu.concatenate %46, %47 in 0 : vector<63x128xbf16>, vector<1x128xbf16> -> vector<64x128xbf16>
    %c0_23 = arith.constant 0 : index
    %c128_24 = arith.constant 128 : index
    %49 = vector.load %arg3[%c0_23, %c128_24] : memref<64x256xbf16, #tpu.memory_space<vmem>>, vector<64x128xbf16>
    %50 = arith.mulf %48, %49 : vector<64x128xbf16>
    %51 = vector.extract_strided_slice %27 {offsets = [7, 0], sizes = [57, 128], strides = [1, 1]} : vector<64x128xbf16> to vector<57x128xbf16>
    %cst_25 = arith.constant 0.000000e+00 : bf16
    %52 = vector.broadcast %cst_25 : bf16 to vector<7x128xbf16>
    %53 = tpu.concatenate %51, %52 in 0 : vector<57x128xbf16>, vector<7x128xbf16> -> vector<64x128xbf16>
    %c0_26 = arith.constant 0 : index
    %c0_27 = arith.constant 0 : index
    %54 = vector.load %arg3[%c0_26, %c0_27] : memref<64x256xbf16, #tpu.memory_space<vmem>>, vector<64x128xbf16>
    %55 = arith.mulf %53, %54 : vector<64x128xbf16>
    %56 = vector.extract_strided_slice %27 {offsets = [8, 0], sizes = [56, 128], strides = [1, 1]} : vector<64x128xbf16> to vector<56x128xbf16>
    %cst_28 = arith.constant 0.000000e+00 : bf16
    %57 = vector.broadcast %cst_28 : bf16 to vector<8x128xbf16>
    %58 = tpu.concatenate %56, %57 in 0 : vector<56x128xbf16>, vector<8x128xbf16> -> vector<64x128xbf16>
    %59 = vector.extract_strided_slice %27 {offsets = [9, 0], sizes = [55, 128], strides = [1, 1]} : vector<64x128xbf16> to vector<55x128xbf16>
    %cst_29 = arith.constant 0.000000e+00 : bf16
    %60 = vector.broadcast %cst_29 : bf16 to vector<9x128xbf16>
    %61 = tpu.concatenate %59, %60 in 0 : vector<55x128xbf16>, vector<9x128xbf16> -> vector<64x128xbf16>
    %c0_30 = arith.constant 0 : index
    %c128_31 = arith.constant 128 : index
    %62 = vector.load %arg3[%c0_30, %c128_31] : memref<64x256xbf16, #tpu.memory_space<vmem>>, vector<64x128xbf16>
    %63 = arith.mulf %61, %62 : vector<64x128xbf16>
    %64 = tpu.concatenate %32, %35, %40, %45, %27, %50, %55, %58, %63 in 1 : vector<64x128xbf16>, vector<64x128xbf16>, vector<64x128xbf16>, vector<64x128xbf16>, vector<64x128xbf16>, vector<64x128xbf16>, vector<64x128xbf16>, vector<64x128xbf16>, vector<64x128xbf16> -> vector<64x1152xbf16>
    %c0_32 = arith.constant 0 : index
    %c0_33 = arith.constant 0 : index
    %65 = vector.load %arg5[%c0_32, %c0_33] : memref<1152x128xbf16, #tpu.memory_space<vmem>>, vector<1152x128xbf16>
    %cst_34 = arith.constant dense<0.000000e+00> : vector<64x128xf32>
    %66 = tpu.matmul %64, %65, %cst_34 {dimension_numbers = #tpu.dot_dimension_numbers<[1], [0], [0], [1], [0, 0, 1, 1], [], []>} : vector<64x1152xbf16>, vector<1152x128xbf16>, vector<64x128xf32> -> vector<64x128xf32>
    %c0_i32 = arith.constant 0 : i32
    %67 = arith.cmpi eq, %arg0, %c0_i32 : i32
    %68 = arith.extui %67 : i1 to i32
    %c0_i32_35 = arith.constant 0 : i32
    %69 = arith.cmpi ne, %68, %c0_i32_35 : i32
    scf.if %69 {
      %cst_46 = arith.constant 0.000000e+00 : f32
      %84 = vector.broadcast %cst_46 : f32 to vector<8x128xf32>
      %c0_47 = arith.constant 0 : index
      %c0_48 = arith.constant 0 : index
      %85 = vector.load %arg7[%c0_47, %c0_48] : memref<8x128xf32, #tpu.memory_space<vmem>>, vector<8x128xf32>
      tpu.vector_store %arg7[%c0_47, %c0_48], %84 {strides = array<i32>} : memref<8x128xf32, #tpu.memory_space<vmem>>, vector<8x128xf32>,
    } else {
    }
    %cst_36 = arith.constant dense<0.000000e+00> : vector<128xf32>
    %70 = vector.multi_reduction <add>, %66, %cst_36 [0] : vector<64x128xf32> to vector<128xf32>
    %71 = vector.shape_cast %70 : vector<128xf32> to vector<1x128xf32>
    %72 = arith.mulf %66, %66 : vector<64x128xf32>
    %cst_37 = arith.constant dense<0.000000e+00> : vector<128xf32>
    %73 = vector.multi_reduction <add>, %72, %cst_37 [0] : vector<64x128xf32> to vector<128xf32>
    %74 = vector.shape_cast %73 : vector<128xf32> to vector<1x128xf32>
    %cst_38 = arith.constant 0.000000e+00 : f32
    %75 = vector.broadcast %cst_38 : f32 to vector<6x128xf32>
    %c0_39 = arith.constant 0 : index
    %c0_40 = arith.constant 0 : index
    %76 = vector.load %arg7[%c0_39, %c0_40] : memref<8x128xf32, #tpu.memory_space<vmem>>, vector<8x128xf32>
    %77 = tpu.concatenate %71, %74, %75 in 0 : vector<1x128xf32>, vector<1x128xf32>, vector<6x128xf32> -> vector<8x128xf32>
    %78 = arith.addf %76, %77 : vector<8x128xf32>
    %c0_41 = arith.constant 0 : index
    %c0_42 = arith.constant 0 : index
    %79 = vector.load %arg7[%c0_41, %c0_42] : memref<8x128xf32, #tpu.memory_space<vmem>>, vector<8x128xf32>
    tpu.vector_store %arg7[%c0_41, %c0_42], %78 {strides = array<i32>} : memref<8x128xf32, #tpu.memory_space<vmem>>, vector<8x128xf32>,
    %80 = arith.truncf %66 : vector<64x128xf32> to vector<64x128xbf16>
    %c0_43 = arith.constant 0 : index
    %c0_44 = arith.constant 0 : index
    %c0_45 = arith.constant 0 : index
    %81 = vector.load %arg6[%c0_43, %c0_44, %c0_45] : memref<1x64x128xbf16, #tpu.memory_space<vmem>>, vector<1x64x128xbf16>
    %82 = vector.shape_cast %81 : vector<1x64x128xbf16> to vector<64x128xbf16>
    %83 = vector.shape_cast %80 : vector<64x128xbf16> to vector<1x64x128xbf16>
    tpu.vector_store %arg6[%c0_43, %c0_44, %c0_45], %83 {strides = array<i32>} : memref<1x64x128xbf16, #tpu.memory_space<vmem>>, vector<1x64x128xbf16>,
    return
  }
  func.func @transform_0(%arg0: i32) -> (i32, i32) {
    %c0_i32 = arith.constant 0 : i32
    %c0_i32_0 = arith.constant 0 : i32
    %c0_i32_1 = arith.constant 0 : i32
    return %c0_i32, %c0_i32_0 : i32, i32
  }
  func.func @transform_1(%arg0: i32) -> (i32, i32) {
    %c0_i32 = arith.constant 0 : i32
    %c0_i32_0 = arith.constant 0 : i32
    %c0_i32_1 = arith.constant 0 : i32
    return %c0_i32, %c0_i32_0 : i32, i32
  }
  func.func @transform_2(%arg0: i32) -> (i32, i32) {
    %c0_i32 = arith.constant 0 : i32
    %c0_i32_0 = arith.constant 0 : i32
    %c0_i32_1 = arith.constant 0 : i32
    return %c0_i32, %c0_i32_0 : i32, i32
  }
  func.func @transform_3(%arg0: i32) -> (i32, i32, i32) {
    %c0_i32 = arith.constant 0 : i32
    %c0_i32_0 = arith.constant 0 : i32
    %c0_i32_1 = arith.constant 0 : i32
    return %arg0, %c0_i32, %c0_i32_0 : i32, i32, i32
  }
  func.func @transform_4(%arg0: i32) -> (i32, i32) {
    %c0_i32 = arith.constant 0 : i32
    %c0_i32_0 = arith.constant 0 : i32
    %c0_i32_1 = arith.constant 0 : i32
    return %c0_i32, %c0_i32_0 : i32, i32
  }
  func.func @transform_5(%arg0: i32) -> (i32, i32, i32) {
    %c0_i32 = arith.constant 0 : i32
    %c0_i32_0 = arith.constant 0 : i32
    %c0_i32_1 = arith.constant 0 : i32
    return %arg0, %c0_i32, %c0_i32_0 : i32, i32, i32
  }
  func.func @transform_6(%arg0: i32) -> (i32, i32) {
    %c0_i32 = arith.constant 0 : i32
    %c0_i32_0 = arith.constant 0 : i32
    %c0_i32_1 = arith.constant 0 : i32
    return %c0_i32, %c0_i32_0 : i32, i32
  }
}

module attributes {stable_mosaic.version = 11 : i64} {
  func.func @_finalize_kernel(%arg0: i32, %arg1: memref<8x128xf32, #tpu.memory_space<vmem>>, %arg2: memref<8x128xf32, #tpu.memory_space<vmem>>, %arg3: memref<8x128xf32, #tpu.memory_space<vmem>>, %arg4: memref<1x64x128xbf16, #tpu.memory_space<vmem>>, %arg5: memref<1x64x128xbf16, #tpu.memory_space<vmem>>, %arg6: memref<1x64x128xbf16, #tpu.memory_space<vmem>>) attributes {dimension_semantics = [#tpu.dimension_semantics<parallel>], iteration_bounds = array<i64: 2>, scalar_prefetch = 0 : i64, scratch_operands = 0 : i64, tpu.core_type = #tpu.core_type<tc>, window_params = [{transform_indices = @transform_0, window_bounds = array<i64: 8, 128>}, {pipeline_mode = #tpu.pipeline_mode<synchronous>, transform_indices = @transform_1, window_bounds = array<i64: 8, 128>}, {pipeline_mode = #tpu.pipeline_mode<synchronous>, transform_indices = @transform_2, window_bounds = array<i64: 8, 128>}, {transform_indices = @transform_3, window_bounds = array<i64: 1, 64, 128>}, {transform_indices = @transform_4, window_bounds = array<i64: 1, 64, 128>}, {transform_indices = @transform_5, window_bounds = array<i64: 1, 64, 128>}]} {
    %c0 = arith.constant 0 : index
    %c0_0 = arith.constant 0 : index
    %0 = vector.load %arg2[%c0, %c0_0] : memref<8x128xf32, #tpu.memory_space<vmem>>, vector<1x128xf32>
    %cst = arith.constant 7.812500e-03 : f32
    %1 = vector.broadcast %cst : f32 to vector<1x128xf32>
    %2 = arith.mulf %0, %1 : vector<1x128xf32>
    %c1 = arith.constant 1 : index
    %c0_1 = arith.constant 0 : index
    %3 = vector.load %arg2[%c1, %c0_1] : memref<8x128xf32, #tpu.memory_space<vmem>>, vector<1x128xf32>
    %cst_2 = arith.constant 7.812500e-03 : f32
    %4 = vector.broadcast %cst_2 : f32 to vector<1x128xf32>
    %5 = arith.mulf %3, %4 : vector<1x128xf32>
    %6 = arith.mulf %2, %2 : vector<1x128xf32>
    %7 = arith.subf %5, %6 : vector<1x128xf32>
    %cst_3 = arith.constant 0.000000e+00 : f32
    %8 = vector.broadcast %cst_3 : f32 to vector<1x128xf32>
    %9 = arith.maximumf %7, %8 : vector<1x128xf32>
    %c0_4 = arith.constant 0 : index
    %c0_5 = arith.constant 0 : index
    %10 = vector.load %arg3[%c0_4, %c0_5] : memref<8x128xf32, #tpu.memory_space<vmem>>, vector<1x128xf32>
    %cst_6 = arith.constant 9.99999974E-6 : f32
    %11 = vector.broadcast %cst_6 : f32 to vector<1x128xf32>
    %12 = arith.addf %9, %11 : vector<1x128xf32>
    %13 = math.rsqrt %12 : vector<1x128xf32>
    %14 = arith.mulf %10, %13 : vector<1x128xf32>
    %c1_7 = arith.constant 1 : index
    %c0_8 = arith.constant 0 : index
    %15 = vector.load %arg3[%c1_7, %c0_8] : memref<8x128xf32, #tpu.memory_space<vmem>>, vector<1x128xf32>
    %16 = arith.mulf %2, %14 : vector<1x128xf32>
    %17 = arith.subf %15, %16 : vector<1x128xf32>
    %c0_9 = arith.constant 0 : index
    %c0_10 = arith.constant 0 : index
    %c0_11 = arith.constant 0 : index
    %18 = vector.load %arg4[%c0_9, %c0_10, %c0_11] : memref<1x64x128xbf16, #tpu.memory_space<vmem>>, vector<1x64x128xbf16>
    %19 = vector.shape_cast %18 : vector<1x64x128xbf16> to vector<64x128xbf16>
    %20 = arith.extf %19 : vector<64x128xbf16> to vector<64x128xf32>
    %21 = vector.broadcast %14 : vector<1x128xf32> to vector<64x128xf32>
    %22 = arith.mulf %20, %21 : vector<64x128xf32>
    %23 = vector.broadcast %17 : vector<1x128xf32> to vector<64x128xf32>
    %24 = arith.addf %22, %23 : vector<64x128xf32>
    %c0_12 = arith.constant 0 : index
    %c0_13 = arith.constant 0 : index
    %c0_14 = arith.constant 0 : index
    %25 = vector.load %arg5[%c0_12, %c0_13, %c0_14] : memref<1x64x128xbf16, #tpu.memory_space<vmem>>, vector<1x64x128xbf16>
    %26 = vector.shape_cast %25 : vector<1x64x128xbf16> to vector<64x128xbf16>
    %27 = arith.extf %26 : vector<64x128xbf16> to vector<64x128xf32>
    %c0_15 = arith.constant 0 : index
    %c0_16 = arith.constant 0 : index
    %28 = vector.load %arg1[%c0_15, %c0_16] : memref<8x128xf32, #tpu.memory_space<vmem>>, vector<1x128xf32>
    %cst_17 = arith.constant 7.812500e-03 : f32
    %29 = vector.broadcast %cst_17 : f32 to vector<1x128xf32>
    %30 = arith.mulf %28, %29 : vector<1x128xf32>
    %c1_18 = arith.constant 1 : index
    %c0_19 = arith.constant 0 : index
    %31 = vector.load %arg1[%c1_18, %c0_19] : memref<8x128xf32, #tpu.memory_space<vmem>>, vector<1x128xf32>
    %cst_20 = arith.constant 7.812500e-03 : f32
    %32 = vector.broadcast %cst_20 : f32 to vector<1x128xf32>
    %33 = arith.mulf %31, %32 : vector<1x128xf32>
    %34 = arith.mulf %30, %30 : vector<1x128xf32>
    %35 = arith.subf %33, %34 : vector<1x128xf32>
    %cst_21 = arith.constant 0.000000e+00 : f32
    %36 = vector.broadcast %cst_21 : f32 to vector<1x128xf32>
    %37 = arith.maximumf %35, %36 : vector<1x128xf32>
    %c2 = arith.constant 2 : index
    %c0_22 = arith.constant 0 : index
    %38 = vector.load %arg3[%c2, %c0_22] : memref<8x128xf32, #tpu.memory_space<vmem>>, vector<1x128xf32>
    %cst_23 = arith.constant 9.99999974E-6 : f32
    %39 = vector.broadcast %cst_23 : f32 to vector<1x128xf32>
    %40 = arith.addf %37, %39 : vector<1x128xf32>
    %41 = math.rsqrt %40 : vector<1x128xf32>
    %42 = arith.mulf %38, %41 : vector<1x128xf32>
    %c3 = arith.constant 3 : index
    %c0_24 = arith.constant 0 : index
    %43 = vector.load %arg3[%c3, %c0_24] : memref<8x128xf32, #tpu.memory_space<vmem>>, vector<1x128xf32>
    %44 = arith.mulf %30, %42 : vector<1x128xf32>
    %45 = arith.subf %43, %44 : vector<1x128xf32>
    %46 = vector.broadcast %42 : vector<1x128xf32> to vector<64x128xf32>
    %47 = arith.mulf %27, %46 : vector<64x128xf32>
    %48 = vector.broadcast %45 : vector<1x128xf32> to vector<64x128xf32>
    %49 = arith.addf %47, %48 : vector<64x128xf32>
    %50 = arith.addf %24, %49 : vector<64x128xf32>
    %cst_25 = arith.constant 0.000000e+00 : f32
    %51 = vector.broadcast %cst_25 : f32 to vector<64x128xf32>
    %52 = arith.maximumf %50, %51 : vector<64x128xf32>
    %53 = arith.truncf %52 : vector<64x128xf32> to vector<64x128xbf16>
    %c0_26 = arith.constant 0 : index
    %c0_27 = arith.constant 0 : index
    %c0_28 = arith.constant 0 : index
    %54 = vector.load %arg6[%c0_26, %c0_27, %c0_28] : memref<1x64x128xbf16, #tpu.memory_space<vmem>>, vector<1x64x128xbf16>
    %55 = vector.shape_cast %54 : vector<1x64x128xbf16> to vector<64x128xbf16>
    %56 = vector.shape_cast %53 : vector<64x128xbf16> to vector<1x64x128xbf16>
    tpu.vector_store %arg6[%c0_26, %c0_27, %c0_28], %56 {strides = array<i32>} : memref<1x64x128xbf16, #tpu.memory_space<vmem>>, vector<1x64x128xbf16>,
    return
  }
  func.func @transform_0(%arg0: i32) -> (i32, i32) {
    %c0_i32 = arith.constant 0 : i32
    %c1_i32 = arith.constant 1 : i32
    %c0_i32_0 = arith.constant 0 : i32
    return %c0_i32, %c1_i32 : i32, i32
  }
  func.func @transform_1(%arg0: i32) -> (i32, i32) {
    %c0_i32 = arith.constant 0 : i32
    %c0_i32_0 = arith.constant 0 : i32
    %c0_i32_1 = arith.constant 0 : i32
    return %c0_i32, %c0_i32_0 : i32, i32
  }
  func.func @transform_2(%arg0: i32) -> (i32, i32) {
    %c0_i32 = arith.constant 0 : i32
    %c0_i32_0 = arith.constant 0 : i32
    %c0_i32_1 = arith.constant 0 : i32
    return %c0_i32, %c0_i32_0 : i32, i32
  }
  func.func @transform_3(%arg0: i32) -> (i32, i32, i32) {
    %c0_i32 = arith.constant 0 : i32
    %c0_i32_0 = arith.constant 0 : i32
    %c0_i32_1 = arith.constant 0 : i32
    return %arg0, %c0_i32, %c0_i32_0 : i32, i32, i32
  }
  func.func @transform_4(%arg0: i32) -> (i32, i32, i32) {
    %c0_i32 = arith.constant 0 : i32
    %c1_i32 = arith.constant 1 : i32
    %c0_i32_0 = arith.constant 0 : i32
    return %arg0, %c0_i32, %c1_i32 : i32, i32, i32
  }
  func.func @transform_5(%arg0: i32) -> (i32, i32, i32) {
    %c0_i32 = arith.constant 0 : i32
    %c0_i32_0 = arith.constant 0 : i32
    %c0_i32_1 = arith.constant 0 : i32
    return %arg0, %c0_i32, %c0_i32_0 : i32, i32, i32
  }
}

</mosaic_0001>

<llo_original>
// kernel: basic_block_forward.3
$region0: #{basic_block_forward.3}
  #allocation0 [shape = 'u32[]', space=smem, size = 0x4, offset = 0x4, fixed_abs, tag = 'smem constant byte address 0x4 - core index']
  #allocation1 [shape = 'u32[144,128]{1,0:T(1,128)}', space=vmem, size = 0x12000, scoped, tag = 'internal scratch']
  %s0 = inlined_call_operand.vmem [shape: bf16[2,64,128], index: 0, kind: input, shape index: {}]
  %s1 = inlined_call_operand.vmem [shape: bf16[128,256], index: 1, kind: input, shape index: {}]
  %s2 = inlined_call_operand.vmem [shape: bf16[2,64,256], index: 2, kind: output, shape index: {0}]
  %s3 = inlined_call_operand.vmem [shape: f32[8,256], index: 3, kind: output, shape index: {1}]
  %4 = xla_tuple %s2, %s3
  %s5 = sld [smem:[#allocation0]]
  $region53: #{basic_block_forward.3} parent=0
    _
  %s7 = ssub.s32 1, %s5
  %s8 = scalar_select 0, %s7, %s5
  loop: start=0, step=1, limit=4
  $region2: #{basic_block_forward.3} parent=0 // loop_pre_header
    _
  $region3: #{basic_block_forward.3} parent=0 // loop_header
    %s10 = sphi 0, %s14
    %p11 = scmp.ge.s32.totalorder %s10, 4
    %s20 = sphi 0, %s22
    %s23 = sphi 0, %s20
    %s24 = sphi 0, %s23
    %s40 = sphi 0, %s24
    %s44 = sphi 0, %s44
    %s46 = sphi 0, %s44
    %s47 = sphi 0, %s46
    %s61 = sphi 0, %s47
    %s67 = sphi 0, %s69
    %s70 = sphi 0, %s67
    %s71 = sphi 0, %s70
    %s87 = sphi 0, %s71
    %s91 = sphi 0, %s91
    %s93 = sphi 0, %s91
    %s94 = sphi 0, %s93
    %s108 = sphi 0, %s94
  $region4: #{basic_block_forward.3} parent=0 // loop_header_branch
    %13 = sbr.rel (%p11) target = $region8
  $region5: #{basic_block_forward.3} parent=0 // loop_body
    %s15 = ssub.s32 %s10, 1
    %s16 = ssub.s32 %s10, 2
    %s17 = sadd.s32 %s10, 1
    %s18 = ssub.s32 %s10, %s17
    %p19 = scmp.eq.s32.totalorder %s18, 0
    %s21 = sadd.s32 %s20, 1
    %s22 = scalar_select %p19, %s20, %s21
    %p25 = pneg %p19
    %p26 = scmp.eq.s32.totalorder %s10, 1
    %p27 = por %p25, %p26
    %p28 = scmp.ne.s32.totalorder %s20, %s23
    %p29 = scmp.eq.s32.totalorder %s10, 0
    %p30 = por %p28, %p29
    %p31 = scmp.ne.s32.totalorder %s20, %s23
    %p32 = scmp.eq.s32.totalorder %s15, 1
    %p33 = por %p31, %p32
    %p34 = scmp.ne.s32.totalorder %s23, %s24
    %p35 = scmp.eq.s32.totalorder %s15, 0
    %p36 = por %p34, %p35
    %p37 = scmp.ne.s32.totalorder %s23, %s24
    %p38 = scmp.eq.s32.totalorder %s16, 1
    %p39 = por %p37, %p38
    %p41 = scmp.ne.s32.totalorder %s24, %s40
    %p42 = scmp.eq.s32.totalorder %s16, 0
    %p43 = por %p41, %p42
    %s45 = sadd.s32 %s44, 1
    %p48 = scmp.eq.s32.totalorder %s10, 1
    %p49 = scmp.ne.s32.totalorder %s44, %s46
    %p50 = scmp.eq.s32.totalorder %s10, 0
    %p51 = por %p49, %p50
    %p52 = scmp.ne.s32.totalorder %s44, %s46
    %p53 = scmp.eq.s32.totalorder %s15, 1
    %p54 = por %p52, %p53
    %p55 = scmp.ne.s32.totalorder %s46, %s47
    %p56 = scmp.eq.s32.totalorder %s15, 0
    %p57 = por %p55, %p56
    %p58 = scmp.ne.s32.totalorder %s46, %s47
    %p59 = scmp.eq.s32.totalorder %s16, 1
    %p60 = por %p58, %p59
    %p62 = scmp.ne.s32.totalorder %s47, %s61
    %p63 = scmp.eq.s32.totalorder %s16, 0
    %p64 = por %p62, %p63
    %s65 = ssub.s32 %s10, %s17
    %p66 = scmp.eq.s32.totalorder %s65, 0
    %s68 = sadd.s32 %s67, 1
    %s69 = scalar_select %p66, %s67, %s68
    %p72 = pneg %p66
    %p73 = scmp.eq.s32.totalorder %s10, 1
    %p74 = por %p72, %p73
    %p75 = scmp.ne.s32.totalorder %s67, %s70
    %p76 = scmp.eq.s32.totalorder %s10, 0
    %p77 = por %p75, %p76
    %p78 = scmp.ne.s32.totalorder %s67, %s70
    %p79 = scmp.eq.s32.totalorder %s15, 1
    %p80 = por %p78, %p79
    %p81 = scmp.ne.s32.totalorder %s70, %s71
    %p82 = scmp.eq.s32.totalorder %s15, 0
    %p83 = por %p81, %p82
    %p84 = scmp.ne.s32.totalorder %s70, %s71
    %p85 = scmp.eq.s32.totalorder %s16, 1
    %p86 = por %p84, %p85
    %p88 = scmp.ne.s32.totalorder %s71, %s87
    %p89 = scmp.eq.s32.totalorder %s16, 0
    %p90 = por %p88, %p89
    %s92 = sadd.s32 %s91, 1
    %p95 = scmp.eq.s32.totalorder %s10, 1
    %p96 = scmp.ne.s32.totalorder %s91, %s93
    %p97 = scmp.eq.s32.totalorder %s10, 0
    %p98 = por %p96, %p97
    %p99 = scmp.ne.s32.totalorder %s91, %s93
    %p100 = scmp.eq.s32.totalorder %s15, 1
    %p101 = por %p99, %p100
    %p102 = scmp.ne.s32.totalorder %s93, %s94
    %p103 = scmp.eq.s32.totalorder %s15, 0
    %p104 = por %p102, %p103
    %p105 = scmp.ne.s32.totalorder %s93, %s94
    %p106 = scmp.eq.s32.totalorder %s16, 1
    %p107 = por %p105, %p106
    %p109 = scmp.ne.s32.totalorder %s94, %s108
    %p110 = scmp.eq.s32.totalorder %s16, 0
    %p111 = por %p109, %p110
    %p112 = scmp.le.s32.totalorder 1, %s10
    %p113 = scmp.lt.s32.totalorder %s10, 3
    %p114 = pnand %p112, %p113
    %p115 = pneg %p114
    // Predicated region
    $region9: #{basic_block_forward.3} parent=5 // pred_check
      _
    $region10: #{basic_block_forward.3} parent=5 // pred_check_branch
      %117 = sbr.rel (%p114) target = $region12
    $region11: #{basic_block_forward.3} parent=5 // pred_region
      %s118 = ssub.s32 %s10, 1
      // Predicated region
      $region13: #{basic_block_forward.3} parent=11 // pred_check
        %p119 = pneg %p57
      $region14: #{basic_block_forward.3} parent=11 // pred_check_branch
        %121 = sbr.rel (%p119) target = $region16
      $region15: #{basic_block_forward.3} parent=11 // pred_region
        _
      $region16: #{basic_block_forward.3} parent=11 // pred_fallthru
        _
    $region12: #{basic_block_forward.3} parent=5 // pred_fallthru
      _
    %p122 = scmp.lt.s32.totalorder %s10, 2
    // Predicated region
    $region17: #{basic_block_forward.3} parent=5 // pred_check
      %p123 = pneg %p122
    $region18: #{basic_block_forward.3} parent=5 // pred_check_branch
      %125 = sbr.rel (%p123) target = $region20
    $region19: #{basic_block_forward.3} parent=5 // pred_region
      // Predicated region
      $region21: #{basic_block_forward.3} parent=19 // pred_check
        %p126 = pneg %p30
      $region22: #{basic_block_forward.3} parent=19 // pred_check_branch
        %128 = sbr.rel (%p126) target = $region24
      $region23: #{basic_block_forward.3} parent=19 // pred_region
        %p129 = scmp.lt.s32.totalorder %s10, 1
        %s130 = scalar_select %p129, %s10, 1
        %s131 = smul.addr %s130, 8
        %s132 = smul.addr %s131, 4
        %s133 = scalar_lea.vmem %s0, %s132
      $region24: #{basic_block_forward.3} parent=19 // pred_fallthru
        _
    $region20: #{basic_block_forward.3} parent=5 // pred_fallthru
      _
    %p134 = scmp.le.s32.totalorder 1, %s10
    %p135 = scmp.lt.s32.totalorder %s10, 3
    %p136 = pnand %p134, %p135
    %p137 = pneg %p136
    // Predicated region
    $region25: #{basic_block_forward.3} parent=5 // pred_check
      _
    $region26: #{basic_block_forward.3} parent=5 // pred_check_branch
      %139 = sbr.rel (%p136) target = $region28
    $region27: #{basic_block_forward.3} parent=5 // pred_region
      %s140 = ssub.s32 %s10, 1
      %p141 = scmp.lt.s32.totalorder %s15, 1
      %s142 = scalar_select %p141, %s15, 1
      %s143 = smul.addr %s142, 8
      %s144 = smul.addr %s143, 4
      %s145 = scalar_lea.vmem %s0, %s144
      %p146 = pneg %p36
      %p147 = pneg %p33
      %p148 = pneg %p57
      %p149 = pneg %p54
      %p150 = pneg %p83
      %p151 = pneg %p80
      %p152 = scmp.lt.s32.totalorder %s15, 1
      %s153 = scalar_select %p152, %s15, 1
      %s154 = smul.addr %s153, 16
      %s155 = smul.addr %s154, 4
      %s156 = scalar_lea.vmem %s2, %s155
      %p157 = pneg %p104
      %p158 = pneg %p101
      %p159 = scmp.lt.s32.totalorder %s15, 1
      %s160 = scalar_select %p159, %s15, 1
      %s161 = smul.addr %s160, 8
      %s162 = smul.addr %s161, 4
      %s163 = scalar_lea.vmem %s0, %s162
      %p164 = scmp.lt.s32.totalorder %s15, 1
      %s165 = scalar_select %p164, %s15, 1
      %s166 = smul.addr %s165, 16
      %s167 = smul.addr %s166, 4
      %s168 = scalar_lea.vmem %s2, %s167
      %v170 = vld [vmem:[%s163] sm:$0xf]
      %v171 = vld [vmem:[%s163 + $0x4] sm:$0xf]
      %v172 = vld [vmem:[%s163 + $0x8] sm:$0xf]
      %v173 = vld [vmem:[%s163 + $0xc] sm:$0xf]
      %v174 = vld [vmem:[%s163 + $0x10] sm:$0xf]
      %v175 = vld [vmem:[%s163 + $0x14] sm:$0xf]
      %v176 = vld [vmem:[%s163 + $0x18] sm:$0xf]
      %v177 = vld [vmem:[%s163 + $0x1c] sm:$0xf]
      %v178 = vld [vmem:[%s1] sm:$0xff]
      %v179 = vld [vmem:[%s1 + $0x8] sm:$0xff]
      %v180 = vld [vmem:[%s1 + $0x10] sm:$0xff]
      %v181 = vld [vmem:[%s1 + $0x18] sm:$0xff]
      %v182 = vld [vmem:[%s1 + $0x20] sm:$0xff]
      %v183 = vld [vmem:[%s1 + $0x28] sm:$0xff]
      %v184 = vld [vmem:[%s1 + $0x30] sm:$0xff]
      %v185 = vld [vmem:[%s1 + $0x38] sm:$0xff]
      %v186 = vld [vmem:[%s1 + $0x40] sm:$0xff]
      %v187 = vld [vmem:[%s1 + $0x48] sm:$0xff]
      %v188 = vld [vmem:[%s1 + $0x50] sm:$0xff]
      %v189 = vld [vmem:[%s1 + $0x58] sm:$0xff]
      %v190 = vld [vmem:[%s1 + $0x60] sm:$0xff]
      %v191 = vld [vmem:[%s1 + $0x68] sm:$0xff]
      %v192 = vld [vmem:[%s1 + $0x70] sm:$0xff]
      %v193 = vld [vmem:[%s1 + $0x78] sm:$0xff]
      %v202 = vunpack.c.l.b16 %v170
      %v203 = vunpack.c.l.b16 %v171
      %v204 = vunpack.c.l.b16 %v172
      %v205 = vunpack.c.l.b16 %v173
      %v206 = vunpack.c.l.b16 %v174
      %v207 = vunpack.c.l.b16 %v175
      %v208 = vunpack.c.l.b16 %v176
      %v209 = vunpack.c.l.b16 %v177
      %v210 = vpack.c.b16 %v203, %v202
      %v211 = vpack.c.b16 %v205, %v204
      %v212 = vpack.c.b16 %v207, %v206
      %v213 = vpack.c.b16 %v209, %v208
      %v234 = vunpack.c.l.b16 %v178
      %v235 = vunpack.c.h.b16 %v178
      %v236 = vunpack.c.l.b16 %v179
      %v237 = vunpack.c.h.b16 %v179
      %v238 = vunpack.c.l.b16 %v180
      %v239 = vunpack.c.h.b16 %v180
      %v240 = vunpack.c.l.b16 %v181
      %v241 = vunpack.c.h.b16 %v181
      %v242 = vunpack.c.l.b16 %v182
      %v243 = vunpack.c.h.b16 %v182
      %v244 = vunpack.c.l.b16 %v183
      %v245 = vunpack.c.h.b16 %v183
      %v246 = vunpack.c.l.b16 %v184
      %v247 = vunpack.c.h.b16 %v184
      %v248 = vunpack.c.l.b16 %v185
      %v249 = vunpack.c.h.b16 %v185
      %v250 = vunpack.c.l.b16 %v186
      %v251 = vunpack.c.h.b16 %v186
      %v252 = vunpack.c.l.b16 %v187
      %v253 = vunpack.c.h.b16 %v187
      %v254 = vunpack.c.l.b16 %v188
      %v255 = vunpack.c.h.b16 %v188
      %v256 = vunpack.c.l.b16 %v189
      %v257 = vunpack.c.h.b16 %v189
      %v258 = vunpack.c.l.b16 %v190
      %v259 = vunpack.c.h.b16 %v190
      %v260 = vunpack.c.l.b16 %v191
      %v261 = vunpack.c.h.b16 %v191
      %v262 = vunpack.c.l.b16 %v192
      %v263 = vunpack.c.h.b16 %v192
      %v264 = vunpack.c.l.b16 %v193
      %v265 = vunpack.c.h.b16 %v193
      %v266 = vpack.c.b16 %v236, %v234
      %v267 = vpack.c.b16 %v237, %v235
      %v268 = vpack.c.b16 %v240, %v238
      %v269 = vpack.c.b16 %v241, %v239
      %v270 = vpack.c.b16 %v244, %v242
      %v271 = vpack.c.b16 %v245, %v243
      %v272 = vpack.c.b16 %v248, %v246
      %v273 = vpack.c.b16 %v249, %v247
      %v274 = vpack.c.b16 %v252, %v250
      %v275 = vpack.c.b16 %v253, %v251
      %v276 = vpack.c.b16 %v256, %v254
      %v277 = vpack.c.b16 %v257, %v255
      %v278 = vpack.c.b16 %v260, %v258
      %v279 = vpack.c.b16 %v261, %v259
      %v280 = vpack.c.b16 %v264, %v262
      %v281 = vpack.c.b16 %v265, %v263
      %298 = vmatprep.subr.bf16.mxu0 %v281
      %299 = vmatpush1.bf16.msra.mxu0 %v280
      %300 = vmatprep.subr.bf16.mxu0 %v279
      %301 = vmatpush1.bf16.msra.mxu0 %v278
      %302 = vmatprep.subr.bf16.mxu0 %v277
      %303 = vmatpush1.bf16.msra.mxu0 %v276
      %304 = vmatprep.subr.bf16.mxu0 %v275
      %305 = vmatpush1.bf16.msra.mxu0 %v274
      %306 = vmatprep.subr.bf16.mxu0 %v273
      %307 = vmatpush1.bf16.msra.mxu0 %v272
      %308 = vmatprep.subr.bf16.mxu0 %v271
      %309 = vmatpush1.bf16.msra.mxu0 %v270
      %310 = vmatprep.subr.bf16.mxu0 %v269
      %311 = vmatpush1.bf16.msra.mxu0 %v268
      %312 = vmatprep.subr.bf16.mxu0 %v267
      %313 = vmatpush1.bf16.msra.mxu0 %v266
      %314 = vmatprep.subr.bf16.mxu0 0
      %315 = vmatpush2.bf16.msra.mxu0 0
      %316 = vmatprep.subr.bf16.mxu0 0
      %317 = vmatpush2.bf16.msra.mxu0 0
      %318 = vmatprep.subr.bf16.mxu0 0
      %319 = vmatpush2.bf16.msra.mxu0 0
      %320 = vmatprep.subr.bf16.mxu0 0
      %321 = vmatpush2.bf16.msra.mxu0 0
      %322 = vmatprep.subr.bf16.mxu0 0
      %323 = vmatpush2.bf16.msra.mxu0 0
      %324 = vmatprep.subr.bf16.mxu0 0
      %325 = vmatpush2.bf16.msra.mxu0 0
      %326 = vmatprep.subr.bf16.mxu0 0
      %327 = vmatpush2.bf16.msra.mxu0 0
      %328 = vmatprep.subr.bf16.mxu0 0
      %329 = vmatpush2.bf16.msra.mxu0 0
      %330 = vmatprep.mubr.bf16.mxu0 0
      %331 = vmatmul.mubr.bf16.gmra.mxu0 %v210
      %v332 = vpop.f32.mrf.mxu0
      %v333 = vadd.f32 0.0, %v332
      %v334 = vpop.f32.mrf.mxu0
      %v335 = vadd.f32 0.0, %v334
      %v336 = vpop.f32.mrf.mxu0
      %v337 = vadd.f32 0.0, %v336
      %v338 = vpop.f32.mrf.mxu0
      %v339 = vadd.f32 0.0, %v338
      %340 = vmatprep.mubr.bf16.mxu0 0
      %341 = vmatmul.mubr.bf16.gmra.mxu0 %v211
      %v342 = vpop.f32.mrf.mxu0
      %v343 = vadd.f32 0.0, %v342
      %v344 = vpop.f32.mrf.mxu0
      %v345 = vadd.f32 0.0, %v344
      %v346 = vpop.f32.mrf.mxu0
      %v347 = vadd.f32 0.0, %v346
      %v348 = vpop.f32.mrf.mxu0
      %v349 = vadd.f32 0.0, %v348
      %350 = vmatprep.mubr.bf16.mxu0 0
      %351 = vmatmul.mubr.bf16.gmra.mxu0 %v212
      %v352 = vpop.f32.mrf.mxu0
      %v353 = vadd.f32 0.0, %v352
      %v354 = vpop.f32.mrf.mxu0
      %v355 = vadd.f32 0.0, %v354
      %v356 = vpop.f32.mrf.mxu0
      %v357 = vadd.f32 0.0, %v356
      %v358 = vpop.f32.mrf.mxu0
      %v359 = vadd.f32 0.0, %v358
      %360 = vmatprep.mubr.bf16.mxu0 0
      %361 = vmatmul.mubr.bf16.gmra.mxu0 %v213
      %v362 = vpop.f32.mrf.mxu0
      %v363 = vadd.f32 0.0, %v362
      %v364 = vpop.f32.mrf.mxu0
      %v365 = vadd.f32 0.0, %v364
      %v366 = vpop.f32.mrf.mxu0
      %v367 = vadd.f32 0.0, %v366
      %v368 = vpop.f32.mrf.mxu0
      %v369 = vadd.f32 0.0, %v368
      %370 = vdwg.mxu0
      %p371 = scmp.eq.s32.totalorder %s15, 0
      // Predicated region
      $region29: #{basic_block_forward.3} parent=27 // pred_check
        %p372 = pneg %p371
      $region30: #{basic_block_forward.3} parent=27 // pred_check_branch
        %374 = sbr.rel (%p372) target = $region32
      $region31: #{basic_block_forward.3} parent=27 // pred_region
        %375 = vst [vmem:[%s3] sm:$0xff] 0.0
        %376 = vst [vmem:[%s3 + $0x8] sm:$0xff] 0.0
      $region32: #{basic_block_forward.3} parent=27 // pred_fallthru
        _
      %v377 = vadd.f32 %v333, %v337
      %v378 = vadd.f32 %v377, %v343
      %v379 = vadd.f32 %v378, %v347
      %v380 = vadd.f32 %v379, %v353
      %v381 = vadd.f32 %v380, %v357
      %v382 = vadd.f32 %v381, %v363
      %v383 = vadd.f32 %v382, %v367
      %v384 = vrot.slane %v383, 4
      %v385 = vadd.f32 %v383, %v384
      %v386 = vrot.slane %v385, 2
      %v387 = vadd.f32 %v385, %v386
      %v388 = vrot.slane %v387, 1
      %v389 = vadd.f32 %v387, %v388
      %v390 = vadd.f32 %v335, %v339
      %v391 = vadd.f32 %v390, %v345
      %v392 = vadd.f32 %v391, %v349
      %v393 = vadd.f32 %v392, %v355
      %v394 = vadd.f32 %v393, %v359
      %v395 = vadd.f32 %v394, %v365
      %v396 = vadd.f32 %v395, %v369
      %v397 = vrot.slane %v396, 4
      %v398 = vadd.f32 %v396, %v397
      %v399 = vrot.slane %v398, 2
      %v400 = vadd.f32 %v398, %v399
      %v401 = vrot.slane %v400, 1
      %v402 = vadd.f32 %v400, %v401
      %v403 = vmul.f32 %v333, %v333
      %v404 = vmul.f32 %v335, %v335
      %v405 = vmul.f32 %v337, %v337
      %v406 = vmul.f32 %v339, %v339
      %v407 = vmul.f32 %v343, %v343
      %v408 = vmul.f32 %v345, %v345
      %v409 = vmul.f32 %v347, %v347
      %v410 = vmul.f32 %v349, %v349
      %v411 = vmul.f32 %v353, %v353
      %v412 = vmul.f32 %v355, %v355
      %v413 = vmul.f32 %v357, %v357
      %v414 = vmul.f32 %v359, %v359
      %v415 = vmul.f32 %v363, %v363
      %v416 = vmul.f32 %v365, %v365
      %v417 = vmul.f32 %v367, %v367
      %v418 = vmul.f32 %v369, %v369
      %v419 = vadd.f32 %v403, %v405
      %v420 = vadd.f32 %v419, %v407
      %v421 = vadd.f32 %v420, %v409
      %v422 = vadd.f32 %v421, %v411
      %v423 = vadd.f32 %v422, %v413
      %v424 = vadd.f32 %v423, %v415
      %v425 = vadd.f32 %v424, %v417
      %v426 = vrot.slane %v425, 4
      %v427 = vadd.f32 %v425, %v426
      %v428 = vrot.slane %v427, 2
      %v429 = vadd.f32 %v427, %v428
      %v430 = vrot.slane %v429, 1
      %v431 = vadd.f32 %v429, %v430
      %v432 = vadd.f32 %v404, %v406
      %v433 = vadd.f32 %v432, %v408
      %v434 = vadd.f32 %v433, %v410
      %v435 = vadd.f32 %v434, %v412
      %v436 = vadd.f32 %v435, %v414
      %v437 = vadd.f32 %v436, %v416
      %v438 = vadd.f32 %v437, %v418
      %v439 = vrot.slane %v438, 4
      %v440 = vadd.f32 %v438, %v439
      %v441 = vrot.slane %v440, 2
      %v442 = vadd.f32 %v440, %v441
      %v443 = vrot.slane %v442, 1
      %v444 = vadd.f32 %v442, %v443
      %v445 = vld [vmem:[%s3] sm:$0xff]
      %v446 = vld [vmem:[%s3 + $0x8] sm:$0xff]
      %vm447 = vcmask 1040384
      %v448 = vsel %vm447, %v389, %v431
      %v449 = vsel %vm447, %v402, %v444
      %vm450 = vcmask 1041408
      %v451 = vsel %vm450, %v448, 0.0
      %v452 = vsel %vm450, %v449, 0.0
      %v453 = vadd.f32 %v445, %v451
      %v454 = vadd.f32 %v446, %v452
      %455 = vst [vmem:[%s3] sm:$0xff] %v453
      %456 = vst [vmem:[%s3 + $0x8] sm:$0xff] %v454
      %v457 = vpack.c.bf16 %v337, %v333
      %v458 = vpack.c.bf16 %v339, %v335
      %v459 = vpack.c.bf16 %v347, %v343
      %v460 = vpack.c.bf16 %v349, %v345
      %v461 = vpack.c.bf16 %v357, %v353
      %v462 = vpack.c.bf16 %v359, %v355
      %v463 = vpack.c.bf16 %v367, %v363
      %v464 = vpack.c.bf16 %v369, %v365
      %v473 = vunpack.c.l.b16 %v457
      %v474 = vunpack.c.l.b16 %v458
      %v475 = vunpack.c.h.b16 %v457
      %v476 = vunpack.c.h.b16 %v458
      %v477 = vunpack.c.l.b16 %v459
      %v478 = vunpack.c.l.b16 %v460
      %v479 = vunpack.c.h.b16 %v459
      %v480 = vunpack.c.h.b16 %v460
      %v481 = vunpack.c.l.b16 %v461
      %v482 = vunpack.c.l.b16 %v462
      %v483 = vunpack.c.h.b16 %v461
      %v484 = vunpack.c.h.b16 %v462
      %v485 = vunpack.c.l.b16 %v463
      %v486 = vunpack.c.l.b16 %v464
      %v487 = vunpack.c.h.b16 %v463
      %v488 = vunpack.c.h.b16 %v464
      %v489 = vpack.c.b16 %v474, %v473
      %v490 = vpack.c.b16 %v476, %v475
      %v491 = vpack.c.b16 %v478, %v477
      %v492 = vpack.c.b16 %v480, %v479
      %v493 = vpack.c.b16 %v482, %v481
      %v494 = vpack.c.b16 %v484, %v483
      %v495 = vpack.c.b16 %v486, %v485
      %v496 = vpack.c.b16 %v488, %v487
      %505 = vst [vmem:[%s168] sm:$0xff] %v489
      %506 = vst [vmem:[%s168 + $0x8] sm:$0xff] %v490
      %507 = vst [vmem:[%s168 + $0x10] sm:$0xff] %v491
      %508 = vst [vmem:[%s168 + $0x18] sm:$0xff] %v492
      %509 = vst [vmem:[%s168 + $0x20] sm:$0xff] %v493
      %510 = vst [vmem:[%s168 + $0x28] sm:$0xff] %v494
      %511 = vst [vmem:[%s168 + $0x30] sm:$0xff] %v495
      %512 = vst [vmem:[%s168 + $0x38] sm:$0xff] %v496
      %p513 = scmp.lt.s32.totalorder %s15, 1
      %s514 = scalar_select %p513, %s15, 1
      %s515 = smul.addr %s514, 16
      %s516 = smul.addr %s515, 4
      %s517 = scalar_lea.vmem %s2, %s516
      // Predicated region
      $region33: #{basic_block_forward.3} parent=27 // pred_check
        %p518 = pneg %p80
      $region34: #{basic_block_forward.3} parent=27 // pred_check_branch
        %520 = sbr.rel (%p518) target = $region36
      $region35: #{basic_block_forward.3} parent=27 // pred_region
        _
      $region36: #{basic_block_forward.3} parent=27 // pred_fallthru
        _
      // Predicated region
      $region37: #{basic_block_forward.3} parent=27 // pred_check
        %p521 = pneg %p101
      $region38: #{basic_block_forward.3} parent=27 // pred_check_branch
        %523 = sbr.rel (%p521) target = $region40
      $region39: #{basic_block_forward.3} parent=27 // pred_region
        _
      $region40: #{basic_block_forward.3} parent=27 // pred_fallthru
        _
      // Predicated region
      $region41: #{basic_block_forward.3} parent=27 // pred_check
        %p524 = pneg %p101
      $region42: #{basic_block_forward.3} parent=27 // pred_check_branch
        %526 = sbr.rel (%p524) target = $region44
      $region43: #{basic_block_forward.3} parent=27 // pred_region
        _
      $region44: #{basic_block_forward.3} parent=27 // pred_fallthru
        _
    $region28: #{basic_block_forward.3} parent=5 // pred_fallthru
      _
    %p527 = scmp.le.s32.totalorder 2, %s10
    // Predicated region
    $region45: #{basic_block_forward.3} parent=5 // pred_check
      %p528 = pneg %p527
    $region46: #{basic_block_forward.3} parent=5 // pred_check_branch
      %530 = sbr.rel (%p528) target = $region48
    $region47: #{basic_block_forward.3} parent=5 // pred_region
      %s531 = ssub.s32 %s10, 2
      // Predicated region
      $region49: #{basic_block_forward.3} parent=47 // pred_check
        %p532 = pneg %p86
      $region50: #{basic_block_forward.3} parent=47 // pred_check_branch
        %534 = sbr.rel (%p532) target = $region52
      $region51: #{basic_block_forward.3} parent=47 // pred_region
        %p535 = scmp.lt.s32.totalorder %s16, 1
        %s536 = scalar_select %p535, %s16, 1
        %s537 = smul.addr %s536, 16
        %s538 = smul.addr %s537, 4
        %s539 = scalar_lea.vmem %s2, %s538
      $region52: #{basic_block_forward.3} parent=47 // pred_fallthru
        _
    $region48: #{basic_block_forward.3} parent=5 // pred_fallthru
      _
  $region6: #{basic_block_forward.3} parent=0 // loop_footer
    %s14 = sadd.s32 1, %s10
  $region7: #{basic_block_forward.3} parent=0 // loop_footer_branch
    %9 = sbr.rel target = $region3
  $region8: #{basic_block_forward.3} parent=0 // loop_exit
    _

// kernel: basic_block_forward.5
$region0: #{basic_block_forward.5}
  #allocation0 [shape = 'u32[]', space=smem, size = 0x4, offset = 0x4, fixed_abs, tag = 'smem constant byte address 0x4 - core index']
  #allocation1 [shape = 'u32[144,128]{1,0:T(1,128)}', space=vmem, size = 0x12000, scoped, tag = 'internal scratch']
  %s0 = inlined_call_operand.vmem [shape: f32[8,256], index: 0, kind: input, shape index: {}]
  %s1 = inlined_call_operand.vmem [shape: f32[8,128], index: 1, kind: input, shape index: {}]
  %s2 = inlined_call_operand.vmem [shape: f32[8,128], index: 2, kind: input, shape index: {}]
  %s3 = inlined_call_operand.vmem [shape: bf16[2,64,128], index: 3, kind: input, shape index: {}]
  %s4 = inlined_call_operand.vmem [shape: bf16[2,64,256], index: 4, kind: input, shape index: {}]
  %s5 = inlined_call_operand.vmem [shape: bf16[2,64,128], index: 5, kind: output, shape index: {}]
  %s6 = sld [smem:[#allocation0]]
  $region94: #{basic_block_forward.5} parent=0
    _
  %s8 = ssub.s32 1, %s6
  %s9 = scalar_select 0, %s8, %s6
  $region1: #{basic_block_forward.5} parent=0
    #allocation2 [shape = 'u8[32768]{0}', space=vmem, size = 0x8000, scoped, tag = 'input window, operand 4']
    loop: start=0, step=1, limit=4
    $region2: #{basic_block_forward.5} parent=1 // loop_pre_header
      _
    $region3: #{basic_block_forward.5} parent=1 // loop_header
      %s11 = sphi 0, %s15
      %p12 = scmp.ge.s32.totalorder %s11, 4
      %s19 = sphi 0, %s19
      %s21 = sphi 0, %s19
      %s22 = sphi 0, %s21
      %s36 = sphi 0, %s22
      %s40 = sphi 0, %s40
      %s42 = sphi 0, %s40
      %s43 = sphi 0, %s42
      %s57 = sphi 0, %s43
      %s61 = sphi 0, %s61
      %s63 = sphi 0, %s61
      %s64 = sphi 0, %s63
      %s78 = sphi 0, %s64
      %s84 = sphi 0, %s86
      %s87 = sphi 0, %s84
      %s88 = sphi 0, %s87
      %s104 = sphi 0, %s88
      %s110 = sphi 0, %s112
      %s113 = sphi 0, %s110
      %s114 = sphi 0, %s113
      %s130 = sphi 0, %s114
      %s136 = sphi 0, %s138
      %s139 = sphi 0, %s136
      %s140 = sphi 0, %s139
      %s156 = sphi 0, %s140
    $region4: #{basic_block_forward.5} parent=1 // loop_header_branch
      %14 = sbr.rel (%p12) target = $region8
    $region5: #{basic_block_forward.5} parent=1 // loop_body
      %s16 = ssub.s32 %s11, 1
      %s17 = ssub.s32 %s11, 2
      %s18 = sadd.s32 %s11, 1
      %s20 = sadd.s32 %s19, 1
      %p23 = scmp.eq.s32.totalorder %s11, 1
      %p24 = scmp.ne.s32.totalorder %s19, %s21
      %p25 = scmp.eq.s32.totalorder %s11, 0
      %p26 = por %p24, %p25
      %p27 = scmp.ne.s32.totalorder %s19, %s21
      %p28 = scmp.eq.s32.totalorder %s16, 1
      %p29 = por %p27, %p28
      %p30 = scmp.ne.s32.totalorder %s21, %s22
      %p31 = scmp.eq.s32.totalorder %s16, 0
      %p32 = por %p30, %p31
      %p33 = scmp.ne.s32.totalorder %s21, %s22
      %p34 = scmp.eq.s32.totalorder %s17, 1
      %p35 = por %p33, %p34
      %p37 = scmp.ne.s32.totalorder %s22, %s36
      %p38 = scmp.eq.s32.totalorder %s17, 0
      %p39 = por %p37, %p38
      %s41 = sadd.s32 %s40, 1
      %p44 = scmp.eq.s32.totalorder %s11, 1
      %p45 = scmp.ne.s32.totalorder %s40, %s42
      %p46 = scmp.eq.s32.totalorder %s11, 0
      %p47 = por %p45, %p46
      %p48 = scmp.ne.s32.totalorder %s40, %s42
      %p49 = scmp.eq.s32.totalorder %s16, 1
      %p50 = por %p48, %p49
      %p51 = scmp.ne.s32.totalorder %s42, %s43
      %p52 = scmp.eq.s32.totalorder %s16, 0
      %p53 = por %p51, %p52
      %p54 = scmp.ne.s32.totalorder %s42, %s43
      %p55 = scmp.eq.s32.totalorder %s17, 1
      %p56 = por %p54, %p55
      %p58 = scmp.ne.s32.totalorder %s43, %s57
      %p59 = scmp.eq.s32.totalorder %s17, 0
      %p60 = por %p58, %p59
      %s62 = sadd.s32 %s61, 1
      %p65 = scmp.eq.s32.totalorder %s11, 1
      %p66 = scmp.ne.s32.totalorder %s61, %s63
      %p67 = scmp.eq.s32.totalorder %s11, 0
      %p68 = por %p66, %p67
      %p69 = scmp.ne.s32.totalorder %s61, %s63
      %p70 = scmp.eq.s32.totalorder %s16, 1
      %p71 = por %p69, %p70
      %p72 = scmp.ne.s32.totalorder %s63, %s64
      %p73 = scmp.eq.s32.totalorder %s16, 0
      %p74 = por %p72, %p73
      %p75 = scmp.ne.s32.totalorder %s63, %s64
      %p76 = scmp.eq.s32.totalorder %s17, 1
      %p77 = por %p75, %p76
      %p79 = scmp.ne.s32.totalorder %s64, %s78
      %p80 = scmp.eq.s32.totalorder %s17, 0
      %p81 = por %p79, %p80
      %s82 = ssub.s32 %s11, %s18
      %p83 = scmp.eq.s32.totalorder %s82, 0
      %s85 = sadd.s32 %s84, 1
      %s86 = scalar_select %p83, %s84, %s85
      %p89 = pneg %p83
      %p90 = scmp.eq.s32.totalorder %s11, 1
      %p91 = por %p89, %p90
      %p92 = scmp.ne.s32.totalorder %s84, %s87
      %p93 = scmp.eq.s32.totalorder %s11, 0
      %p94 = por %p92, %p93
      %p95 = scmp.ne.s32.totalorder %s84, %s87
      %p96 = scmp.eq.s32.totalorder %s16, 1
      %p97 = por %p95, %p96
      %p98 = scmp.ne.s32.totalorder %s87, %s88
      %p99 = scmp.eq.s32.totalorder %s16, 0
      %p100 = por %p98, %p99
      %p101 = scmp.ne.s32.totalorder %s87, %s88
      %p102 = scmp.eq.s32.totalorder %s17, 1
      %p103 = por %p101, %p102
      %p105 = scmp.ne.s32.totalorder %s88, %s104
      %p106 = scmp.eq.s32.totalorder %s17, 0
      %p107 = por %p105, %p106
      %s108 = ssub.s32 %s11, %s18
      %p109 = scmp.eq.s32.totalorder %s108, 0
      %s111 = sadd.s32 %s110, 1
      %s112 = scalar_select %p109, %s110, %s111
      %p115 = pneg %p109
      %p116 = scmp.eq.s32.totalorder %s11, 1
      %p117 = por %p115, %p116
      %p118 = scmp.ne.s32.totalorder %s110, %s113
      %p119 = scmp.eq.s32.totalorder %s11, 0
      %p120 = por %p118, %p119
      %p121 = scmp.ne.s32.totalorder %s110, %s113
      %p122 = scmp.eq.s32.totalorder %s16, 1
      %p123 = por %p121, %p122
      %p124 = scmp.ne.s32.totalorder %s113, %s114
      %p125 = scmp.eq.s32.totalorder %s16, 0
      %p126 = por %p124, %p125
      %p127 = scmp.ne.s32.totalorder %s113, %s114
      %p128 = scmp.eq.s32.totalorder %s17, 1
      %p129 = por %p127, %p128
      %p131 = scmp.ne.s32.totalorder %s114, %s130
      %p132 = scmp.eq.s32.totalorder %s17, 0
      %p133 = por %p131, %p132
      %s134 = ssub.s32 %s11, %s18
      %p135 = scmp.eq.s32.totalorder %s134, 0
      %s137 = sadd.s32 %s136, 1
      %s138 = scalar_select %p135, %s136, %s137
      %p141 = pneg %p135
      %p142 = scmp.eq.s32.totalorder %s11, 1
      %p143 = por %p141, %p142
      %p144 = scmp.ne.s32.totalorder %s136, %s139
      %p145 = scmp.eq.s32.totalorder %s11, 0
      %p146 = por %p144, %p145
      %p147 = scmp.ne.s32.totalorder %s136, %s139
      %p148 = scmp.eq.s32.totalorder %s16, 1
      %p149 = por %p147, %p148
      %p150 = scmp.ne.s32.totalorder %s139, %s140
      %p151 = scmp.eq.s32.totalorder %s16, 0
      %p152 = por %p150, %p151
      %p153 = scmp.ne.s32.totalorder %s139, %s140
      %p154 = scmp.eq.s32.totalorder %s17, 1
      %p155 = por %p153, %p154
      %p157 = scmp.ne.s32.totalorder %s140, %s156
      %p158 = scmp.eq.s32.totalorder %s17, 0
      %p159 = por %p157, %p158
      %p160 = scmp.le.s32.totalorder 1, %s11
      %p161 = scmp.lt.s32.totalorder %s11, 3
      %p162 = pnand %p160, %p161
      %p163 = pneg %p162
      // Predicated region
      $region9: #{basic_block_forward.5} parent=5 // pred_check
        _
      $region10: #{basic_block_forward.5} parent=5 // pred_check_branch
        %165 = sbr.rel (%p162) target = $region12
      $region11: #{basic_block_forward.5} parent=5 // pred_region
        %s166 = ssub.s32 %s11, 1
        // Predicated region
        $region13: #{basic_block_forward.5} parent=11 // pred_check
          %p167 = pneg %p32
        $region14: #{basic_block_forward.5} parent=11 // pred_check_branch
          %169 = sbr.rel (%p167) target = $region16
        $region15: #{basic_block_forward.5} parent=11 // pred_region
          %s170 = scalar_lea.vmem %s0, 8
        $region16: #{basic_block_forward.5} parent=11 // pred_fallthru
          _
        // Predicated region
        $region17: #{basic_block_forward.5} parent=11 // pred_check
          %p171 = pneg %p53
        $region18: #{basic_block_forward.5} parent=11 // pred_check_branch
          %173 = sbr.rel (%p171) target = $region20
        $region19: #{basic_block_forward.5} parent=11 // pred_region
          _
        $region20: #{basic_block_forward.5} parent=11 // pred_fallthru
          _
        // Predicated region
        $region21: #{basic_block_forward.5} parent=11 // pred_check
          %p174 = pneg %p74
        $region22: #{basic_block_forward.5} parent=11 // pred_check_branch
          %176 = sbr.rel (%p174) target = $region24
        $region23: #{basic_block_forward.5} parent=11 // pred_region
          _
        $region24: #{basic_block_forward.5} parent=11 // pred_fallthru
          _
      $region12: #{basic_block_forward.5} parent=5 // pred_fallthru
        _
      %p177 = scmp.lt.s32.totalorder %s11, 2
      // Predicated region
      $region25: #{basic_block_forward.5} parent=5 // pred_check
        %p178 = pneg %p177
      $region26: #{basic_block_forward.5} parent=5 // pred_check_branch
        %180 = sbr.rel (%p178) target = $region28
      $region27: #{basic_block_forward.5} parent=5 // pred_region
        // Predicated region
        $region29: #{basic_block_forward.5} parent=27 // pred_check
          %p181 = pneg %p94
        $region30: #{basic_block_forward.5} parent=27 // pred_check_branch
          %183 = sbr.rel (%p181) target = $region32
        $region31: #{basic_block_forward.5} parent=27 // pred_region
          %p184 = scmp.lt.s32.totalorder %s11, 1
          %s185 = scalar_select %p184, %s11, 1
          %s186 = smul.addr %s185, 8
          %s187 = smul.addr %s186, 4
          %s188 = scalar_lea.vmem %s3, %s187
        $region32: #{basic_block_forward.5} parent=27 // pred_fallthru
          _
        // Predicated region
        $region33: #{basic_block_forward.5} parent=27 // pred_check
          %p189 = pneg %p120
        $region34: #{basic_block_forward.5} parent=27 // pred_check_branch
          %191 = sbr.rel (%p189) target = $region36
        $region35: #{basic_block_forward.5} parent=27 // pred_region
          %s192 = sand.u32 %s110, 1
          %s193 = sand.u32 %s110, 1
          %s194 = smul.addr %s193, 32
          %s195 = scalar_lea.vmem [#allocation2], %s194
          %s196 = smul.addr %s11, 16
          %s197 = sadd.s32 1, %s196
          %s198 = smul.addr %s197, 4
          %s199 = scalar_lea.vmem %s4, %s198
          // Predicated region
          $region37: #{basic_block_forward.5} parent=35 // pred_check
            _
          $region38: #{basic_block_forward.5} parent=35 // pred_check_branch
            %201 = sbr.rel (0) target = $region40
          $region39: #{basic_block_forward.5} parent=35 // pred_region
            // Predicated region
            $region41: #{basic_block_forward.5} parent=39 // pred_check
              _
            $region42: #{basic_block_forward.5} parent=39 // pred_check_branch
              %203 = sbr.rel target = $region44
            $region43: #{basic_block_forward.5} parent=39 // pred_region
              // Predicated region
              $region56: #{basic_block_forward.5} parent=43 // pred_check
                _
              $region57: #{basic_block_forward.5} parent=43 // pred_check_branch
                %233 = sbr.rel (0) target = $region59
              $region58: #{basic_block_forward.5} parent=43 // pred_region
                loop: start=0, step=1, limit=1
                $region60: #{basic_block_forward.5} parent=58 // loop_pre_header
                  _
                $region61: #{basic_block_forward.5} parent=58 // loop_header
                  %s235 = sphi 0, %s239
                  %p236 = scmp.ge.s32.totalorder %s235, 1
                  %s240 = sphi %s199, %s199
                  %s241 = sphi %s195, %s195
                $region62: #{basic_block_forward.5} parent=58 // loop_header_branch
                  %238 = sbr.rel (%p236) target = $region66
                $region63: #{basic_block_forward.5} parent=58 // loop_body
                  _
                $region64: #{basic_block_forward.5} parent=58 // loop_footer
                  %s239 = sadd.s32 1, %s235
                $region65: #{basic_block_forward.5} parent=58 // loop_footer_branch
                  %234 = sbr.rel target = $region61
                $region66: #{basic_block_forward.5} parent=58 // loop_exit
                  _
                %s243 = ssub.s32 16, 1
                loop: start=0, step=1, limit=1
                $region67: #{basic_block_forward.5} parent=58 // loop_pre_header
                  _
                $region68: #{basic_block_forward.5} parent=58 // loop_header
                  %s245 = sphi 0, %s249
                  %p246 = scmp.ge.s32.totalorder %s245, 1
                  %s250 = sphi %s199, %s199
                  %s251 = sphi %s195, %s195
                $region69: #{basic_block_forward.5} parent=58 // loop_header_branch
                  %248 = sbr.rel (%p246) target = $region73
                $region70: #{basic_block_forward.5} parent=58 // loop_body
                  %v252 = vld [vmem:[%s250] sm:%s243]
                  %253 = vst [vmem:[%s251] sm:%s243] %v252
                  %v254 = vld [vmem:[%s250 + $0x8] sm:%s243]
                  %255 = vst [vmem:[%s251 + $0x4] sm:%s243] %v254
                  %v256 = vld [vmem:[%s250 + $0x10] sm:%s243]
                  %257 = vst [vmem:[%s251 + $0x8] sm:%s243] %v256
                  %v258 = vld [vmem:[%s250 + $0x18] sm:%s243]
                  %259 = vst [vmem:[%s251 + $0xc] sm:%s243] %v258
                  %v260 = vld [vmem:[%s250 + $0x20] sm:%s243]
                  %261 = vst [vmem:[%s251 + $0x10] sm:%s243] %v260
                  %v262 = vld [vmem:[%s250 + $0x28] sm:%s243]
                  %263 = vst [vmem:[%s251 + $0x14] sm:%s243] %v262
                  %v264 = vld [vmem:[%s250 + $0x30] sm:%s243]
                  %265 = vst [vmem:[%s251 + $0x18] sm:%s243] %v264
                  %v266 = vld [vmem:[%s250 + $0x38] sm:%s243]
                  %267 = vst [vmem:[%s251 + $0x1c] sm:%s243] %v266
                $region71: #{basic_block_forward.5} parent=58 // loop_footer
                  %s249 = sadd.s32 1, %s245
                $region72: #{basic_block_forward.5} parent=58 // loop_footer_branch
                  %244 = sbr.rel target = $region68
                $region73: #{basic_block_forward.5} parent=58 // loop_exit
                  _
              $region59: #{basic_block_forward.5} parent=43 // pred_fallthru
                _
            $region44: #{basic_block_forward.5} parent=39 // pred_fallthru
              _
            // Predicated region
            $region45: #{basic_block_forward.5} parent=39 // pred_check
              _
            $region46: #{basic_block_forward.5} parent=39 // pred_check_branch
              %205 = sbr.rel (0) target = $region48
            $region47: #{basic_block_forward.5} parent=39 // pred_region
              %s207 = ssub.s32 16, 1
              loop: start=0, step=1, limit=1
              $region49: #{basic_block_forward.5} parent=47 // loop_pre_header
                _
              $region50: #{basic_block_forward.5} parent=47 // loop_header
                %s209 = sphi 0, %s213
                %p210 = scmp.ge.s32.totalorder %s209, 1
                %s214 = sphi %s199, %s199
                %s215 = sphi %s195, %s195
              $region51: #{basic_block_forward.5} parent=47 // loop_header_branch
                %212 = sbr.rel (%p210) target = $region55
              $region52: #{basic_block_forward.5} parent=47 // loop_body
                %v216 = vld [vmem:[%s214] sm:%s207]
                %217 = vst [vmem:[%s215] sm:%s207] %v216
                %v218 = vld [vmem:[%s214 + $0x8] sm:%s207]
                %219 = vst [vmem:[%s215 + $0x4] sm:%s207] %v218
                %v220 = vld [vmem:[%s214 + $0x10] sm:%s207]
                %221 = vst [vmem:[%s215 + $0x8] sm:%s207] %v220
                %v222 = vld [vmem:[%s214 + $0x18] sm:%s207]
                %223 = vst [vmem:[%s215 + $0xc] sm:%s207] %v222
                %v224 = vld [vmem:[%s214 + $0x20] sm:%s207]
                %225 = vst [vmem:[%s215 + $0x10] sm:%s207] %v224
                %v226 = vld [vmem:[%s214 + $0x28] sm:%s207]
                %227 = vst [vmem:[%s215 + $0x14] sm:%s207] %v226
                %v228 = vld [vmem:[%s214 + $0x30] sm:%s207]
                %229 = vst [vmem:[%s215 + $0x18] sm:%s207] %v228
                %v230 = vld [vmem:[%s214 + $0x38] sm:%s207]
                %231 = vst [vmem:[%s215 + $0x1c] sm:%s207] %v230
              $region53: #{basic_block_forward.5} parent=47 // loop_footer
                %s213 = sadd.s32 1, %s209
              $region54: #{basic_block_forward.5} parent=47 // loop_footer_branch
                %208 = sbr.rel target = $region50
              $region55: #{basic_block_forward.5} parent=47 // loop_exit
                _
            $region48: #{basic_block_forward.5} parent=39 // pred_fallthru
              _
          $region40: #{basic_block_forward.5} parent=35 // pred_fallthru
            _
          %268 = vnop
        $region36: #{basic_block_forward.5} parent=27 // pred_fallthru
          _
      $region28: #{basic_block_forward.5} parent=5 // pred_fallthru
        _
      %p269 = scmp.le.s32.totalorder 1, %s11
      %p270 = scmp.lt.s32.totalorder %s11, 3
      %p271 = pnand %p269, %p270
      %p272 = pneg %p271
      // Predicated region
      $region74: #{basic_block_forward.5} parent=5 // pred_check
        _
      $region75: #{basic_block_forward.5} parent=5 // pred_check_branch
        %274 = sbr.rel (%p271) target = $region77
      $region76: #{basic_block_forward.5} parent=5 // pred_region
        %s275 = ssub.s32 %s11, 1
        %s276 = sand.u32 %s113, 1
        %s277 = sand.u32 %s113, 1
        %s278 = smul.addr %s277, 32
        %s279 = scalar_lea.vmem [#allocation2], %s278
        // Predicated region
        $region78: #{basic_block_forward.5} parent=76 // pred_check
          %p280 = pneg %p126
        $region79: #{basic_block_forward.5} parent=76 // pred_check_branch
          %282 = sbr.rel (%p280) target = $region81
        $region80: #{basic_block_forward.5} parent=76 // pred_region
          _
        $region81: #{basic_block_forward.5} parent=76 // pred_fallthru
          _
        %s283 = scalar_lea.vmem %s0, 8
        %p284 = pneg %p32
        %p285 = pneg %p29
        %p286 = pneg %p53
        %p287 = pneg %p50
        %p288 = pneg %p74
        %p289 = pneg %p71
        %p290 = scmp.lt.s32.totalorder %s16, 1
        %s291 = scalar_select %p290, %s16, 1
        %s292 = smul.addr %s291, 8
        %s293 = smul.addr %s292, 4
        %s294 = scalar_lea.vmem %s3, %s293
        %p295 = pneg %p100
        %p296 = pneg %p97
        %s297 = sand.u32 %s113, 1
        %s298 = sand.u32 %s113, 1
        %s299 = smul.addr %s298, 32
        %s300 = scalar_lea.vmem [#allocation2], %s299
        %p301 = pneg %p126
        %p302 = pneg %p123
        %p303 = pneg %p152
        %p304 = pneg %p149
        %p305 = scmp.lt.s32.totalorder %s16, 1
        %s306 = scalar_select %p305, %s16, 1
        %s307 = smul.addr %s306, 8
        %s308 = smul.addr %s307, 4
        %s309 = scalar_lea.vmem %s5, %s308
        %s310 = scalar_lea.vmem %s0, 8
        %p311 = scmp.lt.s32.totalorder %s16, 1
        %s312 = scalar_select %p311, %s16, 1
        %s313 = smul.addr %s312, 8
        %s314 = smul.addr %s313, 4
        %s315 = scalar_lea.vmem %s3, %s314
        %p316 = scmp.lt.s32.totalorder %s16, 1
        %s317 = scalar_select %p316, %s16, 1
        %s318 = smul.addr %s317, 8
        %s319 = smul.addr %s318, 4
        %s320 = scalar_lea.vmem %s5, %s319
        %v321 = vld [vmem:[%s1] sm:$0x1]
        %v322 = vmul.f32 %v321, 0.0078125
        %v323 = vld [vmem:[%s1 + $0x1] sm:$0x1]
        %v324 = vmul.f32 %v323, 0.0078125
        %v325 = vmul.f32 %v322, %v322
        %v326 = vsub.f32 %v324, %v325
        %v327 = vmax.f32 %v326, 0.0
        %v328 = vld [vmem:[%s2] sm:$0x1]
        %v329 = vadd.f32 %v327, 1e-05
        %v330 = vrsqrt.pop %v329
        %v331 = vmul.f32 %v328, %v330
        %v332 = vld [vmem:[%s2 + $0x1] sm:$0x1]
        %v333 = vmul.f32 %v322, %v331
        %v334 = vsub.f32 %v332, %v333
        %v335 = vld [vmem:[%s315] sm:$0xf]
        %v336 = vld [vmem:[%s315 + $0x4] sm:$0xf]
        %v337 = vld [vmem:[%s315 + $0x8] sm:$0xf]
        %v338 = vld [vmem:[%s315 + $0xc] sm:$0xf]
        %v339 = vld [vmem:[%s315 + $0x10] sm:$0xf]
        %v340 = vld [vmem:[%s315 + $0x14] sm:$0xf]
        %v341 = vld [vmem:[%s315 + $0x18] sm:$0xf]
        %v342 = vld [vmem:[%s315 + $0x1c] sm:$0xf]
        %v343 = vunpack.c.l.bf16 %v335
        %v344 = vunpack.c.l.bf16 %v336
        %v345 = vunpack.c.l.bf16 %v337
        %v346 = vunpack.c.l.bf16 %v338
        %v347 = vunpack.c.l.bf16 %v339
        %v348 = vunpack.c.l.bf16 %v340
        %v349 = vunpack.c.l.bf16 %v341
        %v350 = vunpack.c.l.bf16 %v342
        %v351 = vlaneseq
        %v352 = vshrl.u32 %v351, 7
        %v353 = vsub.s32 0, %v352
        %v354 = vrot.slane %v331, %v353
        %v355 = vmul.f32 %v343, %v354
        %v356 = vmul.f32 %v344, %v354
        %v357 = vmul.f32 %v345, %v354
        %v358 = vmul.f32 %v346, %v354
        %v359 = vmul.f32 %v347, %v354
        %v360 = vmul.f32 %v348, %v354
        %v361 = vmul.f32 %v349, %v354
        %v362 = vmul.f32 %v350, %v354
        %v363 = vlaneseq
        %v364 = vshrl.u32 %v363, 7
        %v365 = vsub.s32 0, %v364
        %v366 = vrot.slane %v334, %v365
        %v367 = vadd.f32 %v355, %v366
        %v368 = vadd.f32 %v356, %v366
        %v369 = vadd.f32 %v357, %v366
        %v370 = vadd.f32 %v358, %v366
        %v371 = vadd.f32 %v359, %v366
        %v372 = vadd.f32 %v360, %v366
        %v373 = vadd.f32 %v361, %v366
        %v374 = vadd.f32 %v362, %v366
        %v375 = vld [vmem:[%s279] sm:$0xf]
        %v376 = vld [vmem:[%s279 + $0x4] sm:$0xf]
        %v377 = vld [vmem:[%s279 + $0x8] sm:$0xf]
        %v378 = vld [vmem:[%s279 + $0xc] sm:$0xf]
        %v379 = vld [vmem:[%s279 + $0x10] sm:$0xf]
        %v380 = vld [vmem:[%s279 + $0x14] sm:$0xf]
        %v381 = vld [vmem:[%s279 + $0x18] sm:$0xf]
        %v382 = vld [vmem:[%s279 + $0x1c] sm:$0xf]
        %v383 = vunpack.c.l.bf16 %v375
        %v384 = vunpack.c.l.bf16 %v376
        %v385 = vunpack.c.l.bf16 %v377
        %v386 = vunpack.c.l.bf16 %v378
        %v387 = vunpack.c.l.bf16 %v379
        %v388 = vunpack.c.l.bf16 %v380
        %v389 = vunpack.c.l.bf16 %v381
        %v390 = vunpack.c.l.bf16 %v382
        %v391 = vld [vmem:[%s310] sm:$0x1]
        %v392 = vmul.f32 %v391, 0.0078125
        %v393 = vld [vmem:[%s310 + $0x1] sm:$0x1]
        %v394 = vmul.f32 %v393, 0.0078125
        %v395 = vmul.f32 %v392, %v392
        %v396 = vsub.f32 %v394, %v395
        %v397 = vmax.f32 %v396, 0.0
        %v398 = vld [vmem:[%s2 + $0x2] sm:$0x1]
        %v399 = vadd.f32 %v397, 1e-05
        %v400 = vrsqrt.pop %v399
        %v401 = vmul.f32 %v398, %v400
        %v402 = vld [vmem:[%s2 + $0x3] sm:$0x1]
        %v403 = vmul.f32 %v392, %v401
        %v404 = vsub.f32 %v402, %v403
        %v405 = vlaneseq
        %v406 = vshrl.u32 %v405, 7
        %v407 = vsub.s32 0, %v406
        %v408 = vrot.slane %v401, %v407
        %v409 = vmul.f32 %v383, %v408
        %v410 = vmul.f32 %v384, %v408
        %v411 = vmul.f32 %v385, %v408
        %v412 = vmul.f32 %v386, %v408
        %v413 = vmul.f32 %v387, %v408
        %v414 = vmul.f32 %v388, %v408
        %v415 = vmul.f32 %v389, %v408
        %v416 = vmul.f32 %v390, %v408
        %v417 = vlaneseq
        %v418 = vshrl.u32 %v417, 7
        %v419 = vsub.s32 0, %v418
        %v420 = vrot.slane %v404, %v419
        %v421 = vadd.f32 %v409, %v420
        %v422 = vadd.f32 %v410, %v420
        %v423 = vadd.f32 %v411, %v420
        %v424 = vadd.f32 %v412, %v420
        %v425 = vadd.f32 %v413, %v420
        %v426 = vadd.f32 %v414, %v420
        %v427 = vadd.f32 %v415, %v420
        %v428 = vadd.f32 %v416, %v420
        %v429 = vadd.f32 %v367, %v421
        %v430 = vadd.f32 %v368, %v422
        %v431 = vadd.f32 %v369, %v423
        %v432 = vadd.f32 %v370, %v424
        %v433 = vadd.f32 %v371, %v425
        %v434 = vadd.f32 %v372, %v426
        %v435 = vadd.f32 %v373, %v427
        %v436 = vadd.f32 %v374, %v428
        %v437 = vmax.f32 %v429, 0.0
        %v438 = vmax.f32 %v430, 0.0
        %v439 = vmax.f32 %v431, 0.0
        %v440 = vmax.f32 %v432, 0.0
        %v441 = vmax.f32 %v433, 0.0
        %v442 = vmax.f32 %v434, 0.0
        %v443 = vmax.f32 %v435, 0.0
        %v444 = vmax.f32 %v436, 0.0
        %v445 = vpack.c.bf16 %v438, %v437
        %v446 = vpack.c.bf16 %v440, %v439
        %v447 = vpack.c.bf16 %v442, %v441
        %v448 = vpack.c.bf16 %v444, %v443
        %v453 = vunpack.c.l.b16 %v445
        %v454 = vunpack.c.h.b16 %v445
        %v455 = vunpack.c.l.b16 %v446
        %v456 = vunpack.c.h.b16 %v446
        %v457 = vunpack.c.l.b16 %v447
        %v458 = vunpack.c.h.b16 %v447
        %v459 = vunpack.c.l.b16 %v448
        %v460 = vunpack.c.h.b16 %v448
        %v461 = vpack.c.b16 %v453, %v453
        %v462 = vpack.c.b16 %v454, %v454
        %v463 = vpack.c.b16 %v455, %v455
        %v464 = vpack.c.b16 %v456, %v456
        %v465 = vpack.c.b16 %v457, %v457
        %v466 = vpack.c.b16 %v458, %v458
        %v467 = vpack.c.b16 %v459, %v459
        %v468 = vpack.c.b16 %v460, %v460
        %477 = vst [vmem:[%s320] sm:$0xf] %v461
        %478 = vst [vmem:[%s320 + $0x4] sm:$0xf] %v462
        %479 = vst [vmem:[%s320 + $0x8] sm:$0xf] %v463
        %480 = vst [vmem:[%s320 + $0xc] sm:$0xf] %v464
        %481 = vst [vmem:[%s320 + $0x10] sm:$0xf] %v465
        %482 = vst [vmem:[%s320 + $0x14] sm:$0xf] %v466
        %483 = vst [vmem:[%s320 + $0x18] sm:$0xf] %v467
        %484 = vst [vmem:[%s320 + $0x1c] sm:$0xf] %v468
        %p485 = scmp.lt.s32.totalorder %s16, 1
        %s486 = scalar_select %p485, %s16, 1
        %s487 = smul.addr %s486, 8
        %s488 = smul.addr %s487, 4
        %s489 = scalar_lea.vmem %s5, %s488
        // Predicated region
        $region82: #{basic_block_forward.5} parent=76 // pred_check
          %p490 = pneg %p149
        $region83: #{basic_block_forward.5} parent=76 // pred_check_branch
          %492 = sbr.rel (%p490) target = $region85
        $region84: #{basic_block_forward.5} parent=76 // pred_region
          _
        $region85: #{basic_block_forward.5} parent=76 // pred_fallthru
          _
      $region77: #{basic_block_forward.5} parent=5 // pred_fallthru
        _
      %p493 = scmp.le.s32.totalorder 2, %s11
      // Predicated region
      $region86: #{basic_block_forward.5} parent=5 // pred_check
        %p494 = pneg %p493
      $region87: #{basic_block_forward.5} parent=5 // pred_check_branch
        %496 = sbr.rel (%p494) target = $region89
      $region88: #{basic_block_forward.5} parent=5 // pred_region
        %s497 = ssub.s32 %s11, 2
        // Predicated region
        $region90: #{basic_block_forward.5} parent=88 // pred_check
          %p498 = pneg %p155
        $region91: #{basic_block_forward.5} parent=88 // pred_check_branch
          %500 = sbr.rel (%p498) target = $region93
        $region92: #{basic_block_forward.5} parent=88 // pred_region
          %p501 = scmp.lt.s32.totalorder %s17, 1
          %s502 = scalar_select %p501, %s17, 1
          %s503 = smul.addr %s502, 8
          %s504 = smul.addr %s503, 4
          %s505 = scalar_lea.vmem %s5, %s504
        $region93: #{basic_block_forward.5} parent=88 // pred_fallthru
          _
      $region89: #{basic_block_forward.5} parent=5 // pred_fallthru
        _
    $region6: #{basic_block_forward.5} parent=1 // loop_footer
      %s15 = sadd.s32 1, %s11
    $region7: #{basic_block_forward.5} parent=1 // loop_footer_branch
      %10 = sbr.rel target = $region3
    $region8: #{basic_block_forward.5} parent=1 // loop_exit
      _

// kernel: basic_block_forward.4
$region0: #{basic_block_forward.4}
  #allocation0 [shape = 'u32[]', space=smem, size = 0x4, offset = 0x4, fixed_abs, tag = 'smem constant byte address 0x4 - core index']
  #allocation1 [shape = 'u32[144,128]{1,0:T(1,128)}', space=vmem, size = 0x12000, scoped, tag = 'internal scratch']
  %s0 = inlined_call_operand.vmem [shape: f32[8,256], index: 0, kind: input, shape index: {}]
  %s1 = inlined_call_operand.vmem [shape: f32[8,128], index: 1, kind: input, shape index: {}]
  %s2 = inlined_call_operand.vmem [shape: bf16[64,256], index: 2, kind: input, shape index: {}]
  %s3 = inlined_call_operand.vmem [shape: bf16[2,64,256], index: 3, kind: input, shape index: {}]
  %s4 = inlined_call_operand.vmem [shape: bf16[1152,128], index: 4, kind: input, shape index: {}]
  %s5 = inlined_call_operand.vmem [shape: bf16[2,64,128], index: 5, kind: output, shape index: {0}]
  %s6 = inlined_call_operand.vmem [shape: f32[8,128], index: 6, kind: output, shape index: {1}]
  %7 = xla_tuple %s5, %s6
  %s8 = sld [smem:[#allocation0]]
  $region106: #{basic_block_forward.4} parent=0
    _
  %s10 = ssub.s32 1, %s8
  %s11 = scalar_select 0, %s10, %s8
  $region1: #{basic_block_forward.4} parent=0
    #allocation2 [shape = 'u8[32768]{0}', space=vmem, size = 0x8000, scoped, tag = 'input window, operand 3']
    loop: start=0, step=1, limit=4
    $region2: #{basic_block_forward.4} parent=1 // loop_pre_header
      _
    $region3: #{basic_block_forward.4} parent=1 // loop_header
      %s13 = sphi 0, %s17
      %p14 = scmp.ge.s32.totalorder %s13, 4
      %s21 = sphi 0, %s21
      %s23 = sphi 0, %s21
      %s24 = sphi 0, %s23
      %s38 = sphi 0, %s24
      %s42 = sphi 0, %s42
      %s44 = sphi 0, %s42
      %s45 = sphi 0, %s44
      %s59 = sphi 0, %s45
      %s63 = sphi 0, %s63
      %s65 = sphi 0, %s63
      %s66 = sphi 0, %s65
      %s80 = sphi 0, %s66
      %s86 = sphi 0, %s88
      %s89 = sphi 0, %s86
      %s90 = sphi 0, %s89
      %s106 = sphi 0, %s90
      %s110 = sphi 0, %s110
      %s112 = sphi 0, %s110
      %s113 = sphi 0, %s112
      %s127 = sphi 0, %s113
      %s133 = sphi 0, %s135
      %s136 = sphi 0, %s133
      %s137 = sphi 0, %s136
      %s153 = sphi 0, %s137
      %s157 = sphi 0, %s157
      %s159 = sphi 0, %s157
      %s160 = sphi 0, %s159
      %s174 = sphi 0, %s160
    $region4: #{basic_block_forward.4} parent=1 // loop_header_branch
      %16 = sbr.rel (%p14) target = $region8
    $region5: #{basic_block_forward.4} parent=1 // loop_body
      %s18 = ssub.s32 %s13, 1
      %s19 = ssub.s32 %s13, 2
      %s20 = sadd.s32 %s13, 1
      %s22 = sadd.s32 %s21, 1
      %p25 = scmp.eq.s32.totalorder %s13, 1
      %p26 = scmp.ne.s32.totalorder %s21, %s23
      %p27 = scmp.eq.s32.totalorder %s13, 0
      %p28 = por %p26, %p27
      %p29 = scmp.ne.s32.totalorder %s21, %s23
      %p30 = scmp.eq.s32.totalorder %s18, 1
      %p31 = por %p29, %p30
      %p32 = scmp.ne.s32.totalorder %s23, %s24
      %p33 = scmp.eq.s32.totalorder %s18, 0
      %p34 = por %p32, %p33
      %p35 = scmp.ne.s32.totalorder %s23, %s24
      %p36 = scmp.eq.s32.totalorder %s19, 1
      %p37 = por %p35, %p36
      %p39 = scmp.ne.s32.totalorder %s24, %s38
      %p40 = scmp.eq.s32.totalorder %s19, 0
      %p41 = por %p39, %p40
      %s43 = sadd.s32 %s42, 1
      %p46 = scmp.eq.s32.totalorder %s13, 1
      %p47 = scmp.ne.s32.totalorder %s42, %s44
      %p48 = scmp.eq.s32.totalorder %s13, 0
      %p49 = por %p47, %p48
      %p50 = scmp.ne.s32.totalorder %s42, %s44
      %p51 = scmp.eq.s32.totalorder %s18, 1
      %p52 = por %p50, %p51
      %p53 = scmp.ne.s32.totalorder %s44, %s45
      %p54 = scmp.eq.s32.totalorder %s18, 0
      %p55 = por %p53, %p54
      %p56 = scmp.ne.s32.totalorder %s44, %s45
      %p57 = scmp.eq.s32.totalorder %s19, 1
      %p58 = por %p56, %p57
      %p60 = scmp.ne.s32.totalorder %s45, %s59
      %p61 = scmp.eq.s32.totalorder %s19, 0
      %p62 = por %p60, %p61
      %s64 = sadd.s32 %s63, 1
      %p67 = scmp.eq.s32.totalorder %s13, 1
      %p68 = scmp.ne.s32.totalorder %s63, %s65
      %p69 = scmp.eq.s32.totalorder %s13, 0
      %p70 = por %p68, %p69
      %p71 = scmp.ne.s32.totalorder %s63, %s65
      %p72 = scmp.eq.s32.totalorder %s18, 1
      %p73 = por %p71, %p72
      %p74 = scmp.ne.s32.totalorder %s65, %s66
      %p75 = scmp.eq.s32.totalorder %s18, 0
      %p76 = por %p74, %p75
      %p77 = scmp.ne.s32.totalorder %s65, %s66
      %p78 = scmp.eq.s32.totalorder %s19, 1
      %p79 = por %p77, %p78
      %p81 = scmp.ne.s32.totalorder %s66, %s80
      %p82 = scmp.eq.s32.totalorder %s19, 0
      %p83 = por %p81, %p82
      %s84 = ssub.s32 %s13, %s20
      %p85 = scmp.eq.s32.totalorder %s84, 0
      %s87 = sadd.s32 %s86, 1
      %s88 = scalar_select %p85, %s86, %s87
      %p91 = pneg %p85
      %p92 = scmp.eq.s32.totalorder %s13, 1
      %p93 = por %p91, %p92
      %p94 = scmp.ne.s32.totalorder %s86, %s89
      %p95 = scmp.eq.s32.totalorder %s13, 0
      %p96 = por %p94, %p95
      %p97 = scmp.ne.s32.totalorder %s86, %s89
      %p98 = scmp.eq.s32.totalorder %s18, 1
      %p99 = por %p97, %p98
      %p100 = scmp.ne.s32.totalorder %s89, %s90
      %p101 = scmp.eq.s32.totalorder %s18, 0
      %p102 = por %p100, %p101
      %p103 = scmp.ne.s32.totalorder %s89, %s90
      %p104 = scmp.eq.s32.totalorder %s19, 1
      %p105 = por %p103, %p104
      %p107 = scmp.ne.s32.totalorder %s90, %s106
      %p108 = scmp.eq.s32.totalorder %s19, 0
      %p109 = por %p107, %p108
      %s111 = sadd.s32 %s110, 1
      %p114 = scmp.eq.s32.totalorder %s13, 1
      %p115 = scmp.ne.s32.totalorder %s110, %s112
      %p116 = scmp.eq.s32.totalorder %s13, 0
      %p117 = por %p115, %p116
      %p118 = scmp.ne.s32.totalorder %s110, %s112
      %p119 = scmp.eq.s32.totalorder %s18, 1
      %p120 = por %p118, %p119
      %p121 = scmp.ne.s32.totalorder %s112, %s113
      %p122 = scmp.eq.s32.totalorder %s18, 0
      %p123 = por %p121, %p122
      %p124 = scmp.ne.s32.totalorder %s112, %s113
      %p125 = scmp.eq.s32.totalorder %s19, 1
      %p126 = por %p124, %p125
      %p128 = scmp.ne.s32.totalorder %s113, %s127
      %p129 = scmp.eq.s32.totalorder %s19, 0
      %p130 = por %p128, %p129
      %s131 = ssub.s32 %s13, %s20
      %p132 = scmp.eq.s32.totalorder %s131, 0
      %s134 = sadd.s32 %s133, 1
      %s135 = scalar_select %p132, %s133, %s134
      %p138 = pneg %p132
      %p139 = scmp.eq.s32.totalorder %s13, 1
      %p140 = por %p138, %p139
      %p141 = scmp.ne.s32.totalorder %s133, %s136
      %p142 = scmp.eq.s32.totalorder %s13, 0
      %p143 = por %p141, %p142
      %p144 = scmp.ne.s32.totalorder %s133, %s136
      %p145 = scmp.eq.s32.totalorder %s18, 1
      %p146 = por %p144, %p145
      %p147 = scmp.ne.s32.totalorder %s136, %s137
      %p148 = scmp.eq.s32.totalorder %s18, 0
      %p149 = por %p147, %p148
      %p150 = scmp.ne.s32.totalorder %s136, %s137
      %p151 = scmp.eq.s32.totalorder %s19, 1
      %p152 = por %p150, %p151
      %p154 = scmp.ne.s32.totalorder %s137, %s153
      %p155 = scmp.eq.s32.totalorder %s19, 0
      %p156 = por %p154, %p155
      %s158 = sadd.s32 %s157, 1
      %p161 = scmp.eq.s32.totalorder %s13, 1
      %p162 = scmp.ne.s32.totalorder %s157, %s159
      %p163 = scmp.eq.s32.totalorder %s13, 0
      %p164 = por %p162, %p163
      %p165 = scmp.ne.s32.totalorder %s157, %s159
      %p166 = scmp.eq.s32.totalorder %s18, 1
      %p167 = por %p165, %p166
      %p168 = scmp.ne.s32.totalorder %s159, %s160
      %p169 = scmp.eq.s32.totalorder %s18, 0
      %p170 = por %p168, %p169
      %p171 = scmp.ne.s32.totalorder %s159, %s160
      %p172 = scmp.eq.s32.totalorder %s19, 1
      %p173 = por %p171, %p172
      %p175 = scmp.ne.s32.totalorder %s160, %s174
      %p176 = scmp.eq.s32.totalorder %s19, 0
      %p177 = por %p175, %p176
      %p178 = scmp.le.s32.totalorder 1, %s13
      %p179 = scmp.lt.s32.totalorder %s13, 3
      %p180 = pnand %p178, %p179
      %p181 = pneg %p180
      // Predicated region
      $region9: #{basic_block_forward.4} parent=5 // pred_check
        _
      $region10: #{basic_block_forward.4} parent=5 // pred_check_branch
        %183 = sbr.rel (%p180) target = $region12
      $region11: #{basic_block_forward.4} parent=5 // pred_region
        %s184 = ssub.s32 %s13, 1
        // Predicated region
        $region13: #{basic_block_forward.4} parent=11 // pred_check
          %p185 = pneg %p34
        $region14: #{basic_block_forward.4} parent=11 // pred_check_branch
          %187 = sbr.rel (%p185) target = $region16
        $region15: #{basic_block_forward.4} parent=11 // pred_region
          _
        $region16: #{basic_block_forward.4} parent=11 // pred_fallthru
          _
        // Predicated region
        $region17: #{basic_block_forward.4} parent=11 // pred_check
          %p188 = pneg %p55
        $region18: #{basic_block_forward.4} parent=11 // pred_check_branch
          %190 = sbr.rel (%p188) target = $region20
        $region19: #{basic_block_forward.4} parent=11 // pred_region
          _
        $region20: #{basic_block_forward.4} parent=11 // pred_fallthru
          _
        // Predicated region
        $region21: #{basic_block_forward.4} parent=11 // pred_check
          %p191 = pneg %p76
        $region22: #{basic_block_forward.4} parent=11 // pred_check_branch
          %193 = sbr.rel (%p191) target = $region24
        $region23: #{basic_block_forward.4} parent=11 // pred_region
          _
        $region24: #{basic_block_forward.4} parent=11 // pred_fallthru
          _
        // Predicated region
        $region25: #{basic_block_forward.4} parent=11 // pred_check
          %p194 = pneg %p123
        $region26: #{basic_block_forward.4} parent=11 // pred_check_branch
          %196 = sbr.rel (%p194) target = $region28
        $region27: #{basic_block_forward.4} parent=11 // pred_region
          _
        $region28: #{basic_block_forward.4} parent=11 // pred_fallthru
          _
      $region12: #{basic_block_forward.4} parent=5 // pred_fallthru
        _
      %p197 = scmp.lt.s32.totalorder %s13, 2
      // Predicated region
      $region29: #{basic_block_forward.4} parent=5 // pred_check
        %p198 = pneg %p197
      $region30: #{basic_block_forward.4} parent=5 // pred_check_branch
        %200 = sbr.rel (%p198) target = $region32
      $region31: #{basic_block_forward.4} parent=5 // pred_region
        // Predicated region
        $region33: #{basic_block_forward.4} parent=31 // pred_check
          %p201 = pneg %p96
        $region34: #{basic_block_forward.4} parent=31 // pred_check_branch
          %203 = sbr.rel (%p201) target = $region36
        $region35: #{basic_block_forward.4} parent=31 // pred_region
          %s204 = sand.u32 %s86, 1
          %s205 = sand.u32 %s86, 1
          %s206 = smul.addr %s205, 32
          %s207 = scalar_lea.vmem [#allocation2], %s206
          %s208 = smul.addr %s13, 16
          %s209 = smul.addr %s208, 4
          %s210 = scalar_lea.vmem %s3, %s209
          // Predicated region
          $region37: #{basic_block_forward.4} parent=35 // pred_check
            _
          $region38: #{basic_block_forward.4} parent=35 // pred_check_branch
            %212 = sbr.rel (0) target = $region40
          $region39: #{basic_block_forward.4} parent=35 // pred_region
            // Predicated region
            $region41: #{basic_block_forward.4} parent=39 // pred_check
              _
            $region42: #{basic_block_forward.4} parent=39 // pred_check_branch
              %214 = sbr.rel target = $region44
            $region43: #{basic_block_forward.4} parent=39 // pred_region
              // Predicated region
              $region56: #{basic_block_forward.4} parent=43 // pred_check
                _
              $region57: #{basic_block_forward.4} parent=43 // pred_check_branch
                %244 = sbr.rel (0) target = $region59
              $region58: #{basic_block_forward.4} parent=43 // pred_region
                loop: start=0, step=1, limit=1
                $region60: #{basic_block_forward.4} parent=58 // loop_pre_header
                  _
                $region61: #{basic_block_forward.4} parent=58 // loop_header
                  %s246 = sphi 0, %s250
                  %p247 = scmp.ge.s32.totalorder %s246, 1
                  %s251 = sphi %s210, %s210
                  %s252 = sphi %s207, %s207
                $region62: #{basic_block_forward.4} parent=58 // loop_header_branch
                  %249 = sbr.rel (%p247) target = $region66
                $region63: #{basic_block_forward.4} parent=58 // loop_body
                  _
                $region64: #{basic_block_forward.4} parent=58 // loop_footer
                  %s250 = sadd.s32 1, %s246
                $region65: #{basic_block_forward.4} parent=58 // loop_footer_branch
                  %245 = sbr.rel target = $region61
                $region66: #{basic_block_forward.4} parent=58 // loop_exit
                  _
                %s254 = ssub.s32 16, 1
                loop: start=0, step=1, limit=1
                $region67: #{basic_block_forward.4} parent=58 // loop_pre_header
                  _
                $region68: #{basic_block_forward.4} parent=58 // loop_header
                  %s256 = sphi 0, %s260
                  %p257 = scmp.ge.s32.totalorder %s256, 1
                  %s261 = sphi %s210, %s210
                  %s262 = sphi %s207, %s207
                $region69: #{basic_block_forward.4} parent=58 // loop_header_branch
                  %259 = sbr.rel (%p257) target = $region73
                $region70: #{basic_block_forward.4} parent=58 // loop_body
                  %v263 = vld [vmem:[%s261] sm:%s254]
                  %264 = vst [vmem:[%s262] sm:%s254] %v263
                  %v265 = vld [vmem:[%s261 + $0x8] sm:%s254]
                  %266 = vst [vmem:[%s262 + $0x4] sm:%s254] %v265
                  %v267 = vld [vmem:[%s261 + $0x10] sm:%s254]
                  %268 = vst [vmem:[%s262 + $0x8] sm:%s254] %v267
                  %v269 = vld [vmem:[%s261 + $0x18] sm:%s254]
                  %270 = vst [vmem:[%s262 + $0xc] sm:%s254] %v269
                  %v271 = vld [vmem:[%s261 + $0x20] sm:%s254]
                  %272 = vst [vmem:[%s262 + $0x10] sm:%s254] %v271
                  %v273 = vld [vmem:[%s261 + $0x28] sm:%s254]
                  %274 = vst [vmem:[%s262 + $0x14] sm:%s254] %v273
                  %v275 = vld [vmem:[%s261 + $0x30] sm:%s254]
                  %276 = vst [vmem:[%s262 + $0x18] sm:%s254] %v275
                  %v277 = vld [vmem:[%s261 + $0x38] sm:%s254]
                  %278 = vst [vmem:[%s262 + $0x1c] sm:%s254] %v277
                $region71: #{basic_block_forward.4} parent=58 // loop_footer
                  %s260 = sadd.s32 1, %s256
                $region72: #{basic_block_forward.4} parent=58 // loop_footer_branch
                  %255 = sbr.rel target = $region68
                $region73: #{basic_block_forward.4} parent=58 // loop_exit
                  _
              $region59: #{basic_block_forward.4} parent=43 // pred_fallthru
                _
            $region44: #{basic_block_forward.4} parent=39 // pred_fallthru
              _
            // Predicated region
            $region45: #{basic_block_forward.4} parent=39 // pred_check
              _
            $region46: #{basic_block_forward.4} parent=39 // pred_check_branch
              %216 = sbr.rel (0) target = $region48
            $region47: #{basic_block_forward.4} parent=39 // pred_region
              %s218 = ssub.s32 16, 1
              loop: start=0, step=1, limit=1
              $region49: #{basic_block_forward.4} parent=47 // loop_pre_header
                _
              $region50: #{basic_block_forward.4} parent=47 // loop_header
                %s220 = sphi 0, %s224
                %p221 = scmp.ge.s32.totalorder %s220, 1
                %s225 = sphi %s210, %s210
                %s226 = sphi %s207, %s207
              $region51: #{basic_block_forward.4} parent=47 // loop_header_branch
                %223 = sbr.rel (%p221) target = $region55
              $region52: #{basic_block_forward.4} parent=47 // loop_body
                %v227 = vld [vmem:[%s225] sm:%s218]
                %228 = vst [vmem:[%s226] sm:%s218] %v227
                %v229 = vld [vmem:[%s225 + $0x8] sm:%s218]
                %230 = vst [vmem:[%s226 + $0x4] sm:%s218] %v229
                %v231 = vld [vmem:[%s225 + $0x10] sm:%s218]
                %232 = vst [vmem:[%s226 + $0x8] sm:%s218] %v231
                %v233 = vld [vmem:[%s225 + $0x18] sm:%s218]
                %234 = vst [vmem:[%s226 + $0xc] sm:%s218] %v233
                %v235 = vld [vmem:[%s225 + $0x20] sm:%s218]
                %236 = vst [vmem:[%s226 + $0x10] sm:%s218] %v235
                %v237 = vld [vmem:[%s225 + $0x28] sm:%s218]
                %238 = vst [vmem:[%s226 + $0x14] sm:%s218] %v237
                %v239 = vld [vmem:[%s225 + $0x30] sm:%s218]
                %240 = vst [vmem:[%s226 + $0x18] sm:%s218] %v239
                %v241 = vld [vmem:[%s225 + $0x38] sm:%s218]
                %242 = vst [vmem:[%s226 + $0x1c] sm:%s218] %v241
              $region53: #{basic_block_forward.4} parent=47 // loop_footer
                %s224 = sadd.s32 1, %s220
              $region54: #{basic_block_forward.4} parent=47 // loop_footer_branch
                %219 = sbr.rel target = $region50
              $region55: #{basic_block_forward.4} parent=47 // loop_exit
                _
            $region48: #{basic_block_forward.4} parent=39 // pred_fallthru
              _
          $region40: #{basic_block_forward.4} parent=35 // pred_fallthru
            _
          %279 = vnop
        $region36: #{basic_block_forward.4} parent=31 // pred_fallthru
          _
      $region32: #{basic_block_forward.4} parent=5 // pred_fallthru
        _
      %p280 = scmp.le.s32.totalorder 1, %s13
      %p281 = scmp.lt.s32.totalorder %s13, 3
      %p282 = pnand %p280, %p281
      %p283 = pneg %p282
      // Predicated region
      $region74: #{basic_block_forward.4} parent=5 // pred_check
        _
      $region75: #{basic_block_forward.4} parent=5 // pred_check_branch
        %285 = sbr.rel (%p282) target = $region77
      $region76: #{basic_block_forward.4} parent=5 // pred_region
        %s286 = ssub.s32 %s13, 1
        %s287 = sand.u32 %s89, 1
        %s288 = sand.u32 %s89, 1
        %s289 = smul.addr %s288, 32
        %s290 = scalar_lea.vmem [#allocation2], %s289
        // Predicated region
        $region78: #{basic_block_forward.4} parent=76 // pred_check
          %p291 = pneg %p102
        $region79: #{basic_block_forward.4} parent=76 // pred_check_branch
          %293 = sbr.rel (%p291) target = $region81
        $region80: #{basic_block_forward.4} parent=76 // pred_region
          _
        $region81: #{basic_block_forward.4} parent=76 // pred_fallthru
          _
        %p294 = pneg %p34
        %p295 = pneg %p31
        %p296 = pneg %p55
        %p297 = pneg %p52
        %p298 = pneg %p76
        %p299 = pneg %p73
        %s300 = sand.u32 %s89, 1
        %s301 = sand.u32 %s89, 1
        %s302 = smul.addr %s301, 32
        %s303 = scalar_lea.vmem [#allocation2], %s302
        %p304 = pneg %p102
        %p305 = pneg %p99
        %p306 = pneg %p123
        %p307 = pneg %p120
        %p308 = pneg %p149
        %p309 = pneg %p146
        %p310 = scmp.lt.s32.totalorder %s18, 1
        %s311 = scalar_select %p310, %s18, 1
        %s312 = smul.addr %s311, 8
        %s313 = smul.addr %s312, 4
        %s314 = scalar_lea.vmem %s5, %s313
        %p315 = pneg %p170
        %p316 = pneg %p167
        %p317 = scmp.lt.s32.totalorder %s18, 1
        %s318 = scalar_select %p317, %s18, 1
        %s319 = smul.addr %s318, 8
        %s320 = smul.addr %s319, 4
        %s321 = scalar_lea.vmem %s5, %s320
        %v323 = vld [vmem:[%s0] sm:$0x1]
        %v324 = vmul.f32 %v323, 0.0078125
        %v325 = vld [vmem:[%s0 + $0x1] sm:$0x1]
        %v326 = vmul.f32 %v325, 0.0078125
        %v327 = vmul.f32 %v324, %v324
        %v328 = vsub.f32 %v326, %v327
        %v329 = vmax.f32 %v328, 0.0
        %v330 = vld [vmem:[%s1] sm:$0x1]
        %v331 = vadd.f32 %v329, 1e-05
        %v332 = vrsqrt.pop %v331
        %v333 = vmul.f32 %v330, %v332
        %v334 = vld [vmem:[%s1 + $0x1] sm:$0x1]
        %v335 = vmul.f32 %v324, %v333
        %v336 = vsub.f32 %v334, %v335
        %v337 = vld [vmem:[%s290] sm:$0xf]
        %v338 = vld [vmem:[%s290 + $0x4] sm:$0xf]
        %v339 = vld [vmem:[%s290 + $0x8] sm:$0xf]
        %v340 = vld [vmem:[%s290 + $0xc] sm:$0xf]
        %v341 = vld [vmem:[%s290 + $0x10] sm:$0xf]
        %v342 = vld [vmem:[%s290 + $0x14] sm:$0xf]
        %v343 = vld [vmem:[%s290 + $0x18] sm:$0xf]
        %v344 = vld [vmem:[%s290 + $0x1c] sm:$0xf]
        %v345 = vunpack.c.l.bf16 %v337
        %v346 = vunpack.c.l.bf16 %v338
        %v347 = vunpack.c.l.bf16 %v339
        %v348 = vunpack.c.l.bf16 %v340
        %v349 = vunpack.c.l.bf16 %v341
        %v350 = vunpack.c.l.bf16 %v342
        %v351 = vunpack.c.l.bf16 %v343
        %v352 = vunpack.c.l.bf16 %v344
        %v353 = vlaneseq
        %v354 = vshrl.u32 %v353, 7
        %v355 = vsub.s32 0, %v354
        %v356 = vrot.slane %v333, %v355
        %v357 = vmul.f32 %v345, %v356
        %v358 = vmul.f32 %v346, %v356
        %v359 = vmul.f32 %v347, %v356
        %v360 = vmul.f32 %v348, %v356
        %v361 = vmul.f32 %v349, %v356
        %v362 = vmul.f32 %v350, %v356
        %v363 = vmul.f32 %v351, %v356
        %v364 = vmul.f32 %v352, %v356
        %v365 = vlaneseq
        %v366 = vshrl.u32 %v365, 7
        %v367 = vsub.s32 0, %v366
        %v368 = vrot.slane %v336, %v367
        %v369 = vadd.f32 %v357, %v368
        %v370 = vadd.f32 %v358, %v368
        %v371 = vadd.f32 %v359, %v368
        %v372 = vadd.f32 %v360, %v368
        %v373 = vadd.f32 %v361, %v368
        %v374 = vadd.f32 %v362, %v368
        %v375 = vadd.f32 %v363, %v368
        %v376 = vadd.f32 %v364, %v368
        %v377 = vmax.f32 %v369, 0.0
        %v378 = vmax.f32 %v370, 0.0
        %v379 = vmax.f32 %v371, 0.0
        %v380 = vmax.f32 %v372, 0.0
        %v381 = vmax.f32 %v373, 0.0
        %v382 = vmax.f32 %v374, 0.0
        %v383 = vmax.f32 %v375, 0.0
        %v384 = vmax.f32 %v376, 0.0
        %v385 = vpack.c.bf16 %v378, %v377
        %v386 = vpack.c.bf16 %v380, %v379
        %v387 = vpack.c.bf16 %v382, %v381
        %v388 = vpack.c.bf16 %v384, %v383
        %vm389 = vsmask.f32 4352
        %v391 = vshrl.u32 %v385, 16
        %v393 = vrot.slane %v391, 3
        %v394 = vshll.u32 %v385, 16
        %v396 = vrot.slane %v394, 4
        %v397 = vor.u32 %v393, %v396
        %v399 = vshrl.u32 %v386, 16
        %v401 = vrot.slane %v399, 3
        %v402 = vshll.u32 %v386, 16
        %v404 = vrot.slane %v402, 4
        %v405 = vor.u32 %v401, %v404
        %v406 = vsel %vm389, %v397, %v405
        %v408 = vshrl.u32 %v387, 16
        %v410 = vrot.slane %v408, 3
        %v411 = vshll.u32 %v387, 16
        %v413 = vrot.slane %v411, 4
        %v414 = vor.u32 %v410, %v413
        %v415 = vsel %vm389, %v405, %v414
        %v417 = vshrl.u32 %v388, 16
        %v419 = vrot.slane %v417, 3
        %v420 = vshll.u32 %v388, 16
        %v422 = vrot.slane %v420, 4
        %v423 = vor.u32 %v419, %v422
        %v424 = vsel %vm389, %v414, %v423
        %vm429 = vcmask 1044480
        %vm430 = vmand %vm429, %vm389
        %v431 = vsel %vm430, 0, %v397
        %v432 = vld [vmem:[%s2] sm:$0xf]
        %v433 = vld [vmem:[%s2 + $0x8] sm:$0xf]
        %v434 = vld [vmem:[%s2 + $0x10] sm:$0xf]
        %v435 = vld [vmem:[%s2 + $0x18] sm:$0xf]
        %v436 = vld [vmem:[%s2 + $0x20] sm:$0xf]
        %v437 = vld [vmem:[%s2 + $0x28] sm:$0xf]
        %v438 = vld [vmem:[%s2 + $0x30] sm:$0xf]
        %v439 = vld [vmem:[%s2 + $0x38] sm:$0xf]
        %v448 = vunpack.c.l.b16 %v432
        %v449 = vunpack.c.l.b16 %v433
        %v450 = vunpack.c.l.b16 %v434
        %v451 = vunpack.c.l.b16 %v435
        %v452 = vunpack.c.l.b16 %v436
        %v453 = vunpack.c.l.b16 %v437
        %v454 = vunpack.c.l.b16 %v438
        %v455 = vunpack.c.l.b16 %v439
        %v456 = vpack.c.b16 %v449, %v448
        %v457 = vpack.c.b16 %v451, %v450
        %v458 = vpack.c.b16 %v453, %v452
        %v459 = vpack.c.b16 %v455, %v454
        %v464 = vmul.bf16 %v431, %v456
        %v465 = vmul.bf16 %v406, %v457
        %v466 = vmul.bf16 %v415, %v458
        %v467 = vmul.bf16 %v424, %v459
        %vm472 = vcmask 1043456
        %v473 = vrot.slane %v385, 4
        %v474 = vrot.slane %v386, 4
        %v475 = vsel %vm472, %v473, %v474
        %v476 = vrot.slane %v387, 4
        %v477 = vsel %vm472, %v474, %v476
        %v478 = vrot.slane %v388, 4
        %v479 = vsel %vm472, %v476, %v478
        %vm483 = vcmask 1043456
        %v486 = vsel %vm483, 0, %v473
        %vm488 = vsmask.f32 3328
        %v489 = vrot.slane %v391, 4
        %v490 = vrot.slane %v394, 5
        %v491 = vor.u32 %v489, %v490
        %v492 = vrot.slane %v399, 4
        %v493 = vrot.slane %v402, 5
        %v494 = vor.u32 %v492, %v493
        %v495 = vsel %vm488, %v491, %v494
        %v496 = vrot.slane %v408, 4
        %v497 = vrot.slane %v411, 5
        %v498 = vor.u32 %v496, %v497
        %v499 = vsel %vm488, %v494, %v498
        %v500 = vrot.slane %v417, 4
        %v501 = vrot.slane %v420, 5
        %v502 = vor.u32 %v500, %v501
        %v503 = vsel %vm488, %v498, %v502
        %vm508 = vmand %vm472, %vm488
        %v509 = vsel %vm508, 0, %v491
        %v510 = vld [vmem:[%s2 + $0x4] sm:$0xf]
        %v511 = vld [vmem:[%s2 + $0xc] sm:$0xf]
        %v512 = vld [vmem:[%s2 + $0x14] sm:$0xf]
        %v513 = vld [vmem:[%s2 + $0x1c] sm:$0xf]
        %v514 = vld [vmem:[%s2 + $0x24] sm:$0xf]
        %v515 = vld [vmem:[%s2 + $0x2c] sm:$0xf]
        %v516 = vld [vmem:[%s2 + $0x34] sm:$0xf]
        %v517 = vld [vmem:[%s2 + $0x3c] sm:$0xf]
        %v526 = vunpack.c.l.b16 %v510
        %v527 = vunpack.c.l.b16 %v511
        %v528 = vunpack.c.l.b16 %v512
        %v529 = vunpack.c.l.b16 %v513
        %v530 = vunpack.c.l.b16 %v514
        %v531 = vunpack.c.l.b16 %v515
        %v532 = vunpack.c.l.b16 %v516
        %v533 = vunpack.c.l.b16 %v517
        %v534 = vpack.c.b16 %v527, %v526
        %v535 = vpack.c.b16 %v529, %v528
        %v536 = vpack.c.b16 %v531, %v530
        %v537 = vpack.c.b16 %v533, %v532
        %v542 = vmul.bf16 %v509, %v534
        %v543 = vmul.bf16 %v495, %v535
        %v544 = vmul.bf16 %v499, %v536
        %v545 = vmul.bf16 %v503, %v537
        %vm546 = vsmask.f32 256
        %v547 = vrot.slane %v391, 7
        %v548 = vor.u32 %v547, %v394
        %v549 = vrot.slane %v399, 7
        %v550 = vor.u32 %v549, %v402
        %v551 = vsel %vm546, %v547, %v550
        %v552 = vrot.slane %v408, 7
        %v553 = vor.u32 %v552, %v411
        %v554 = vsel %vm546, %v549, %v553
        %v555 = vrot.slane %v417, 7
        %v556 = vor.u32 %v555, %v420
        %v557 = vsel %vm546, %v552, %v556
        %vm562 = vcmask 1040384
        %vm563 = vmand %vm562, %vm546
        %v564 = vsel %vm563, 0, %v548
        %v565 = vmul.bf16 %v564, %v456
        %v566 = vmul.bf16 %v551, %v457
        %v567 = vmul.bf16 %v554, %v458
        %v568 = vmul.bf16 %v557, %v459
        %vm569 = vsmask.f32 7424
        %v570 = vrot.slane %v394, 1
        %v571 = vor.u32 %v391, %v570
        %v572 = vrot.slane %v402, 1
        %v573 = vsel %vm569, %v571, %v572
        %v574 = vor.u32 %v399, %v572
        %v575 = vrot.slane %v411, 1
        %v576 = vsel %vm569, %v574, %v575
        %v577 = vor.u32 %v408, %v575
        %v578 = vrot.slane %v420, 1
        %v579 = vsel %vm569, %v577, %v578
        %v580 = vor.u32 %v417, %v578
        %vm585 = vcmask 1047552
        %vm586 = vmand %vm585, %vm569
        %v587 = vsel %vm586, %v580, 0
        %v588 = vmul.bf16 %v573, %v534
        %v589 = vmul.bf16 %v576, %v535
        %v590 = vmul.bf16 %v579, %v536
        %v591 = vmul.bf16 %v587, %v537
        %v593 = vsel %vm430, %v423, 0
        %v594 = vmul.bf16 %v406, %v456
        %v595 = vmul.bf16 %v415, %v457
        %v596 = vmul.bf16 %v424, %v458
        %v597 = vmul.bf16 %v593, %v459
        %v599 = vsel %vm483, %v478, 0
        %v602 = vsel %vm508, %v502, 0
        %v603 = vmul.bf16 %v495, %v534
        %v604 = vmul.bf16 %v499, %v535
        %v605 = vmul.bf16 %v503, %v536
        %v606 = vmul.bf16 %v602, %v537
        %v607 = vld [vmem:[%s4] sm:$0xf]
        %v608 = vld [vmem:[%s4 + $0x4] sm:$0xf]
        %v609 = vld [vmem:[%s4 + $0x8] sm:$0xf]
        %v610 = vld [vmem:[%s4 + $0xc] sm:$0xf]
        %v611 = vld [vmem:[%s4 + $0x10] sm:$0xf]
        %v612 = vld [vmem:[%s4 + $0x14] sm:$0xf]
        %v613 = vld [vmem:[%s4 + $0x18] sm:$0xf]
        %v614 = vld [vmem:[%s4 + $0x1c] sm:$0xf]
        %v615 = vld [vmem:[%s4 + $0x20] sm:$0xf]
        %v616 = vld [vmem:[%s4 + $0x24] sm:$0xf]
        %v617 = vld [vmem:[%s4 + $0x28] sm:$0xf]
        %v618 = vld [vmem:[%s4 + $0x2c] sm:$0xf]
        %v619 = vld [vmem:[%s4 + $0x30] sm:$0xf]
        %v620 = vld [vmem:[%s4 + $0x34] sm:$0xf]
        %v621 = vld [vmem:[%s4 + $0x38] sm:$0xf]
        %v622 = vld [vmem:[%s4 + $0x3c] sm:$0xf]
        %v623 = vld [vmem:[%s4 + $0x40] sm:$0xf]
        %v624 = vld [vmem:[%s4 + $0x44] sm:$0xf]
        %v625 = vld [vmem:[%s4 + $0x48] sm:$0xf]
        %v626 = vld [vmem:[%s4 + $0x4c] sm:$0xf]
        %v627 = vld [vmem:[%s4 + $0x50] sm:$0xf]
        %v628 = vld [vmem:[%s4 + $0x54] sm:$0xf]
        %v629 = vld [vmem:[%s4 + $0x58] sm:$0xf]
        %v630 = vld [vmem:[%s4 + $0x5c] sm:$0xf]
        %v631 = vld [vmem:[%s4 + $0x60] sm:$0xf]
        %v632 = vld [vmem:[%s4 + $0x64] sm:$0xf]
        %v633 = vld [vmem:[%s4 + $0x68] sm:$0xf]
        %v634 = vld [vmem:[%s4 + $0x6c] sm:$0xf]
        %v635 = vld [vmem:[%s4 + $0x70] sm:$0xf]
        %v636 = vld [vmem:[%s4 + $0x74] sm:$0xf]
        %v637 = vld [vmem:[%s4 + $0x78] sm:$0xf]
        %v638 = vld [vmem:[%s4 + $0x7c] sm:$0xf]
        %v639 = vld [vmem:[%s4 + $0x80] sm:$0xf]
        %v640 = vld [vmem:[%s4 + $0x84] sm:$0xf]
        %v641 = vld [vmem:[%s4 + $0x88] sm:$0xf]
        %v642 = vld [vmem:[%s4 + $0x8c] sm:$0xf]
        %v643 = vld [vmem:[%s4 + $0x90] sm:$0xf]
        %v644 = vld [vmem:[%s4 + $0x94] sm:$0xf]
        %v645 = vld [vmem:[%s4 + $0x98] sm:$0xf]
        %v646 = vld [vmem:[%s4 + $0x9c] sm:$0xf]
        %v647 = vld [vmem:[%s4 + $0xa0] sm:$0xf]
        %v648 = vld [vmem:[%s4 + $0xa4] sm:$0xf]
        %v649 = vld [vmem:[%s4 + $0xa8] sm:$0xf]
        %v650 = vld [vmem:[%s4 + $0xac] sm:$0xf]
        %v651 = vld [vmem:[%s4 + $0xb0] sm:$0xf]
        %v652 = vld [vmem:[%s4 + $0xb4] sm:$0xf]
        %v653 = vld [vmem:[%s4 + $0xb8] sm:$0xf]
        %v654 = vld [vmem:[%s4 + $0xbc] sm:$0xf]
        %v655 = vld [vmem:[%s4 + $0xc0] sm:$0xf]
        %v656 = vld [vmem:[%s4 + $0xc4] sm:$0xf]
        %v657 = vld [vmem:[%s4 + $0xc8] sm:$0xf]
        %v658 = vld [vmem:[%s4 + $0xcc] sm:$0xf]
        %v659 = vld [vmem:[%s4 + $0xd0] sm:$0xf]
        %v660 = vld [vmem:[%s4 + $0xd4] sm:$0xf]
        %v661 = vld [vmem:[%s4 + $0xd8] sm:$0xf]
        %v662 = vld [vmem:[%s4 + $0xdc] sm:$0xf]
        %v663 = vld [vmem:[%s4 + $0xe0] sm:$0xf]
        %v664 = vld [vmem:[%s4 + $0xe4] sm:$0xf]
        %v665 = vld [vmem:[%s4 + $0xe8] sm:$0xf]
        %v666 = vld [vmem:[%s4 + $0xec] sm:$0xf]
        %v667 = vld [vmem:[%s4 + $0xf0] sm:$0xf]
        %v668 = vld [vmem:[%s4 + $0xf4] sm:$0xf]
        %v669 = vld [vmem:[%s4 + $0xf8] sm:$0xf]
        %v670 = vld [vmem:[%s4 + $0xfc] sm:$0xf]
        %v671 = vld [vmem:[%s4 + $0x100] sm:$0xf]
        %v672 = vld [vmem:[%s4 + $0x104] sm:$0xf]
        %v673 = vld [vmem:[%s4 + $0x108] sm:$0xf]
        %v674 = vld [vmem:[%s4 + $0x10c] sm:$0xf]
        %v675 = vld [vmem:[%s4 + $0x110] sm:$0xf]
        %v676 = vld [vmem:[%s4 + $0x114] sm:$0xf]
        %v677 = vld [vmem:[%s4 + $0x118] sm:$0xf]
        %v678 = vld [vmem:[%s4 + $0x11c] sm:$0xf]
        %v679 = vld [vmem:[%s4 + $0x120] sm:$0xf]
        %v680 = vld [vmem:[%s4 + $0x124] sm:$0xf]
        %v681 = vld [vmem:[%s4 + $0x128] sm:$0xf]
        %v682 = vld [vmem:[%s4 + $0x12c] sm:$0xf]
        %v683 = vld [vmem:[%s4 + $0x130] sm:$0xf]
        %v684 = vld [vmem:[%s4 + $0x134] sm:$0xf]
        %v685 = vld [vmem:[%s4 + $0x138] sm:$0xf]
        %v686 = vld [vmem:[%s4 + $0x13c] sm:$0xf]
        %v687 = vld [vmem:[%s4 + $0x140] sm:$0xf]
        %v688 = vld [vmem:[%s4 + $0x144] sm:$0xf]
        %v689 = vld [vmem:[%s4 + $0x148] sm:$0xf]
        %v690 = vld [vmem:[%s4 + $0x14c] sm:$0xf]
        %v691 = vld [vmem:[%s4 + $0x150] sm:$0xf]
        %v692 = vld [vmem:[%s4 + $0x154] sm:$0xf]
        %v693 = vld [vmem:[%s4 + $0x158] sm:$0xf]
        %v694 = vld [vmem:[%s4 + $0x15c] sm:$0xf]
        %v695 = vld [vmem:[%s4 + $0x160] sm:$0xf]
        %v696 = vld [vmem:[%s4 + $0x164] sm:$0xf]
        %v697 = vld [vmem:[%s4 + $0x168] sm:$0xf]
        %v698 = vld [vmem:[%s4 + $0x16c] sm:$0xf]
        %v699 = vld [vmem:[%s4 + $0x170] sm:$0xf]
        %v700 = vld [vmem:[%s4 + $0x174] sm:$0xf]
        %v701 = vld [vmem:[%s4 + $0x178] sm:$0xf]
        %v702 = vld [vmem:[%s4 + $0x17c] sm:$0xf]
        %v703 = vld [vmem:[%s4 + $0x180] sm:$0xf]
        %v704 = vld [vmem:[%s4 + $0x184] sm:$0xf]
        %v705 = vld [vmem:[%s4 + $0x188] sm:$0xf]
        %v706 = vld [vmem:[%s4 + $0x18c] sm:$0xf]
        %v707 = vld [vmem:[%s4 + $0x190] sm:$0xf]
        %v708 = vld [vmem:[%s4 + $0x194] sm:$0xf]
        %v709 = vld [vmem:[%s4 + $0x198] sm:$0xf]
        %v710 = vld [vmem:[%s4 + $0x19c] sm:$0xf]
        %v711 = vld [vmem:[%s4 + $0x1a0] sm:$0xf]
        %v712 = vld [vmem:[%s4 + $0x1a4] sm:$0xf]
        %v713 = vld [vmem:[%s4 + $0x1a8] sm:$0xf]
        %v714 = vld [vmem:[%s4 + $0x1ac] sm:$0xf]
        %v715 = vld [vmem:[%s4 + $0x1b0] sm:$0xf]
        %v716 = vld [vmem:[%s4 + $0x1b4] sm:$0xf]
        %v717 = vld [vmem:[%s4 + $0x1b8] sm:$0xf]
        %v718 = vld [vmem:[%s4 + $0x1bc] sm:$0xf]
        %v719 = vld [vmem:[%s4 + $0x1c0] sm:$0xf]
        %v720 = vld [vmem:[%s4 + $0x1c4] sm:$0xf]
        %v721 = vld [vmem:[%s4 + $0x1c8] sm:$0xf]
        %v722 = vld [vmem:[%s4 + $0x1cc] sm:$0xf]
        %v723 = vld [vmem:[%s4 + $0x1d0] sm:$0xf]
        %v724 = vld [vmem:[%s4 + $0x1d4] sm:$0xf]
        %v725 = vld [vmem:[%s4 + $0x1d8] sm:$0xf]
        %v726 = vld [vmem:[%s4 + $0x1dc] sm:$0xf]
        %v727 = vld [vmem:[%s4 + $0x1e0] sm:$0xf]
        %v728 = vld [vmem:[%s4 + $0x1e4] sm:$0xf]
        %v729 = vld [vmem:[%s4 + $0x1e8] sm:$0xf]
        %v730 = vld [vmem:[%s4 + $0x1ec] sm:$0xf]
        %v731 = vld [vmem:[%s4 + $0x1f0] sm:$0xf]
        %v732 = vld [vmem:[%s4 + $0x1f4] sm:$0xf]
        %v733 = vld [vmem:[%s4 + $0x1f8] sm:$0xf]
        %v734 = vld [vmem:[%s4 + $0x1fc] sm:$0xf]
        %v735 = vld [vmem:[%s4 + $0x200] sm:$0xf]
        %v736 = vld [vmem:[%s4 + $0x204] sm:$0xf]
        %v737 = vld [vmem:[%s4 + $0x208] sm:$0xf]
        %v738 = vld [vmem:[%s4 + $0x20c] sm:$0xf]
        %v739 = vld [vmem:[%s4 + $0x210] sm:$0xf]
        %v740 = vld [vmem:[%s4 + $0x214] sm:$0xf]
        %v741 = vld [vmem:[%s4 + $0x218] sm:$0xf]
        %v742 = vld [vmem:[%s4 + $0x21c] sm:$0xf]
        %v743 = vld [vmem:[%s4 + $0x220] sm:$0xf]
        %v744 = vld [vmem:[%s4 + $0x224] sm:$0xf]
        %v745 = vld [vmem:[%s4 + $0x228] sm:$0xf]
        %v746 = vld [vmem:[%s4 + $0x22c] sm:$0xf]
        %v747 = vld [vmem:[%s4 + $0x230] sm:$0xf]
        %v748 = vld [vmem:[%s4 + $0x234] sm:$0xf]
        %v749 = vld [vmem:[%s4 + $0x238] sm:$0xf]
        %v750 = vld [vmem:[%s4 + $0x23c] sm:$0xf]
        %v895 = vunpack.c.l.b16 %v607
        %v896 = vunpack.c.l.b16 %v608
        %v897 = vunpack.c.l.b16 %v609
        %v898 = vunpack.c.l.b16 %v610
        %v899 = vunpack.c.l.b16 %v611
        %v900 = vunpack.c.l.b16 %v612
        %v901 = vunpack.c.l.b16 %v613
        %v902 = vunpack.c.l.b16 %v614
        %v903 = vunpack.c.l.b16 %v615
        %v904 = vunpack.c.l.b16 %v616
        %v905 = vunpack.c.l.b16 %v617
        %v906 = vunpack.c.l.b16 %v618
        %v907 = vunpack.c.l.b16 %v619
        %v908 = vunpack.c.l.b16 %v620
        %v909 = vunpack.c.l.b16 %v621
        %v910 = vunpack.c.l.b16 %v622
        %v911 = vunpack.c.l.b16 %v623
        %v912 = vunpack.c.l.b16 %v624
        %v913 = vunpack.c.l.b16 %v625
        %v914 = vunpack.c.l.b16 %v626
        %v915 = vunpack.c.l.b16 %v627
        %v916 = vunpack.c.l.b16 %v628
        %v917 = vunpack.c.l.b16 %v629
        %v918 = vunpack.c.l.b16 %v630
        %v919 = vunpack.c.l.b16 %v631
        %v920 = vunpack.c.l.b16 %v632
        %v921 = vunpack.c.l.b16 %v633
        %v922 = vunpack.c.l.b16 %v634
        %v923 = vunpack.c.l.b16 %v635
        %v924 = vunpack.c.l.b16 %v636
        %v925 = vunpack.c.l.b16 %v637
        %v926 = vunpack.c.l.b16 %v638
        %v927 = vunpack.c.l.b16 %v639
        %v928 = vunpack.c.l.b16 %v640
        %v929 = vunpack.c.l.b16 %v641
        %v930 = vunpack.c.l.b16 %v642
        %v931 = vunpack.c.l.b16 %v643
        %v932 = vunpack.c.l.b16 %v644
        %v933 = vunpack.c.l.b16 %v645
        %v934 = vunpack.c.l.b16 %v646
        %v935 = vunpack.c.l.b16 %v647
        %v936 = vunpack.c.l.b16 %v648
        %v937 = vunpack.c.l.b16 %v649
        %v938 = vunpack.c.l.b16 %v650
        %v939 = vunpack.c.l.b16 %v651
        %v940 = vunpack.c.l.b16 %v652
        %v941 = vunpack.c.l.b16 %v653
        %v942 = vunpack.c.l.b16 %v654
        %v943 = vunpack.c.l.b16 %v655
        %v944 = vunpack.c.l.b16 %v656
        %v945 = vunpack.c.l.b16 %v657
        %v946 = vunpack.c.l.b16 %v658
        %v947 = vunpack.c.l.b16 %v659
        %v948 = vunpack.c.l.b16 %v660
        %v949 = vunpack.c.l.b16 %v661
        %v950 = vunpack.c.l.b16 %v662
        %v951 = vunpack.c.l.b16 %v663
        %v952 = vunpack.c.l.b16 %v664
        %v953 = vunpack.c.l.b16 %v665
        %v954 = vunpack.c.l.b16 %v666
        %v955 = vunpack.c.l.b16 %v667
        %v956 = vunpack.c.l.b16 %v668
        %v957 = vunpack.c.l.b16 %v669
        %v958 = vunpack.c.l.b16 %v670
        %v959 = vunpack.c.l.b16 %v671
        %v960 = vunpack.c.l.b16 %v672
        %v961 = vunpack.c.l.b16 %v673
        %v962 = vunpack.c.l.b16 %v674
        %v963 = vunpack.c.l.b16 %v675
        %v964 = vunpack.c.l.b16 %v676
        %v965 = vunpack.c.l.b16 %v677
        %v966 = vunpack.c.l.b16 %v678
        %v967 = vunpack.c.l.b16 %v679
        %v968 = vunpack.c.l.b16 %v680
        %v969 = vunpack.c.l.b16 %v681
        %v970 = vunpack.c.l.b16 %v682
        %v971 = vunpack.c.l.b16 %v683
        %v972 = vunpack.c.l.b16 %v684
        %v973 = vunpack.c.l.b16 %v685
        %v974 = vunpack.c.l.b16 %v686
        %v975 = vunpack.c.l.b16 %v687
        %v976 = vunpack.c.l.b16 %v688
        %v977 = vunpack.c.l.b16 %v689
        %v978 = vunpack.c.l.b16 %v690
        %v979 = vunpack.c.l.b16 %v691
        %v980 = vunpack.c.l.b16 %v692
        %v981 = vunpack.c.l.b16 %v693
        %v982 = vunpack.c.l.b16 %v694
        %v983 = vunpack.c.l.b16 %v695
        %v984 = vunpack.c.l.b16 %v696
        %v985 = vunpack.c.l.b16 %v697
        %v986 = vunpack.c.l.b16 %v698
        %v987 = vunpack.c.l.b16 %v699
        %v988 = vunpack.c.l.b16 %v700
        %v989 = vunpack.c.l.b16 %v701
        %v990 = vunpack.c.l.b16 %v702
        %v991 = vunpack.c.l.b16 %v703
        %v992 = vunpack.c.l.b16 %v704
        %v993 = vunpack.c.l.b16 %v705
        %v994 = vunpack.c.l.b16 %v706
        %v995 = vunpack.c.l.b16 %v707
        %v996 = vunpack.c.l.b16 %v708
        %v997 = vunpack.c.l.b16 %v709
        %v998 = vunpack.c.l.b16 %v710
        %v999 = vunpack.c.l.b16 %v711
        %v1000 = vunpack.c.l.b16 %v712
        %v1001 = vunpack.c.l.b16 %v713
        %v1002 = vunpack.c.l.b16 %v714
        %v1003 = vunpack.c.l.b16 %v715
        %v1004 = vunpack.c.l.b16 %v716
        %v1005 = vunpack.c.l.b16 %v717
        %v1006 = vunpack.c.l.b16 %v718
        %v1007 = vunpack.c.l.b16 %v719
        %v1008 = vunpack.c.l.b16 %v720
        %v1009 = vunpack.c.l.b16 %v721
        %v1010 = vunpack.c.l.b16 %v722
        %v1011 = vunpack.c.l.b16 %v723
        %v1012 = vunpack.c.l.b16 %v724
        %v1013 = vunpack.c.l.b16 %v725
        %v1014 = vunpack.c.l.b16 %v726
        %v1015 = vunpack.c.l.b16 %v727
        %v1016 = vunpack.c.l.b16 %v728
        %v1017 = vunpack.c.l.b16 %v729
        %v1018 = vunpack.c.l.b16 %v730
        %v1019 = vunpack.c.l.b16 %v731
        %v1020 = vunpack.c.l.b16 %v732
        %v1021 = vunpack.c.l.b16 %v733
        %v1022 = vunpack.c.l.b16 %v734
        %v1023 = vunpack.c.l.b16 %v735
        %v1024 = vunpack.c.l.b16 %v736
        %v1025 = vunpack.c.l.b16 %v737
        %v1026 = vunpack.c.l.b16 %v738
        %v1027 = vunpack.c.l.b16 %v739
        %v1028 = vunpack.c.l.b16 %v740
        %v1029 = vunpack.c.l.b16 %v741
        %v1030 = vunpack.c.l.b16 %v742
        %v1031 = vunpack.c.l.b16 %v743
        %v1032 = vunpack.c.l.b16 %v744
        %v1033 = vunpack.c.l.b16 %v745
        %v1034 = vunpack.c.l.b16 %v746
        %v1035 = vunpack.c.l.b16 %v747
        %v1036 = vunpack.c.l.b16 %v748
        %v1037 = vunpack.c.l.b16 %v749
        %v1038 = vunpack.c.l.b16 %v750
        %v1039 = vpack.c.b16 %v896, %v895
        %v1040 = vpack.c.b16 %v898, %v897
        %v1041 = vpack.c.b16 %v900, %v899
        %v1042 = vpack.c.b16 %v902, %v901
        %v1043 = vpack.c.b16 %v904, %v903
        %v1044 = vpack.c.b16 %v906, %v905
        %v1045 = vpack.c.b16 %v908, %v907
        %v1046 = vpack.c.b16 %v910, %v909
        %v1047 = vpack.c.b16 %v912, %v911
        %v1048 = vpack.c.b16 %v914, %v913
        %v1049 = vpack.c.b16 %v916, %v915
        %v1050 = vpack.c.b16 %v918, %v917
        %v1051 = vpack.c.b16 %v920, %v919
        %v1052 = vpack.c.b16 %v922, %v921
        %v1053 = vpack.c.b16 %v924, %v923
        %v1054 = vpack.c.b16 %v926, %v925
        %v1055 = vpack.c.b16 %v928, %v927
        %v1056 = vpack.c.b16 %v930, %v929
        %v1057 = vpack.c.b16 %v932, %v931
        %v1058 = vpack.c.b16 %v934, %v933
        %v1059 = vpack.c.b16 %v936, %v935
        %v1060 = vpack.c.b16 %v938, %v937
        %v1061 = vpack.c.b16 %v940, %v939
        %v1062 = vpack.c.b16 %v942, %v941
        %v1063 = vpack.c.b16 %v944, %v943
        %v1064 = vpack.c.b16 %v946, %v945
        %v1065 = vpack.c.b16 %v948, %v947
        %v1066 = vpack.c.b16 %v950, %v949
        %v1067 = vpack.c.b16 %v952, %v951
        %v1068 = vpack.c.b16 %v954, %v953
        %v1069 = vpack.c.b16 %v956, %v955
        %v1070 = vpack.c.b16 %v958, %v957
        %v1071 = vpack.c.b16 %v960, %v959
        %v1072 = vpack.c.b16 %v962, %v961
        %v1073 = vpack.c.b16 %v964, %v963
        %v1074 = vpack.c.b16 %v966, %v965
        %v1075 = vpack.c.b16 %v968, %v967
        %v1076 = vpack.c.b16 %v970, %v969
        %v1077 = vpack.c.b16 %v972, %v971
        %v1078 = vpack.c.b16 %v974, %v973
        %v1079 = vpack.c.b16 %v976, %v975
        %v1080 = vpack.c.b16 %v978, %v977
        %v1081 = vpack.c.b16 %v980, %v979
        %v1082 = vpack.c.b16 %v982, %v981
        %v1083 = vpack.c.b16 %v984, %v983
        %v1084 = vpack.c.b16 %v986, %v985
        %v1085 = vpack.c.b16 %v988, %v987
        %v1086 = vpack.c.b16 %v990, %v989
        %v1087 = vpack.c.b16 %v992, %v991
        %v1088 = vpack.c.b16 %v994, %v993
        %v1089 = vpack.c.b16 %v996, %v995
        %v1090 = vpack.c.b16 %v998, %v997
        %v1091 = vpack.c.b16 %v1000, %v999
        %v1092 = vpack.c.b16 %v1002, %v1001
        %v1093 = vpack.c.b16 %v1004, %v1003
        %v1094 = vpack.c.b16 %v1006, %v1005
        %v1095 = vpack.c.b16 %v1008, %v1007
        %v1096 = vpack.c.b16 %v1010, %v1009
        %v1097 = vpack.c.b16 %v1012, %v1011
        %v1098 = vpack.c.b16 %v1014, %v1013
        %v1099 = vpack.c.b16 %v1016, %v1015
        %v1100 = vpack.c.b16 %v1018, %v1017
        %v1101 = vpack.c.b16 %v1020, %v1019
        %v1102 = vpack.c.b16 %v1022, %v1021
        %v1103 = vpack.c.b16 %v1024, %v1023
        %v1104 = vpack.c.b16 %v1026, %v1025
        %v1105 = vpack.c.b16 %v1028, %v1027
        %v1106 = vpack.c.b16 %v1030, %v1029
        %v1107 = vpack.c.b16 %v1032, %v1031
        %v1108 = vpack.c.b16 %v1034, %v1033
        %v1109 = vpack.c.b16 %v1036, %v1035
        %v1110 = vpack.c.b16 %v1038, %v1037
        %1183 = vmatprep.subr.bf16.mxu0 0
        %1184 = vmatpush1.bf16.msra.mxu0 %v1046
        %1185 = vmatprep.subr.bf16.mxu0 0
        %1186 = vmatpush1.bf16.msra.mxu0 %v1045
        %1187 = vmatprep.subr.bf16.mxu0 0
        %1188 = vmatpush1.bf16.msra.mxu0 %v1044
        %1189 = vmatprep.subr.bf16.mxu0 0
        %1190 = vmatpush1.bf16.msra.mxu0 %v1043
        %1191 = vmatprep.subr.bf16.mxu0 0
        %1192 = vmatpush1.bf16.msra.mxu0 %v1042
        %1193 = vmatprep.subr.bf16.mxu0 0
        %1194 = vmatpush1.bf16.msra.mxu0 %v1041
        %1195 = vmatprep.subr.bf16.mxu0 0
        %1196 = vmatpush1.bf16.msra.mxu0 %v1040
        %1197 = vmatprep.subr.bf16.mxu0 0
        %1198 = vmatpush1.bf16.msra.mxu0 %v1039
        %1199 = vmatprep.subr.bf16.mxu0 0
        %1200 = vmatpush2.bf16.msra.mxu0 %v1054
        %1201 = vmatprep.subr.bf16.mxu0 0
        %1202 = vmatpush2.bf16.msra.mxu0 %v1053
        %1203 = vmatprep.subr.bf16.mxu0 0
        %1204 = vmatpush2.bf16.msra.mxu0 %v1052
        %1205 = vmatprep.subr.bf16.mxu0 0
        %1206 = vmatpush2.bf16.msra.mxu0 %v1051
        %1207 = vmatprep.subr.bf16.mxu0 0
        %1208 = vmatpush2.bf16.msra.mxu0 %v1050
        %1209 = vmatprep.subr.bf16.mxu0 0
        %1210 = vmatpush2.bf16.msra.mxu0 %v1049
        %1211 = vmatprep.subr.bf16.mxu0 0
        %1212 = vmatpush2.bf16.msra.mxu0 %v1048
        %1213 = vmatprep.subr.bf16.mxu0 0
        %1214 = vmatpush2.bf16.msra.mxu0 %v1047
        %1215 = vmatprep.mubr.bf16.mxu0 %v486
        %1216 = vmatmul.mubr.bf16.gmra.mxu0 %v464
        %v1217 = vpop.f32.mrf.mxu0
        %v1218 = vadd.f32 0.0, %v1217
        %v1219 = vpop.f32.mrf.mxu0
        %v1220 = vpop.f32.mrf.mxu0
        %v1221 = vadd.f32 0.0, %v1220
        %v1222 = vpop.f32.mrf.mxu0
        %1223 = vmatprep.mubr.bf16.mxu0 %v475
        %1224 = vmatmul.mubr.bf16.gmra.mxu0 %v465
        %v1225 = vpop.f32.mrf.mxu0
        %v1226 = vadd.f32 0.0, %v1225
        %v1227 = vpop.f32.mrf.mxu0
        %v1228 = vpop.f32.mrf.mxu0
        %v1229 = vadd.f32 0.0, %v1228
        %v1230 = vpop.f32.mrf.mxu0
        %1231 = vmatprep.mubr.bf16.mxu0 %v477
        %1232 = vmatmul.mubr.bf16.gmra.mxu0 %v466
        %v1233 = vpop.f32.mrf.mxu0
        %v1234 = vadd.f32 0.0, %v1233
        %v1235 = vpop.f32.mrf.mxu0
        %v1236 = vpop.f32.mrf.mxu0
        %v1237 = vadd.f32 0.0, %v1236
        %v1238 = vpop.f32.mrf.mxu0
        %1239 = vmatprep.mubr.bf16.mxu0 %v479
        %1240 = vmatmul.mubr.bf16.gmra.mxu0 %v467
        %v1241 = vpop.f32.mrf.mxu0
        %v1242 = vadd.f32 0.0, %v1241
        %v1243 = vpop.f32.mrf.mxu0
        %v1244 = vpop.f32.mrf.mxu0
        %v1245 = vadd.f32 0.0, %v1244
        %v1246 = vpop.f32.mrf.mxu0
        %1247 = vdwg.mxu0
        %1248 = vmatprep.subr.bf16.mxu0 0
        %1249 = vmatpush1.bf16.msra.mxu0 %v1062
        %1250 = vmatprep.subr.bf16.mxu0 0
        %1251 = vmatpush1.bf16.msra.mxu0 %v1061
        %1252 = vmatprep.subr.bf16.mxu0 0
        %1253 = vmatpush1.bf16.msra.mxu0 %v1060
        %1254 = vmatprep.subr.bf16.mxu0 0
        %1255 = vmatpush1.bf16.msra.mxu0 %v1059
        %1256 = vmatprep.subr.bf16.mxu0 0
        %1257 = vmatpush1.bf16.msra.mxu0 %v1058
        %1258 = vmatprep.subr.bf16.mxu0 0
        %1259 = vmatpush1.bf16.msra.mxu0 %v1057
        %1260 = vmatprep.subr.bf16.mxu0 0
        %1261 = vmatpush1.bf16.msra.mxu0 %v1056
        %1262 = vmatprep.subr.bf16.mxu0 0
        %1263 = vmatpush1.bf16.msra.mxu0 %v1055
        %1264 = vmatprep.subr.bf16.mxu0 0
        %1265 = vmatpush2.bf16.msra.mxu0 %v1070
        %1266 = vmatprep.subr.bf16.mxu0 0
        %1267 = vmatpush2.bf16.msra.mxu0 %v1069
        %1268 = vmatprep.subr.bf16.mxu0 0
        %1269 = vmatpush2.bf16.msra.mxu0 %v1068
        %1270 = vmatprep.subr.bf16.mxu0 0
        %1271 = vmatpush2.bf16.msra.mxu0 %v1067
        %1272 = vmatprep.subr.bf16.mxu0 0
        %1273 = vmatpush2.bf16.msra.mxu0 %v1066
        %1274 = vmatprep.subr.bf16.mxu0 0
        %1275 = vmatpush2.bf16.msra.mxu0 %v1065
        %1276 = vmatprep.subr.bf16.mxu0 0
        %1277 = vmatpush2.bf16.msra.mxu0 %v1064
        %1278 = vmatprep.subr.bf16.mxu0 0
        %1279 = vmatpush2.bf16.msra.mxu0 %v1063
        %1280 = vmatprep.mubr.bf16.mxu0 %v565
        %1281 = vmatmul.mubr.bf16.gmra.mxu0 %v542
        %v1282 = vpop.f32.mrf.mxu0
        %v1283 = vadd.f32 %v1218, %v1282
        %v1284 = vpop.f32.mrf.mxu0
        %v1285 = vpop.f32.mrf.mxu0
        %v1286 = vadd.f32 %v1221, %v1285
        %v1287 = vpop.f32.mrf.mxu0
        %1288 = vmatprep.mubr.bf16.mxu0 %v566
        %1289 = vmatmul.mubr.bf16.gmra.mxu0 %v543
        %v1290 = vpop.f32.mrf.mxu0
        %v1291 = vadd.f32 %v1226, %v1290
        %v1292 = vpop.f32.mrf.mxu0
        %v1293 = vpop.f32.mrf.mxu0
        %v1294 = vadd.f32 %v1229, %v1293
        %v1295 = vpop.f32.mrf.mxu0
        %1296 = vmatprep.mubr.bf16.mxu0 %v567
        %1297 = vmatmul.mubr.bf16.gmra.mxu0 %v544
        %v1298 = vpop.f32.mrf.mxu0
        %v1299 = vadd.f32 %v1234, %v1298
        %v1300 = vpop.f32.mrf.mxu0
        %v1301 = vpop.f32.mrf.mxu0
        %v1302 = vadd.f32 %v1237, %v1301
        %v1303 = vpop.f32.mrf.mxu0
        %1304 = vmatprep.mubr.bf16.mxu0 %v568
        %1305 = vmatmul.mubr.bf16.gmra.mxu0 %v545
        %v1306 = vpop.f32.mrf.mxu0
        %v1307 = vadd.f32 %v1242, %v1306
        %v1308 = vpop.f32.mrf.mxu0
        %v1309 = vpop.f32.mrf.mxu0
        %v1310 = vadd.f32 %v1245, %v1309
        %v1311 = vpop.f32.mrf.mxu0
        %1312 = vdwg.mxu0
        %1313 = vmatprep.subr.bf16.mxu0 0
        %1314 = vmatpush1.bf16.msra.mxu0 %v1078
        %1315 = vmatprep.subr.bf16.mxu0 0
        %1316 = vmatpush1.bf16.msra.mxu0 %v1077
        %1317 = vmatprep.subr.bf16.mxu0 0
        %1318 = vmatpush1.bf16.msra.mxu0 %v1076
        %1319 = vmatprep.subr.bf16.mxu0 0
        %1320 = vmatpush1.bf16.msra.mxu0 %v1075
        %1321 = vmatprep.subr.bf16.mxu0 0
        %1322 = vmatpush1.bf16.msra.mxu0 %v1074
        %1323 = vmatprep.subr.bf16.mxu0 0
        %1324 = vmatpush1.bf16.msra.mxu0 %v1073
        %1325 = vmatprep.subr.bf16.mxu0 0
        %1326 = vmatpush1.bf16.msra.mxu0 %v1072
        %1327 = vmatprep.subr.bf16.mxu0 0
        %1328 = vmatpush1.bf16.msra.mxu0 %v1071
        %1329 = vmatprep.subr.bf16.mxu0 0
        %1330 = vmatpush2.bf16.msra.mxu0 %v1086
        %1331 = vmatprep.subr.bf16.mxu0 0
        %1332 = vmatpush2.bf16.msra.mxu0 %v1085
        %1333 = vmatprep.subr.bf16.mxu0 0
        %1334 = vmatpush2.bf16.msra.mxu0 %v1084
        %1335 = vmatprep.subr.bf16.mxu0 0
        %1336 = vmatpush2.bf16.msra.mxu0 %v1083
        %1337 = vmatprep.subr.bf16.mxu0 0
        %1338 = vmatpush2.bf16.msra.mxu0 %v1082
        %1339 = vmatprep.subr.bf16.mxu0 0
        %1340 = vmatpush2.bf16.msra.mxu0 %v1081
        %1341 = vmatprep.subr.bf16.mxu0 0
        %1342 = vmatpush2.bf16.msra.mxu0 %v1080
        %1343 = vmatprep.subr.bf16.mxu0 0
        %1344 = vmatpush2.bf16.msra.mxu0 %v1079
        %1345 = vmatprep.mubr.bf16.mxu0 %v588
        %1346 = vmatmul.mubr.bf16.gmra.mxu0 %v385
        %v1347 = vpop.f32.mrf.mxu0
        %v1348 = vadd.f32 %v1283, %v1347
        %v1349 = vpop.f32.mrf.mxu0
        %v1350 = vpop.f32.mrf.mxu0
        %v1351 = vadd.f32 %v1286, %v1350
        %v1352 = vpop.f32.mrf.mxu0
        %1353 = vmatprep.mubr.bf16.mxu0 %v589
        %1354 = vmatmul.mubr.bf16.gmra.mxu0 %v386
        %v1355 = vpop.f32.mrf.mxu0
        %v1356 = vadd.f32 %v1291, %v1355
        %v1357 = vpop.f32.mrf.mxu0
        %v1358 = vpop.f32.mrf.mxu0
        %v1359 = vadd.f32 %v1294, %v1358
        %v1360 = vpop.f32.mrf.mxu0
        %1361 = vmatprep.mubr.bf16.mxu0 %v590
        %1362 = vmatmul.mubr.bf16.gmra.mxu0 %v387
        %v1363 = vpop.f32.mrf.mxu0
        %v1364 = vadd.f32 %v1299, %v1363
        %v1365 = vpop.f32.mrf.mxu0
        %v1366 = vpop.f32.mrf.mxu0
        %v1367 = vadd.f32 %v1302, %v1366
        %v1368 = vpop.f32.mrf.mxu0
        %1369 = vmatprep.mubr.bf16.mxu0 %v591
        %1370 = vmatmul.mubr.bf16.gmra.mxu0 %v388
        %v1371 = vpop.f32.mrf.mxu0
        %v1372 = vadd.f32 %v1307, %v1371
        %v1373 = vpop.f32.mrf.mxu0
        %v1374 = vpop.f32.mrf.mxu0
        %v1375 = vadd.f32 %v1310, %v1374
        %v1376 = vpop.f32.mrf.mxu0
        %1377 = vdwg.mxu0
        %1378 = vmatprep.subr.bf16.mxu0 0
        %1379 = vmatpush1.bf16.msra.mxu0 %v1094
        %1380 = vmatprep.subr.bf16.mxu0 0
        %1381 = vmatpush1.bf16.msra.mxu0 %v1093
        %1382 = vmatprep.subr.bf16.mxu0 0
        %1383 = vmatpush1.bf16.msra.mxu0 %v1092
        %1384 = vmatprep.subr.bf16.mxu0 0
        %1385 = vmatpush1.bf16.msra.mxu0 %v1091
        %1386 = vmatprep.subr.bf16.mxu0 0
        %1387 = vmatpush1.bf16.msra.mxu0 %v1090
        %1388 = vmatprep.subr.bf16.mxu0 0
        %1389 = vmatpush1.bf16.msra.mxu0 %v1089
        %1390 = vmatprep.subr.bf16.mxu0 0
        %1391 = vmatpush1.bf16.msra.mxu0 %v1088
        %1392 = vmatprep.subr.bf16.mxu0 0
        %1393 = vmatpush1.bf16.msra.mxu0 %v1087
        %1394 = vmatprep.subr.bf16.mxu0 0
        %1395 = vmatpush2.bf16.msra.mxu0 %v1102
        %1396 = vmatprep.subr.bf16.mxu0 0
        %1397 = vmatpush2.bf16.msra.mxu0 %v1101
        %1398 = vmatprep.subr.bf16.mxu0 0
        %1399 = vmatpush2.bf16.msra.mxu0 %v1100
        %1400 = vmatprep.subr.bf16.mxu0 0
        %1401 = vmatpush2.bf16.msra.mxu0 %v1099
        %1402 = vmatprep.subr.bf16.mxu0 0
        %1403 = vmatpush2.bf16.msra.mxu0 %v1098
        %1404 = vmatprep.subr.bf16.mxu0 0
        %1405 = vmatpush2.bf16.msra.mxu0 %v1097
        %1406 = vmatprep.subr.bf16.mxu0 0
        %1407 = vmatpush2.bf16.msra.mxu0 %v1096
        %1408 = vmatprep.subr.bf16.mxu0 0
        %1409 = vmatpush2.bf16.msra.mxu0 %v1095
        %1410 = vmatprep.mubr.bf16.mxu0 %v475
        %1411 = vmatmul.mubr.bf16.gmra.mxu0 %v594
        %v1412 = vpop.f32.mrf.mxu0
        %v1413 = vadd.f32 %v1348, %v1412
        %v1414 = vpop.f32.mrf.mxu0
        %v1415 = vpop.f32.mrf.mxu0
        %v1416 = vadd.f32 %v1351, %v1415
        %v1417 = vpop.f32.mrf.mxu0
        %1418 = vmatprep.mubr.bf16.mxu0 %v477
        %1419 = vmatmul.mubr.bf16.gmra.mxu0 %v595
        %v1420 = vpop.f32.mrf.mxu0
        %v1421 = vadd.f32 %v1356, %v1420
        %v1422 = vpop.f32.mrf.mxu0
        %v1423 = vpop.f32.mrf.mxu0
        %v1424 = vadd.f32 %v1359, %v1423
        %v1425 = vpop.f32.mrf.mxu0
        %1426 = vmatprep.mubr.bf16.mxu0 %v479
        %1427 = vmatmul.mubr.bf16.gmra.mxu0 %v596
        %v1428 = vpop.f32.mrf.mxu0
        %v1429 = vadd.f32 %v1364, %v1428
        %v1430 = vpop.f32.mrf.mxu0
        %v1431 = vpop.f32.mrf.mxu0
        %v1432 = vadd.f32 %v1367, %v1431
        %v1433 = vpop.f32.mrf.mxu0
        %1434 = vmatprep.mubr.bf16.mxu0 %v599
        %1435 = vmatmul.mubr.bf16.gmra.mxu0 %v597
        %v1436 = vpop.f32.mrf.mxu0
        %v1437 = vadd.f32 %v1372, %v1436
        %v1438 = vpop.f32.mrf.mxu0
        %v1439 = vpop.f32.mrf.mxu0
        %v1440 = vadd.f32 %v1375, %v1439
        %v1441 = vpop.f32.mrf.mxu0
        %1442 = vdwg.mxu0
        %1443 = vmatprep.subr.bf16.mxu0 0
        %1444 = vmatpush1.bf16.msra.mxu0 %v1110
        %1445 = vmatprep.subr.bf16.mxu0 0
        %1446 = vmatpush1.bf16.msra.mxu0 %v1109
        %1447 = vmatprep.subr.bf16.mxu0 0
        %1448 = vmatpush1.bf16.msra.mxu0 %v1108
        %1449 = vmatprep.subr.bf16.mxu0 0
        %1450 = vmatpush1.bf16.msra.mxu0 %v1107
        %1451 = vmatprep.subr.bf16.mxu0 0
        %1452 = vmatpush1.bf16.msra.mxu0 %v1106
        %1453 = vmatprep.subr.bf16.mxu0 0
        %1454 = vmatpush1.bf16.msra.mxu0 %v1105
        %1455 = vmatprep.subr.bf16.mxu0 0
        %1456 = vmatpush1.bf16.msra.mxu0 %v1104
        %1457 = vmatprep.subr.bf16.mxu0 0
        %1458 = vmatpush1.bf16.msra.mxu0 %v1103
        %1459 = vmatprep.subr.bf16.mxu0 0
        %1460 = vmatpush2.bf16.msra.mxu0 0
        %1461 = vmatprep.subr.bf16.mxu0 0
        %1462 = vmatpush2.bf16.msra.mxu0 0
        %1463 = vmatprep.subr.bf16.mxu0 0
        %1464 = vmatpush2.bf16.msra.mxu0 0
        %1465 = vmatprep.subr.bf16.mxu0 0
        %1466 = vmatpush2.bf16.msra.mxu0 0
        %1467 = vmatprep.subr.bf16.mxu0 0
        %1468 = vmatpush2.bf16.msra.mxu0 0
        %1469 = vmatprep.subr.bf16.mxu0 0
        %1470 = vmatpush2.bf16.msra.mxu0 0
        %1471 = vmatprep.subr.bf16.mxu0 0
        %1472 = vmatpush2.bf16.msra.mxu0 0
        %1473 = vmatprep.subr.bf16.mxu0 0
        %1474 = vmatpush2.bf16.msra.mxu0 0
        %1475 = vmatprep.mubr.bf16.mxu0 0
        %1476 = vmatmul.mubr.bf16.gmra.mxu0 %v603
        %v1477 = vpop.f32.mrf.mxu0
        %v1478 = vadd.f32 %v1413, %v1477
        %v1479 = vpop.f32.mrf.mxu0
        %v1480 = vpop.f32.mrf.mxu0
        %v1481 = vadd.f32 %v1416, %v1480
        %v1482 = vpop.f32.mrf.mxu0
        %1483 = vmatprep.mubr.bf16.mxu0 0
        %1484 = vmatmul.mubr.bf16.gmra.mxu0 %v604
        %v1485 = vpop.f32.mrf.mxu0
        %v1486 = vadd.f32 %v1421, %v1485
        %v1487 = vpop.f32.mrf.mxu0
        %v1488 = vpop.f32.mrf.mxu0
        %v1489 = vadd.f32 %v1424, %v1488
        %v1490 = vpop.f32.mrf.mxu0
        %1491 = vmatprep.mubr.bf16.mxu0 0
        %1492 = vmatmul.mubr.bf16.gmra.mxu0 %v605
        %v1493 = vpop.f32.mrf.mxu0
        %v1494 = vadd.f32 %v1429, %v1493
        %v1495 = vpop.f32.mrf.mxu0
        %v1496 = vpop.f32.mrf.mxu0
        %v1497 = vadd.f32 %v1432, %v1496
        %v1498 = vpop.f32.mrf.mxu0
        %1499 = vmatprep.mubr.bf16.mxu0 0
        %1500 = vmatmul.mubr.bf16.gmra.mxu0 %v606
        %v1501 = vpop.f32.mrf.mxu0
        %v1502 = vadd.f32 %v1437, %v1501
        %v1503 = vpop.f32.mrf.mxu0
        %v1504 = vpop.f32.mrf.mxu0
        %v1505 = vadd.f32 %v1440, %v1504
        %v1506 = vpop.f32.mrf.mxu0
        %1507 = vdwg.mxu0
        %p1508 = scmp.eq.s32.totalorder %s18, 0
        // Predicated region
        $region82: #{basic_block_forward.4} parent=76 // pred_check
          %p1509 = pneg %p1508
        $region83: #{basic_block_forward.4} parent=76 // pred_check_branch
          %1511 = sbr.rel (%p1509) target = $region85
        $region84: #{basic_block_forward.4} parent=76 // pred_region
          %1512 = vst [vmem:[%s6] sm:$0xff] 0.0
        $region85: #{basic_block_forward.4} parent=76 // pred_fallthru
          _
        %v1513 = vadd.f32 %v1478, %v1481
        %v1514 = vadd.f32 %v1513, %v1486
        %v1515 = vadd.f32 %v1514, %v1489
        %v1516 = vadd.f32 %v1515, %v1494
        %v1517 = vadd.f32 %v1516, %v1497
        %v1518 = vadd.f32 %v1517, %v1502
        %v1519 = vadd.f32 %v1518, %v1505
        %v1520 = vrot.slane %v1519, 4
        %v1521 = vadd.f32 %v1519, %v1520
        %v1522 = vrot.slane %v1521, 2
        %v1523 = vadd.f32 %v1521, %v1522
        %v1524 = vrot.slane %v1523, 1
        %v1525 = vadd.f32 %v1523, %v1524
        %v1526 = vmul.f32 %v1478, %v1478
        %v1527 = vmul.f32 %v1481, %v1481
        %v1528 = vmul.f32 %v1486, %v1486
        %v1529 = vmul.f32 %v1489, %v1489
        %v1530 = vmul.f32 %v1494, %v1494
        %v1531 = vmul.f32 %v1497, %v1497
        %v1532 = vmul.f32 %v1502, %v1502
        %v1533 = vmul.f32 %v1505, %v1505
        %v1534 = vadd.f32 %v1526, %v1527
        %v1535 = vadd.f32 %v1534, %v1528
        %v1536 = vadd.f32 %v1535, %v1529
        %v1537 = vadd.f32 %v1536, %v1530
        %v1538 = vadd.f32 %v1537, %v1531
        %v1539 = vadd.f32 %v1538, %v1532
        %v1540 = vadd.f32 %v1539, %v1533
        %v1541 = vrot.slane %v1540, 4
        %v1542 = vadd.f32 %v1540, %v1541
        %v1543 = vrot.slane %v1542, 2
        %v1544 = vadd.f32 %v1542, %v1543
        %v1545 = vrot.slane %v1544, 1
        %v1546 = vadd.f32 %v1544, %v1545
        %v1547 = vld [vmem:[%s6] sm:$0xff]
        %vm1548 = vcmask 1040384
        %v1549 = vsel %vm1548, %v1525, %v1546
        %vm1550 = vcmask 1041408
        %v1551 = vsel %vm1550, %v1549, 0.0
        %v1552 = vadd.f32 %v1547, %v1551
        %1553 = vst [vmem:[%s6] sm:$0xff] %v1552
        %v1554 = vpack.c.bf16 %v1481, %v1478
        %v1555 = vpack.c.bf16 %v1489, %v1486
        %v1556 = vpack.c.bf16 %v1497, %v1494
        %v1557 = vpack.c.bf16 %v1505, %v1502
        %v1562 = vunpack.c.l.b16 %v1554
        %v1563 = vunpack.c.h.b16 %v1554
        %v1564 = vunpack.c.l.b16 %v1555
        %v1565 = vunpack.c.h.b16 %v1555
        %v1566 = vunpack.c.l.b16 %v1556
        %v1567 = vunpack.c.h.b16 %v1556
        %v1568 = vunpack.c.l.b16 %v1557
        %v1569 = vunpack.c.h.b16 %v1557
        %v1570 = vpack.c.b16 %v1562, %v1562
        %v1571 = vpack.c.b16 %v1563, %v1563
        %v1572 = vpack.c.b16 %v1564, %v1564
        %v1573 = vpack.c.b16 %v1565, %v1565
        %v1574 = vpack.c.b16 %v1566, %v1566
        %v1575 = vpack.c.b16 %v1567, %v1567
        %v1576 = vpack.c.b16 %v1568, %v1568
        %v1577 = vpack.c.b16 %v1569, %v1569
        %1586 = vst [vmem:[%s321] sm:$0xf] %v1570
        %1587 = vst [vmem:[%s321 + $0x4] sm:$0xf] %v1571
        %1588 = vst [vmem:[%s321 + $0x8] sm:$0xf] %v1572
        %1589 = vst [vmem:[%s321 + $0xc] sm:$0xf] %v1573
        %1590 = vst [vmem:[%s321 + $0x10] sm:$0xf] %v1574
        %1591 = vst [vmem:[%s321 + $0x14] sm:$0xf] %v1575
        %1592 = vst [vmem:[%s321 + $0x18] sm:$0xf] %v1576
        %1593 = vst [vmem:[%s321 + $0x1c] sm:$0xf] %v1577
        %p1594 = scmp.lt.s32.totalorder %s18, 1
        %s1595 = scalar_select %p1594, %s18, 1
        %s1596 = smul.addr %s1595, 8
        %s1597 = smul.addr %s1596, 4
        %s1598 = scalar_lea.vmem %s5, %s1597
        // Predicated region
        $region86: #{basic_block_forward.4} parent=76 // pred_check
          %p1599 = pneg %p146
        $region87: #{basic_block_forward.4} parent=76 // pred_check_branch
          %1601 = sbr.rel (%p1599) target = $region89
        $region88: #{basic_block_forward.4} parent=76 // pred_region
          _
        $region89: #{basic_block_forward.4} parent=76 // pred_fallthru
          _
        // Predicated region
        $region90: #{basic_block_forward.4} parent=76 // pred_check
          %p1602 = pneg %p167
        $region91: #{basic_block_forward.4} parent=76 // pred_check_branch
          %1604 = sbr.rel (%p1602) target = $region93
        $region92: #{basic_block_forward.4} parent=76 // pred_region
          _
        $region93: #{basic_block_forward.4} parent=76 // pred_fallthru
          _
        // Predicated region
        $region94: #{basic_block_forward.4} parent=76 // pred_check
          %p1605 = pneg %p167
        $region95: #{basic_block_forward.4} parent=76 // pred_check_branch
          %1607 = sbr.rel (%p1605) target = $region97
        $region96: #{basic_block_forward.4} parent=76 // pred_region
          _
        $region97: #{basic_block_forward.4} parent=76 // pred_fallthru
          _
      $region77: #{basic_block_forward.4} parent=5 // pred_fallthru
        _
      %p1608 = scmp.le.s32.totalorder 2, %s13
      // Predicated region
      $region98: #{basic_block_forward.4} parent=5 // pred_check
        %p1609 = pneg %p1608
      $region99: #{basic_block_forward.4} parent=5 // pred_check_branch
        %1611 = sbr.rel (%p1609) target = $region101
      $region100: #{basic_block_forward.4} parent=5 // pred_region
        %s1612 = ssub.s32 %s13, 2
        // Predicated region
        $region102: #{basic_block_forward.4} parent=100 // pred_check
          %p1613 = pneg %p152
        $region103: #{basic_block_forward.4} parent=100 // pred_check_branch
          %1615 = sbr.rel (%p1613) target = $region105
        $region104: #{basic_block_forward.4} parent=100 // pred_region
          %p1616 = scmp.lt.s32.totalorder %s19, 1
          %s1617 = scalar_select %p1616, %s19, 1
          %s1618 = smul.addr %s1617, 8
          %s1619 = smul.addr %s1618, 4
          %s1620 = scalar_lea.vmem %s5, %s1619
        $region105: #{basic_block_forward.4} parent=100 // pred_fallthru
          _
      $region101: #{basic_block_forward.4} parent=5 // pred_fallthru
        _
    $region6: #{basic_block_forward.4} parent=1 // loop_footer
      %s17 = sadd.s32 1, %s13
    $region7: #{basic_block_forward.4} parent=1 // loop_footer_branch
      %12 = sbr.rel target = $region3
    $region8: #{basic_block_forward.4} parent=1 // loop_exit
      _

</llo_original>
